<compile_context>
chip_gen: v7x
topology: tpu7x:2x2x1
jax: 0.10.0
libtpu: 0.0.40
codegen_flags: <defaults>
</compile_context>

<pallas_src>
import jax
import jax.numpy as jnp
from jax.experimental import pallas as pl
from jax.experimental.pallas import tpu as pltpu


# ----------------------------- Pallas kernels -------------------------------

def _mlp_kernel(x_ref, w1_ref, b1_ref, w2_ref, b2_ref, w3_ref, b3_ref, o_ref):
    """3-layer 1x1-conv MLP; channels on sublanes, spatial on lanes.

    x_ref : (1, C, tm)    w*_ref : (out, in)    b*_ref : (out, 1)
    o_ref : (1, n_class, tm)  (float32)
    """
    x = x_ref[0]
    h = jnp.dot(w1_ref[...], x, preferred_element_type=jnp.float32) + b1_ref[...]
    h = jnp.maximum(h, 0.0).astype(x.dtype)
    h = jnp.dot(w2_ref[...], h, preferred_element_type=jnp.float32) + b2_ref[...]
    h = jnp.maximum(h, 0.0).astype(x.dtype)
    o_ref[0] = (jnp.dot(w3_ref[...], h, preferred_element_type=jnp.float32)
                + b3_ref[...])


def _make_resize_wsum_kernel(n_layers, n_class):
    """Fused bilinear-resize + layer-weighted sum.

    refs = (x_0, rh_0, rwT_0, ..., x_{L-1}, rh_{L-1}, rwT_{L-1}, o_ref)
      x_l   : (1, n_class, Hl, Wl)    per-layer extractor output (small)
      rh_l  : (Ht, Hl)   row-interp matrix, pre-scaled by the layer weight
      rwT_l : (Wl, Wt)   column-interp matrix (transposed)
      o_ref : (1, n_class, Ht, Wt)
    out[c] = sum_l rh_l @ x_l[c] @ rwT_l   ==   sum_l w_l * resize(x_l[c])
    """
    def kernel(*refs):
        o_ref = refs[3 * n_layers]
        for c in range(n_class):
            acc = None
            for l in range(n_layers):
                x_ref = refs[3 * l]
                rh_ref = refs[3 * l + 1]
                rwt_ref = refs[3 * l + 2]
                t = jnp.dot(x_ref[0, c], rwt_ref[...],
                            preferred_element_type=jnp.float32)   # (Hl, Wt)
                y = jnp.dot(rh_ref[...], t,
                            preferred_element_type=jnp.float32)   # (Ht, Wt)
                acc = y if acc is None else acc + y
            o_ref[0, c] = acc
    return kernel


# ------------------------------ helpers --------------------------------------

def _default_compute_dtype():
    """bf16 on v6e/v7x (memory-bound: halves HBM bytes; native bf16 VPU);
    f32 on v5e and older (no bf16 VPU, keeps strict parity)."""
    try:
        kind = jax.devices()[0].device_kind.lower()
    except Exception:
        return jnp.float32
    if any(v in kind for v in ("v2", "v3", "v4", "v5")):
        return jnp.float32
    return jnp.bfloat16


def _choose_tm(m, c_in, mid_p, n_class, in_itemsize,
               vmem_budget_bytes=12 * 1024 * 1024, tm_cap=32768):
    """Spatial (lane) tile size from a VMEM byte budget.

    per-lane bytes ~= double-buffered input + double-buffered f32 output
                      + two live f32 intermediates of width mid_p.
    """
    per_lane = 2 * c_in * in_itemsize + 2 * n_class * 4 + 2 * mid_p * 4
    tm = min(tm_cap, max(128, (vmem_budget_bytes // per_lane) // 128 * 128))
    if m <= tm:
        return m, 1              # single exact tile, no ragged edge
    return tm, pl.cdiv(m, tm)    # ragged last tile handled by Pallas masking


def _resize_matrix(src, dst):
    """R (dst, src) with R @ x == jax.image.resize(x, dst, 'bilinear') on axis 0
    (i.e. PyTorch bilinear, align_corners=False, for up/identity sampling)."""
    if src == dst:
        return jnp.eye(src, dtype=jnp.float32)
    return jax.image.resize(jnp.eye(src, dtype=jnp.float32), (dst, src),
                            method="bilinear")


def _round_up(v, m):
    return (v + m - 1) // m * m


# ------------------------------ wrappers -------------------------------------

def conv1x1_mlp(x_nchw, params, n_class, compute_dtype=jnp.float32,
                tm_cap=32768):
    """One NSE1 extractor branch (conv1x1-relu-conv1x1-relu-conv1x1)."""
    w1, b1, w2, b2, w3, b3 = params          # w: (in, out), b: (1, out)
    N, C, H, W = x_nchw.shape
    mid = w1.shape[1]
    mid_p = _round_up(mid, 8)                # full-sublane hidden width
    M = H * W
    itemsize = jnp.dtype(compute_dtype).itemsize
    tm, grid_m = _choose_tm(M, C, mid_p, n_class, itemsize, tm_cap=tm_cap)

    # NCHW -> (N, C, H*W): pure reshape, no transpose.  Spatial on lanes.
    x = x_nchw.reshape(N, C, M).astype(compute_dtype)

    # Weights transposed to (out, in), zero-padded along mid (exact zeros flow
    # through ReLU and zero columns of the next layer -> bit-identical result).
    def padw(w, rows, cols):
        return jnp.pad(w, ((0, rows - w.shape[0]), (0, cols - w.shape[1])))

    w1t = padw(w1.T, mid_p, C).astype(compute_dtype)
    w2t = padw(w2.T, mid_p, mid_p).astype(compute_dtype)
    w3t = padw(w3.T, n_class, mid_p).astype(compute_dtype)
    b1t = jnp.pad(b1.reshape(mid, 1), ((0, mid_p - mid), (0, 0))).astype(jnp.float32)
    b2t = jnp.pad(b2.reshape(mid, 1), ((0, mid_p - mid), (0, 0))).astype(jnp.float32)
    b3t = b3.reshape(n_class, 1).astype(jnp.float32)

    flops = 2 * N * M * (C * mid_p + mid_p * mid_p + mid_p * n_class)
    bytes_accessed = (N * C * M * itemsize + N * n_class * M * 4
                      + (w1t.size + w2t.size + w3t.size) * itemsize
                      + (b1t.size + b2t.size + b3t.size) * 4)

    out = pl.pallas_call(
        _mlp_kernel,
        out_shape=jax.ShapeDtypeStruct((N, n_class, M), jnp.float32),
        grid_spec=pltpu.PrefetchScalarGridSpec(
            num_scalar_prefetch=0,
            grid=(N, grid_m),
            in_specs=[
                pl.BlockSpec((1, C, tm), lambda n, i: (n, 0, i)),
                pl.BlockSpec((mid_p, C), lambda n, i: (0, 0)),
                pl.BlockSpec((mid_p, 1), lambda n, i: (0, 0)),
                pl.BlockSpec((mid_p, mid_p), lambda n, i: (0, 0)),
                pl.BlockSpec((mid_p, 1), lambda n, i: (0, 0)),
                pl.BlockSpec((n_class, mid_p), lambda n, i: (0, 0)),
                pl.BlockSpec((n_class, 1), lambda n, i: (0, 0)),
            ],
            out_specs=pl.BlockSpec((1, n_class, tm), lambda n, i: (n, 0, i)),
        ),
        compiler_params=pltpu.CompilerParams(
            dimension_semantics=("parallel", "parallel"),
            vmem_limit_bytes=32 * 1024 * 1024),
        cost_estimate=pl.CostEstimate(flops=int(flops), transcendentals=0,
                                      bytes_accessed=int(bytes_accessed)),
    )(x, w1t, b1t, w2t, b2t, w3t, b3t)

    # (N, n_class, H*W) -> NCHW: pure reshape, no transpose.
    return out.reshape(N, n_class, H, W)


def fused_resize_weighted_sum(layers, weights, size):
    """final = sum_l weight[l] * bilinear_resize(layers[l], size), fused.

    Only the small native-resolution per-layer outputs are read from HBM and
    only the final map is written — no upsampled intermediates.
    """
    L = len(layers)
    N, C = layers[0].shape[:2]
    Ht, Wt = size

    args, in_specs = [], []
    for l, x in enumerate(layers):
        Hs, Ws = x.shape[2], x.shape[3]
        rh = weights[l] * _resize_matrix(Hs, Ht)     # (Ht, Hs), weight folded in
        rwT = _resize_matrix(Ws, Wt).T               # (Ws, Wt)
        args += [x, rh, rwT]
        in_specs += [
            pl.BlockSpec((1, C, Hs, Ws), lambda n: (n, 0, 0, 0)),
            pl.BlockSpec((Ht, Hs), lambda n: (0, 0)),
            pl.BlockSpec((Ws, Wt), lambda n: (0, 0)),
        ]

    # grid=(N,): with N>=2 both v7x TensorCores get work; for very large final
    # maps one could additionally tile Ht, but per-batch blocks stay small.
    return pl.pallas_call(
        _make_resize_wsum_kernel(L, C),
        out_shape=jax.ShapeDtypeStruct((N, C, Ht, Wt), jnp.float32),
        grid_spec=pltpu.PrefetchScalarGridSpec(
            num_scalar_prefetch=0,
            grid=(N,),
            in_specs=in_specs,
            out_specs=pl.BlockSpec((1, C, Ht, Wt), lambda n: (n, 0, 0, 0)),
        ),
        compiler_params=pltpu.CompilerParams(
            dimension_semantics=("parallel",),
            vmem_limit_bytes=32 * 1024 * 1024),
    )(*args)


def nse1_forward(features, params_per_layer, layer_weight, n_class,
                 lw_type="softplus", size=None, compute_dtype=None):
    """NSE1.forward: per-layer extractor outputs + weighted final segmentation."""
    if compute_dtype is None:
        compute_dtype = _default_compute_dtype()

    outputs = [conv1x1_mlp(feat, params, n_class, compute_dtype=compute_dtype)
               for feat, params in zip(features, params_per_layer)]
    size = tuple(size) if size else tuple(outputs[-1].shape[2:])

    if lw_type == "softplus":
        w = jax.nn.softplus(layer_weight)
        w = w / jnp.sum(w)
    elif lw_type == "sigmoid":
        w = jax.nn.sigmoid(layer_weight)
        w = w / jnp.sum(w)
    elif lw_type == "none":
        w = jnp.ones_like(layer_weight)     # final = sum(layers)
    else:                                   # 'direct'
        w = layer_weight

    # TODO(synk): `op.bu` is undefined in the reference; assumed to be bilinear
    # resize with half-pixel centers (F.interpolate align_corners=False), which
    # the interpolation matrices reproduce exactly.
    final = fused_resize_weighted_sum(outputs, w, size)
    return outputs + [final]


# jit the whole forward so XLA overlaps per-branch pallas calls.
nse1_forward_jit = jax.jit(
    nse1_forward,
    static_argnames=("n_class", "lw_type", "size", "compute_dtype"))


# --------------------------- pure-JAX reference ------------------------------

def nse1_reference(features, params_per_layer, layer_weight, n_class):
    outputs = []
    for feat, (w1, b1, w2, b2, w3, b3) in zip(features, params_per_layer):
        x = jnp.transpose(feat, (0, 2, 3, 1))
        h = jnp.maximum(x @ w1 + b1[0], 0.0)
        h = jnp.maximum(h @ w2 + b2[0], 0.0)
        y = h @ w3 + b3[0]
        outputs.append(jnp.transpose(y, (0, 3, 1, 2)))
    size = outputs[-1].shape[2:]
    layers = [jax.image.resize(o, o.shape[:2] + size, method="bilinear")
              for o in outputs]
    w = jax.nn.softplus(layer_weight)
    w = w / jnp.sum(w)
    final = sum(r * wi for r, wi in zip(layers, w))
    return outputs + [final]


# ---------------------------------- main --------------------------------------

if __name__ == "__main__":
    key = jax.random.PRNGKey(0)

    # NSE1 config (small, synthetic): two generator layers feed the extractor.
    n_class = 4
    dims = [8, 16]          # per-layer feature depths

    # Deterministic parameter init (PyTorch Conv2d-style uniform(+-1/sqrt(fan_in))).
    def init_branch(k, in_dim, out_dim):
        mid = (in_dim + out_dim) // 2
        shapes = [(in_dim, mid), (1, mid), (mid, mid), (1, mid),
                  (mid, out_dim), (1, out_dim)]
        fans = [in_dim, in_dim, mid, mid, mid, mid]
        ks = jax.random.split(k, len(shapes))
        return tuple(
            jax.random.uniform(kk, s, jnp.float32,
                               -1.0 / jnp.sqrt(f), 1.0 / jnp.sqrt(f))
            for kk, s, f in zip(ks, shapes, fans))

    k_feat0, k_feat1, k_p0, k_p1 = jax.random.split(key, 4)
    params_per_layer = [init_branch(k_p0, dims[0], n_class),
                        init_branch(k_p1, dims[1], n_class)]
    layer_weight = jnp.ones((len(dims),), jnp.float32)  # nn.Parameter(ones)

    # Features in NCHW (PyTorch convention).
    features = [
        jax.random.normal(k_feat0, (2, dims[0], 8, 8), jnp.float32),
        jax.random.normal(k_feat1, (2, dims[1], 16, 16), jnp.float32),
    ]

    refs = nse1_reference(features, params_per_layer, layer_weight, n_class)

    # 1) Strict f32 parity check.
    outs = nse1_forward_jit(features, params_per_layer, layer_weight,
                            n_class=n_class, compute_dtype=jnp.float32)
    outs = jax.block_until_ready(outs)
    for o, r in zip(outs, refs):
        assert o.shape == r.shape
        assert jnp.allclose(o, r, atol=2e-4, rtol=2e-4), \
            "mismatch vs reference (f32)"

    # 2) Auto dtype (bf16 activations on v6e/v7x, f32 on v5e) — loose check.
    outs_auto = nse1_forward_jit(features, params_per_layer, layer_weight,
                                 n_class=n_class, compute_dtype=None)
    outs_auto = jax.block_until_ready(outs_auto)
    for o, r in zip(outs_auto, refs):
        assert o.shape == r.shape
        assert jnp.allclose(o.astype(jnp.float32), r, atol=1e-1, rtol=1e-1), \
            "mismatch vs reference (auto dtype)"

    print("KERNEL_OK")
</pallas_src>

<mosaic_0001>
module attributes {stable_mosaic.version = 11 : i64} {
  func.func @_mlp_kernel(%arg0: i32, %arg1: i32, %arg2: memref<1x8x64xf32, #tpu.memory_space<vmem>>, %arg3: memref<8x8xf32, #tpu.memory_space<vmem>>, %arg4: memref<8x1xf32, #tpu.memory_space<vmem>>, %arg5: memref<8x8xf32, #tpu.memory_space<vmem>>, %arg6: memref<8x1xf32, #tpu.memory_space<vmem>>, %arg7: memref<4x8xf32, #tpu.memory_space<vmem>>, %arg8: memref<4x1xf32, #tpu.memory_space<vmem>>, %arg9: memref<1x4x64xf32, #tpu.memory_space<vmem>>) attributes {dimension_semantics = [#tpu.dimension_semantics<parallel>, #tpu.dimension_semantics<parallel>], iteration_bounds = array<i64: 2, 1>, scalar_prefetch = 0 : i64, scratch_operands = 0 : i64, tpu.core_type = #tpu.core_type<tc>, window_params = [{transform_indices = @transform_0, window_bounds = array<i64: 1, 8, 64>}, {pipeline_mode = #tpu.pipeline_mode<synchronous>, transform_indices = @transform_1, window_bounds = array<i64: 8, 8>}, {pipeline_mode = #tpu.pipeline_mode<synchronous>, transform_indices = @transform_2, window_bounds = array<i64: 8, 1>}, {pipeline_mode = #tpu.pipeline_mode<synchronous>, transform_indices = @transform_3, window_bounds = array<i64: 8, 8>}, {pipeline_mode = #tpu.pipeline_mode<synchronous>, transform_indices = @transform_4, window_bounds = array<i64: 8, 1>}, {pipeline_mode = #tpu.pipeline_mode<synchronous>, transform_indices = @transform_5, window_bounds = array<i64: 4, 8>}, {pipeline_mode = #tpu.pipeline_mode<synchronous>, transform_indices = @transform_6, window_bounds = array<i64: 4, 1>}, {transform_indices = @transform_7, window_bounds = array<i64: 1, 4, 64>}]} {
    %c0 = arith.constant 0 : index
    %c0_0 = arith.constant 0 : index
    %c0_1 = arith.constant 0 : index
    %0 = vector.load %arg2[%c0, %c0_0, %c0_1] : memref<1x8x64xf32, #tpu.memory_space<vmem>>, vector<1x8x64xf32>
    %1 = vector.shape_cast %0 : vector<1x8x64xf32> to vector<8x64xf32>
    %c0_2 = arith.constant 0 : index
    %c0_3 = arith.constant 0 : index
    %2 = vector.load %arg3[%c0_2, %c0_3] : memref<8x8xf32, #tpu.memory_space<vmem>>, vector<8x8xf32>
    %cst = arith.constant dense<0.000000e+00> : vector<8x64xf32>
    %3 = tpu.matmul %2, %1, %cst {dimension_numbers = #tpu.dot_dimension_numbers<[1], [0], [0], [1], [0, 0, 1, 1], [], []>} : vector<8x8xf32>, vector<8x64xf32>, vector<8x64xf32> -> vector<8x64xf32>
    %c0_4 = arith.constant 0 : index
    %c0_5 = arith.constant 0 : index
    %4 = vector.load %arg4[%c0_4, %c0_5] : memref<8x1xf32, #tpu.memory_space<vmem>>, vector<8x1xf32>
    %5 = vector.broadcast %4 : vector<8x1xf32> to vector<8x64xf32>
    %6 = arith.addf %3, %5 : vector<8x64xf32>
    %cst_6 = arith.constant 0.000000e+00 : f32
    %7 = vector.broadcast %cst_6 : f32 to vector<8x64xf32>
    %8 = arith.maximumf %6, %7 : vector<8x64xf32>
    %c0_7 = arith.constant 0 : index
    %c0_8 = arith.constant 0 : index
    %9 = vector.load %arg5[%c0_7, %c0_8] : memref<8x8xf32, #tpu.memory_space<vmem>>, vector<8x8xf32>
    %cst_9 = arith.constant dense<0.000000e+00> : vector<8x64xf32>
    %10 = tpu.matmul %9, %8, %cst_9 {dimension_numbers = #tpu.dot_dimension_numbers<[1], [0], [0], [1], [0, 0, 1, 1], [], []>} : vector<8x8xf32>, vector<8x64xf32>, vector<8x64xf32> -> vector<8x64xf32>
    %c0_10 = arith.constant 0 : index
    %c0_11 = arith.constant 0 : index
    %11 = vector.load %arg6[%c0_10, %c0_11] : memref<8x1xf32, #tpu.memory_space<vmem>>, vector<8x1xf32>
    %12 = vector.broadcast %11 : vector<8x1xf32> to vector<8x64xf32>
    %13 = arith.addf %10, %12 : vector<8x64xf32>
    %cst_12 = arith.constant 0.000000e+00 : f32
    %14 = vector.broadcast %cst_12 : f32 to vector<8x64xf32>
    %15 = arith.maximumf %13, %14 : vector<8x64xf32>
    %c0_13 = arith.constant 0 : index
    %c0_14 = arith.constant 0 : index
    %16 = vector.load %arg7[%c0_13, %c0_14] : memref<4x8xf32, #tpu.memory_space<vmem>>, vector<4x8xf32>
    %cst_15 = arith.constant dense<0.000000e+00> : vector<4x64xf32>
    %17 = tpu.matmul %16, %15, %cst_15 {dimension_numbers = #tpu.dot_dimension_numbers<[1], [0], [0], [1], [0, 0, 1, 1], [], []>} : vector<4x8xf32>, vector<8x64xf32>, vector<4x64xf32> -> vector<4x64xf32>
    %c0_16 = arith.constant 0 : index
    %c0_17 = arith.constant 0 : index
    %18 = vector.load %arg8[%c0_16, %c0_17] : memref<4x1xf32, #tpu.memory_space<vmem>>, vector<4x1xf32>
    %19 = vector.broadcast %18 : vector<4x1xf32> to vector<4x64xf32>
    %20 = arith.addf %17, %19 : vector<4x64xf32>
    %c0_18 = arith.constant 0 : index
    %c0_19 = arith.constant 0 : index
    %c0_20 = arith.constant 0 : index
    %21 = vector.load %arg9[%c0_18, %c0_19, %c0_20] : memref<1x4x64xf32, #tpu.memory_space<vmem>>, vector<1x4x64xf32>
    %22 = vector.shape_cast %21 : vector<1x4x64xf32> to vector<4x64xf32>
    %23 = vector.shape_cast %20 : vector<4x64xf32> to vector<1x4x64xf32>
    tpu.vector_store %arg9[%c0_18, %c0_19, %c0_20], %23 {strides = array<i32>} : memref<1x4x64xf32, #tpu.memory_space<vmem>>, vector<1x4x64xf32>,
    return
  }
  func.func @transform_0(%arg0: i32, %arg1: i32) -> (i32, i32, i32) {
    %c0_i32 = arith.constant 0 : i32
    %c0_i32_0 = arith.constant 0 : i32
    return %arg0, %c0_i32, %arg1 : i32, i32, i32
  }
  func.func @transform_1(%arg0: i32, %arg1: i32) -> (i32, i32) {
    %c0_i32 = arith.constant 0 : i32
    %c0_i32_0 = arith.constant 0 : i32
    %c0_i32_1 = arith.constant 0 : i32
    return %c0_i32, %c0_i32_0 : i32, i32
  }
  func.func @transform_2(%arg0: i32, %arg1: i32) -> (i32, i32) {
    %c0_i32 = arith.constant 0 : i32
    %c0_i32_0 = arith.constant 0 : i32
    %c0_i32_1 = arith.constant 0 : i32
    return %c0_i32, %c0_i32_0 : i32, i32
  }
  func.func @transform_3(%arg0: i32, %arg1: i32) -> (i32, i32) {
    %c0_i32 = arith.constant 0 : i32
    %c0_i32_0 = arith.constant 0 : i32
    %c0_i32_1 = arith.constant 0 : i32
    return %c0_i32, %c0_i32_0 : i32, i32
  }
  func.func @transform_4(%arg0: i32, %arg1: i32) -> (i32, i32) {
    %c0_i32 = arith.constant 0 : i32
    %c0_i32_0 = arith.constant 0 : i32
    %c0_i32_1 = arith.constant 0 : i32
    return %c0_i32, %c0_i32_0 : i32, i32
  }
  func.func @transform_5(%arg0: i32, %arg1: i32) -> (i32, i32) {
    %c0_i32 = arith.constant 0 : i32
    %c0_i32_0 = arith.constant 0 : i32
    %c0_i32_1 = arith.constant 0 : i32
    return %c0_i32, %c0_i32_0 : i32, i32
  }
  func.func @transform_6(%arg0: i32, %arg1: i32) -> (i32, i32) {
    %c0_i32 = arith.constant 0 : i32
    %c0_i32_0 = arith.constant 0 : i32
    %c0_i32_1 = arith.constant 0 : i32
    return %c0_i32, %c0_i32_0 : i32, i32
  }
  func.func @transform_7(%arg0: i32, %arg1: i32) -> (i32, i32, i32) {
    %c0_i32 = arith.constant 0 : i32
    %c0_i32_0 = arith.constant 0 : i32
    return %arg0, %c0_i32, %arg1 : i32, i32, i32
  }
}

module attributes {stable_mosaic.version = 11 : i64} {
  func.func @_mlp_kernel(%arg0: i32, %arg1: i32, %arg2: memref<1x16x256xf32, #tpu.memory_space<vmem>>, %arg3: memref<16x16xf32, #tpu.memory_space<vmem>>, %arg4: memref<16x1xf32, #tpu.memory_space<vmem>>, %arg5: memref<16x16xf32, #tpu.memory_space<vmem>>, %arg6: memref<16x1xf32, #tpu.memory_space<vmem>>, %arg7: memref<4x16xf32, #tpu.memory_space<vmem>>, %arg8: memref<4x1xf32, #tpu.memory_space<vmem>>, %arg9: memref<1x4x256xf32, #tpu.memory_space<vmem>>) attributes {dimension_semantics = [#tpu.dimension_semantics<parallel>, #tpu.dimension_semantics<parallel>], iteration_bounds = array<i64: 2, 1>, scalar_prefetch = 0 : i64, scratch_operands = 0 : i64, tpu.core_type = #tpu.core_type<tc>, window_params = [{transform_indices = @transform_0, window_bounds = array<i64: 1, 16, 256>}, {pipeline_mode = #tpu.pipeline_mode<synchronous>, transform_indices = @transform_1, window_bounds = array<i64: 16, 16>}, {pipeline_mode = #tpu.pipeline_mode<synchronous>, transform_indices = @transform_2, window_bounds = array<i64: 16, 1>}, {pipeline_mode = #tpu.pipeline_mode<synchronous>, transform_indices = @transform_3, window_bounds = array<i64: 16, 16>}, {pipeline_mode = #tpu.pipeline_mode<synchronous>, transform_indices = @transform_4, window_bounds = array<i64: 16, 1>}, {pipeline_mode = #tpu.pipeline_mode<synchronous>, transform_indices = @transform_5, window_bounds = array<i64: 4, 16>}, {pipeline_mode = #tpu.pipeline_mode<synchronous>, transform_indices = @transform_6, window_bounds = array<i64: 4, 1>}, {transform_indices = @transform_7, window_bounds = array<i64: 1, 4, 256>}]} {
    %c0 = arith.constant 0 : index
    %c0_0 = arith.constant 0 : index
    %c0_1 = arith.constant 0 : index
    %0 = vector.load %arg2[%c0, %c0_0, %c0_1] : memref<1x16x256xf32, #tpu.memory_space<vmem>>, vector<1x16x256xf32>
    %1 = vector.shape_cast %0 : vector<1x16x256xf32> to vector<16x256xf32>
    %c0_2 = arith.constant 0 : index
    %c0_3 = arith.constant 0 : index
    %2 = vector.load %arg3[%c0_2, %c0_3] : memref<16x16xf32, #tpu.memory_space<vmem>>, vector<16x16xf32>
    %cst = arith.constant dense<0.000000e+00> : vector<16x256xf32>
    %3 = tpu.matmul %2, %1, %cst {dimension_numbers = #tpu.dot_dimension_numbers<[1], [0], [0], [1], [0, 0, 1, 1], [], []>} : vector<16x16xf32>, vector<16x256xf32>, vector<16x256xf32> -> vector<16x256xf32>
    %c0_4 = arith.constant 0 : index
    %c0_5 = arith.constant 0 : index
    %4 = vector.load %arg4[%c0_4, %c0_5] : memref<16x1xf32, #tpu.memory_space<vmem>>, vector<16x1xf32>
    %5 = vector.broadcast %4 : vector<16x1xf32> to vector<16x256xf32>
    %6 = arith.addf %3, %5 : vector<16x256xf32>
    %cst_6 = arith.constant 0.000000e+00 : f32
    %7 = vector.broadcast %cst_6 : f32 to vector<16x256xf32>
    %8 = arith.maximumf %6, %7 : vector<16x256xf32>
    %c0_7 = arith.constant 0 : index
    %c0_8 = arith.constant 0 : index
    %9 = vector.load %arg5[%c0_7, %c0_8] : memref<16x16xf32, #tpu.memory_space<vmem>>, vector<16x16xf32>
    %cst_9 = arith.constant dense<0.000000e+00> : vector<16x256xf32>
    %10 = tpu.matmul %9, %8, %cst_9 {dimension_numbers = #tpu.dot_dimension_numbers<[1], [0], [0], [1], [0, 0, 1, 1], [], []>} : vector<16x16xf32>, vector<16x256xf32>, vector<16x256xf32> -> vector<16x256xf32>
    %c0_10 = arith.constant 0 : index
    %c0_11 = arith.constant 0 : index
    %11 = vector.load %arg6[%c0_10, %c0_11] : memref<16x1xf32, #tpu.memory_space<vmem>>, vector<16x1xf32>
    %12 = vector.broadcast %11 : vector<16x1xf32> to vector<16x256xf32>
    %13 = arith.addf %10, %12 : vector<16x256xf32>
    %cst_12 = arith.constant 0.000000e+00 : f32
    %14 = vector.broadcast %cst_12 : f32 to vector<16x256xf32>
    %15 = arith.maximumf %13, %14 : vector<16x256xf32>
    %c0_13 = arith.constant 0 : index
    %c0_14 = arith.constant 0 : index
    %16 = vector.load %arg7[%c0_13, %c0_14] : memref<4x16xf32, #tpu.memory_space<vmem>>, vector<4x16xf32>
    %cst_15 = arith.constant dense<0.000000e+00> : vector<4x256xf32>
    %17 = tpu.matmul %16, %15, %cst_15 {dimension_numbers = #tpu.dot_dimension_numbers<[1], [0], [0], [1], [0, 0, 1, 1], [], []>} : vector<4x16xf32>, vector<16x256xf32>, vector<4x256xf32> -> vector<4x256xf32>
    %c0_16 = arith.constant 0 : index
    %c0_17 = arith.constant 0 : index
    %18 = vector.load %arg8[%c0_16, %c0_17] : memref<4x1xf32, #tpu.memory_space<vmem>>, vector<4x1xf32>
    %19 = vector.broadcast %18 : vector<4x1xf32> to vector<4x256xf32>
    %20 = arith.addf %17, %19 : vector<4x256xf32>
    %c0_18 = arith.constant 0 : index
    %c0_19 = arith.constant 0 : index
    %c0_20 = arith.constant 0 : index
    %21 = vector.load %arg9[%c0_18, %c0_19, %c0_20] : memref<1x4x256xf32, #tpu.memory_space<vmem>>, vector<1x4x256xf32>
    %22 = vector.shape_cast %21 : vector<1x4x256xf32> to vector<4x256xf32>
    %23 = vector.shape_cast %20 : vector<4x256xf32> to vector<1x4x256xf32>
    tpu.vector_store %arg9[%c0_18, %c0_19, %c0_20], %23 {strides = array<i32>} : memref<1x4x256xf32, #tpu.memory_space<vmem>>, vector<1x4x256xf32>,
    return
  }
  func.func @transform_0(%arg0: i32, %arg1: i32) -> (i32, i32, i32) {
    %c0_i32 = arith.constant 0 : i32
    %c0_i32_0 = arith.constant 0 : i32
    return %arg0, %c0_i32, %arg1 : i32, i32, i32
  }
  func.func @transform_1(%arg0: i32, %arg1: i32) -> (i32, i32) {
    %c0_i32 = arith.constant 0 : i32
    %c0_i32_0 = arith.constant 0 : i32
    %c0_i32_1 = arith.constant 0 : i32
    return %c0_i32, %c0_i32_0 : i32, i32
  }
  func.func @transform_2(%arg0: i32, %arg1: i32) -> (i32, i32) {
    %c0_i32 = arith.constant 0 : i32
    %c0_i32_0 = arith.constant 0 : i32
    %c0_i32_1 = arith.constant 0 : i32
    return %c0_i32, %c0_i32_0 : i32, i32
  }
  func.func @transform_3(%arg0: i32, %arg1: i32) -> (i32, i32) {
    %c0_i32 = arith.constant 0 : i32
    %c0_i32_0 = arith.constant 0 : i32
    %c0_i32_1 = arith.constant 0 : i32
    return %c0_i32, %c0_i32_0 : i32, i32
  }
  func.func @transform_4(%arg0: i32, %arg1: i32) -> (i32, i32) {
    %c0_i32 = arith.constant 0 : i32
    %c0_i32_0 = arith.constant 0 : i32
    %c0_i32_1 = arith.constant 0 : i32
    return %c0_i32, %c0_i32_0 : i32, i32
  }
  func.func @transform_5(%arg0: i32, %arg1: i32) -> (i32, i32) {
    %c0_i32 = arith.constant 0 : i32
    %c0_i32_0 = arith.constant 0 : i32
    %c0_i32_1 = arith.constant 0 : i32
    return %c0_i32, %c0_i32_0 : i32, i32
  }
  func.func @transform_6(%arg0: i32, %arg1: i32) -> (i32, i32) {
    %c0_i32 = arith.constant 0 : i32
    %c0_i32_0 = arith.constant 0 : i32
    %c0_i32_1 = arith.constant 0 : i32
    return %c0_i32, %c0_i32_0 : i32, i32
  }
  func.func @transform_7(%arg0: i32, %arg1: i32) -> (i32, i32, i32) {
    %c0_i32 = arith.constant 0 : i32
    %c0_i32_0 = arith.constant 0 : i32
    return %arg0, %c0_i32, %arg1 : i32, i32, i32
  }
}

module attributes {stable_mosaic.version = 11 : i64} {
  func.func @kernel(%arg0: i32, %arg1: memref<1x4x8x8xf32, #tpu.memory_space<vmem>>, %arg2: memref<16x8xf32, #tpu.memory_space<vmem>>, %arg3: memref<8x16xf32, #tpu.memory_space<vmem>>, %arg4: memref<1x4x16x16xf32, #tpu.memory_space<vmem>>, %arg5: memref<16x16xf32, #tpu.memory_space<vmem>>, %arg6: memref<16x16xf32, #tpu.memory_space<vmem>>, %arg7: memref<1x4x16x16xf32, #tpu.memory_space<vmem>>) attributes {dimension_semantics = [#tpu.dimension_semantics<parallel>], iteration_bounds = array<i64: 2>, scalar_prefetch = 0 : i64, scratch_operands = 0 : i64, tpu.core_type = #tpu.core_type<tc>, window_params = [{transform_indices = @transform_0, window_bounds = array<i64: 1, 4, 8, 8>}, {pipeline_mode = #tpu.pipeline_mode<synchronous>, transform_indices = @transform_1, window_bounds = array<i64: 16, 8>}, {pipeline_mode = #tpu.pipeline_mode<synchronous>, transform_indices = @transform_2, window_bounds = array<i64: 8, 16>}, {transform_indices = @transform_3, window_bounds = array<i64: 1, 4, 16, 16>}, {pipeline_mode = #tpu.pipeline_mode<synchronous>, transform_indices = @transform_4, window_bounds = array<i64: 16, 16>}, {pipeline_mode = #tpu.pipeline_mode<synchronous>, transform_indices = @transform_5, window_bounds = array<i64: 16, 16>}, {transform_indices = @transform_6, window_bounds = array<i64: 1, 4, 16, 16>}]} {
    %c0 = arith.constant 0 : index
    %c0_0 = arith.constant 0 : index
    %c0_1 = arith.constant 0 : index
    %c0_2 = arith.constant 0 : index
    %0 = vector.load %arg1[%c0, %c0_0, %c0_1, %c0_2] : memref<1x4x8x8xf32, #tpu.memory_space<vmem>>, vector<1x1x8x8xf32>
    %1 = vector.shape_cast %0 : vector<1x1x8x8xf32> to vector<8x8xf32>
    %c0_3 = arith.constant 0 : index
    %c0_4 = arith.constant 0 : index
    %2 = vector.load %arg3[%c0_3, %c0_4] : memref<8x16xf32, #tpu.memory_space<vmem>>, vector<8x16xf32>
    %cst = arith.constant dense<0.000000e+00> : vector<8x16xf32>
    %3 = tpu.matmul %1, %2, %cst {dimension_numbers = #tpu.dot_dimension_numbers<[1], [0], [0], [1], [0, 0, 1, 1], [], []>} : vector<8x8xf32>, vector<8x16xf32>, vector<8x16xf32> -> vector<8x16xf32>
    %c0_5 = arith.constant 0 : index
    %c0_6 = arith.constant 0 : index
    %4 = vector.load %arg2[%c0_5, %c0_6] : memref<16x8xf32, #tpu.memory_space<vmem>>, vector<16x8xf32>
    %cst_7 = arith.constant dense<0.000000e+00> : vector<16x16xf32>
    %5 = tpu.matmul %4, %3, %cst_7 {dimension_numbers = #tpu.dot_dimension_numbers<[1], [0], [0], [1], [0, 0, 1, 1], [], []>} : vector<16x8xf32>, vector<8x16xf32>, vector<16x16xf32> -> vector<16x16xf32>
    %c0_8 = arith.constant 0 : index
    %c0_9 = arith.constant 0 : index
    %c0_10 = arith.constant 0 : index
    %c0_11 = arith.constant 0 : index
    %6 = vector.load %arg4[%c0_8, %c0_9, %c0_10, %c0_11] : memref<1x4x16x16xf32, #tpu.memory_space<vmem>>, vector<1x1x16x16xf32>
    %7 = vector.shape_cast %6 : vector<1x1x16x16xf32> to vector<16x16xf32>
    %c0_12 = arith.constant 0 : index
    %c0_13 = arith.constant 0 : index
    %8 = vector.load %arg6[%c0_12, %c0_13] : memref<16x16xf32, #tpu.memory_space<vmem>>, vector<16x16xf32>
    %cst_14 = arith.constant dense<0.000000e+00> : vector<16x16xf32>
    %9 = tpu.matmul %7, %8, %cst_14 {dimension_numbers = #tpu.dot_dimension_numbers<[1], [0], [0], [1], [0, 0, 1, 1], [], []>} : vector<16x16xf32>, vector<16x16xf32>, vector<16x16xf32> -> vector<16x16xf32>
    %c0_15 = arith.constant 0 : index
    %c0_16 = arith.constant 0 : index
    %10 = vector.load %arg5[%c0_15, %c0_16] : memref<16x16xf32, #tpu.memory_space<vmem>>, vector<16x16xf32>
    %cst_17 = arith.constant dense<0.000000e+00> : vector<16x16xf32>
    %11 = tpu.matmul %10, %9, %cst_17 {dimension_numbers = #tpu.dot_dimension_numbers<[1], [0], [0], [1], [0, 0, 1, 1], [], []>} : vector<16x16xf32>, vector<16x16xf32>, vector<16x16xf32> -> vector<16x16xf32>
    %12 = arith.addf %5, %11 : vector<16x16xf32>
    %c0_18 = arith.constant 0 : index
    %c0_19 = arith.constant 0 : index
    %c0_20 = arith.constant 0 : index
    %c0_21 = arith.constant 0 : index
    %13 = vector.load %arg7[%c0_18, %c0_19, %c0_20, %c0_21] : memref<1x4x16x16xf32, #tpu.memory_space<vmem>>, vector<1x1x16x16xf32>
    %14 = vector.shape_cast %13 : vector<1x1x16x16xf32> to vector<16x16xf32>
    %15 = vector.shape_cast %12 : vector<16x16xf32> to vector<1x1x16x16xf32>
    tpu.vector_store %arg7[%c0_18, %c0_19, %c0_20, %c0_21], %15 {strides = array<i32>} : memref<1x4x16x16xf32, #tpu.memory_space<vmem>>, vector<1x1x16x16xf32>,
    %c0_22 = arith.constant 0 : index
    %c1 = arith.constant 1 : index
    %c0_23 = arith.constant 0 : index
    %c0_24 = arith.constant 0 : index
    %16 = vector.load %arg1[%c0_22, %c1, %c0_23, %c0_24] : memref<1x4x8x8xf32, #tpu.memory_space<vmem>>, vector<1x1x8x8xf32>
    %17 = vector.shape_cast %16 : vector<1x1x8x8xf32> to vector<8x8xf32>
    %c0_25 = arith.constant 0 : index
    %c0_26 = arith.constant 0 : index
    %18 = vector.load %arg3[%c0_25, %c0_26] : memref<8x16xf32, #tpu.memory_space<vmem>>, vector<8x16xf32>
    %cst_27 = arith.constant dense<0.000000e+00> : vector<8x16xf32>
    %19 = tpu.matmul %17, %18, %cst_27 {dimension_numbers = #tpu.dot_dimension_numbers<[1], [0], [0], [1], [0, 0, 1, 1], [], []>} : vector<8x8xf32>, vector<8x16xf32>, vector<8x16xf32> -> vector<8x16xf32>
    %c0_28 = arith.constant 0 : index
    %c0_29 = arith.constant 0 : index
    %20 = vector.load %arg2[%c0_28, %c0_29] : memref<16x8xf32, #tpu.memory_space<vmem>>, vector<16x8xf32>
    %cst_30 = arith.constant dense<0.000000e+00> : vector<16x16xf32>
    %21 = tpu.matmul %20, %19, %cst_30 {dimension_numbers = #tpu.dot_dimension_numbers<[1], [0], [0], [1], [0, 0, 1, 1], [], []>} : vector<16x8xf32>, vector<8x16xf32>, vector<16x16xf32> -> vector<16x16xf32>
    %c0_31 = arith.constant 0 : index
    %c1_32 = arith.constant 1 : index
    %c0_33 = arith.constant 0 : index
    %c0_34 = arith.constant 0 : index
    %22 = vector.load %arg4[%c0_31, %c1_32, %c0_33, %c0_34] : memref<1x4x16x16xf32, #tpu.memory_space<vmem>>, vector<1x1x16x16xf32>
    %23 = vector.shape_cast %22 : vector<1x1x16x16xf32> to vector<16x16xf32>
    %c0_35 = arith.constant 0 : index
    %c0_36 = arith.constant 0 : index
    %24 = vector.load %arg6[%c0_35, %c0_36] : memref<16x16xf32, #tpu.memory_space<vmem>>, vector<16x16xf32>
    %cst_37 = arith.constant dense<0.000000e+00> : vector<16x16xf32>
    %25 = tpu.matmul %23, %24, %cst_37 {dimension_numbers = #tpu.dot_dimension_numbers<[1], [0], [0], [1], [0, 0, 1, 1], [], []>} : vector<16x16xf32>, vector<16x16xf32>, vector<16x16xf32> -> vector<16x16xf32>
    %c0_38 = arith.constant 0 : index
    %c0_39 = arith.constant 0 : index
    %26 = vector.load %arg5[%c0_38, %c0_39] : memref<16x16xf32, #tpu.memory_space<vmem>>, vector<16x16xf32>
    %cst_40 = arith.constant dense<0.000000e+00> : vector<16x16xf32>
    %27 = tpu.matmul %26, %25, %cst_40 {dimension_numbers = #tpu.dot_dimension_numbers<[1], [0], [0], [1], [0, 0, 1, 1], [], []>} : vector<16x16xf32>, vector<16x16xf32>, vector<16x16xf32> -> vector<16x16xf32>
    %28 = arith.addf %21, %27 : vector<16x16xf32>
    %c0_41 = arith.constant 0 : index
    %c1_42 = arith.constant 1 : index
    %c0_43 = arith.constant 0 : index
    %c0_44 = arith.constant 0 : index
    %29 = vector.load %arg7[%c0_41, %c1_42, %c0_43, %c0_44] : memref<1x4x16x16xf32, #tpu.memory_space<vmem>>, vector<1x1x16x16xf32>
    %30 = vector.shape_cast %29 : vector<1x1x16x16xf32> to vector<16x16xf32>
    %31 = vector.shape_cast %28 : vector<16x16xf32> to vector<1x1x16x16xf32>
    tpu.vector_store %arg7[%c0_41, %c1_42, %c0_43, %c0_44], %31 {strides = array<i32>} : memref<1x4x16x16xf32, #tpu.memory_space<vmem>>, vector<1x1x16x16xf32>,
    %c0_45 = arith.constant 0 : index
    %c2 = arith.constant 2 : index
    %c0_46 = arith.constant 0 : index
    %c0_47 = arith.constant 0 : index
    %32 = vector.load %arg1[%c0_45, %c2, %c0_46, %c0_47] : memref<1x4x8x8xf32, #tpu.memory_space<vmem>>, vector<1x1x8x8xf32>
    %33 = vector.shape_cast %32 : vector<1x1x8x8xf32> to vector<8x8xf32>
    %c0_48 = arith.constant 0 : index
    %c0_49 = arith.constant 0 : index
    %34 = vector.load %arg3[%c0_48, %c0_49] : memref<8x16xf32, #tpu.memory_space<vmem>>, vector<8x16xf32>
    %cst_50 = arith.constant dense<0.000000e+00> : vector<8x16xf32>
    %35 = tpu.matmul %33, %34, %cst_50 {dimension_numbers = #tpu.dot_dimension_numbers<[1], [0], [0], [1], [0, 0, 1, 1], [], []>} : vector<8x8xf32>, vector<8x16xf32>, vector<8x16xf32> -> vector<8x16xf32>
    %c0_51 = arith.constant 0 : index
    %c0_52 = arith.constant 0 : index
    %36 = vector.load %arg2[%c0_51, %c0_52] : memref<16x8xf32, #tpu.memory_space<vmem>>, vector<16x8xf32>
    %cst_53 = arith.constant dense<0.000000e+00> : vector<16x16xf32>
    %37 = tpu.matmul %36, %35, %cst_53 {dimension_numbers = #tpu.dot_dimension_numbers<[1], [0], [0], [1], [0, 0, 1, 1], [], []>} : vector<16x8xf32>, vector<8x16xf32>, vector<16x16xf32> -> vector<16x16xf32>
    %c0_54 = arith.constant 0 : index
    %c2_55 = arith.constant 2 : index
    %c0_56 = arith.constant 0 : index
    %c0_57 = arith.constant 0 : index
    %38 = vector.load %arg4[%c0_54, %c2_55, %c0_56, %c0_57] : memref<1x4x16x16xf32, #tpu.memory_space<vmem>>, vector<1x1x16x16xf32>
    %39 = vector.shape_cast %38 : vector<1x1x16x16xf32> to vector<16x16xf32>
    %c0_58 = arith.constant 0 : index
    %c0_59 = arith.constant 0 : index
    %40 = vector.load %arg6[%c0_58, %c0_59] : memref<16x16xf32, #tpu.memory_space<vmem>>, vector<16x16xf32>
    %cst_60 = arith.constant dense<0.000000e+00> : vector<16x16xf32>
    %41 = tpu.matmul %39, %40, %cst_60 {dimension_numbers = #tpu.dot_dimension_numbers<[1], [0], [0], [1], [0, 0, 1, 1], [], []>} : vector<16x16xf32>, vector<16x16xf32>, vector<16x16xf32> -> vector<16x16xf32>
    %c0_61 = arith.constant 0 : index
    %c0_62 = arith.constant 0 : index
    %42 = vector.load %arg5[%c0_61, %c0_62] : memref<16x16xf32, #tpu.memory_space<vmem>>, vector<16x16xf32>
    %cst_63 = arith.constant dense<0.000000e+00> : vector<16x16xf32>
    %43 = tpu.matmul %42, %41, %cst_63 {dimension_numbers = #tpu.dot_dimension_numbers<[1], [0], [0], [1], [0, 0, 1, 1], [], []>} : vector<16x16xf32>, vector<16x16xf32>, vector<16x16xf32> -> vector<16x16xf32>
    %44 = arith.addf %37, %43 : vector<16x16xf32>
    %c0_64 = arith.constant 0 : index
    %c2_65 = arith.constant 2 : index
    %c0_66 = arith.constant 0 : index
    %c0_67 = arith.constant 0 : index
    %45 = vector.load %arg7[%c0_64, %c2_65, %c0_66, %c0_67] : memref<1x4x16x16xf32, #tpu.memory_space<vmem>>, vector<1x1x16x16xf32>
    %46 = vector.shape_cast %45 : vector<1x1x16x16xf32> to vector<16x16xf32>
    %47 = vector.shape_cast %44 : vector<16x16xf32> to vector<1x1x16x16xf32>
    tpu.vector_store %arg7[%c0_64, %c2_65, %c0_66, %c0_67], %47 {strides = array<i32>} : memref<1x4x16x16xf32, #tpu.memory_space<vmem>>, vector<1x1x16x16xf32>,
    %c0_68 = arith.constant 0 : index
    %c3 = arith.constant 3 : index
    %c0_69 = arith.constant 0 : index
    %c0_70 = arith.constant 0 : index
    %48 = vector.load %arg1[%c0_68, %c3, %c0_69, %c0_70] : memref<1x4x8x8xf32, #tpu.memory_space<vmem>>, vector<1x1x8x8xf32>
    %49 = vector.shape_cast %48 : vector<1x1x8x8xf32> to vector<8x8xf32>
    %c0_71 = arith.constant 0 : index
    %c0_72 = arith.constant 0 : index
    %50 = vector.load %arg3[%c0_71, %c0_72] : memref<8x16xf32, #tpu.memory_space<vmem>>, vector<8x16xf32>
    %cst_73 = arith.constant dense<0.000000e+00> : vector<8x16xf32>
    %51 = tpu.matmul %49, %50, %cst_73 {dimension_numbers = #tpu.dot_dimension_numbers<[1], [0], [0], [1], [0, 0, 1, 1], [], []>} : vector<8x8xf32>, vector<8x16xf32>, vector<8x16xf32> -> vector<8x16xf32>
    %c0_74 = arith.constant 0 : index
    %c0_75 = arith.constant 0 : index
    %52 = vector.load %arg2[%c0_74, %c0_75] : memref<16x8xf32, #tpu.memory_space<vmem>>, vector<16x8xf32>
    %cst_76 = arith.constant dense<0.000000e+00> : vector<16x16xf32>
    %53 = tpu.matmul %52, %51, %cst_76 {dimension_numbers = #tpu.dot_dimension_numbers<[1], [0], [0], [1], [0, 0, 1, 1], [], []>} : vector<16x8xf32>, vector<8x16xf32>, vector<16x16xf32> -> vector<16x16xf32>
    %c0_77 = arith.constant 0 : index
    %c3_78 = arith.constant 3 : index
    %c0_79 = arith.constant 0 : index
    %c0_80 = arith.constant 0 : index
    %54 = vector.load %arg4[%c0_77, %c3_78, %c0_79, %c0_80] : memref<1x4x16x16xf32, #tpu.memory_space<vmem>>, vector<1x1x16x16xf32>
    %55 = vector.shape_cast %54 : vector<1x1x16x16xf32> to vector<16x16xf32>
    %c0_81 = arith.constant 0 : index
    %c0_82 = arith.constant 0 : index
    %56 = vector.load %arg6[%c0_81, %c0_82] : memref<16x16xf32, #tpu.memory_space<vmem>>, vector<16x16xf32>
    %cst_83 = arith.constant dense<0.000000e+00> : vector<16x16xf32>
    %57 = tpu.matmul %55, %56, %cst_83 {dimension_numbers = #tpu.dot_dimension_numbers<[1], [0], [0], [1], [0, 0, 1, 1], [], []>} : vector<16x16xf32>, vector<16x16xf32>, vector<16x16xf32> -> vector<16x16xf32>
    %c0_84 = arith.constant 0 : index
    %c0_85 = arith.constant 0 : index
    %58 = vector.load %arg5[%c0_84, %c0_85] : memref<16x16xf32, #tpu.memory_space<vmem>>, vector<16x16xf32>
    %cst_86 = arith.constant dense<0.000000e+00> : vector<16x16xf32>
    %59 = tpu.matmul %58, %57, %cst_86 {dimension_numbers = #tpu.dot_dimension_numbers<[1], [0], [0], [1], [0, 0, 1, 1], [], []>} : vector<16x16xf32>, vector<16x16xf32>, vector<16x16xf32> -> vector<16x16xf32>
    %60 = arith.addf %53, %59 : vector<16x16xf32>
    %c0_87 = arith.constant 0 : index
    %c3_88 = arith.constant 3 : index
    %c0_89 = arith.constant 0 : index
    %c0_90 = arith.constant 0 : index
    %61 = vector.load %arg7[%c0_87, %c3_88, %c0_89, %c0_90] : memref<1x4x16x16xf32, #tpu.memory_space<vmem>>, vector<1x1x16x16xf32>
    %62 = vector.shape_cast %61 : vector<1x1x16x16xf32> to vector<16x16xf32>
    %63 = vector.shape_cast %60 : vector<16x16xf32> to vector<1x1x16x16xf32>
    tpu.vector_store %arg7[%c0_87, %c3_88, %c0_89, %c0_90], %63 {strides = array<i32>} : memref<1x4x16x16xf32, #tpu.memory_space<vmem>>, vector<1x1x16x16xf32>,
    return
  }
  func.func @transform_0(%arg0: i32) -> (i32, i32, i32, i32) {
    %c0_i32 = arith.constant 0 : i32
    %c0_i32_0 = arith.constant 0 : i32
    %c0_i32_1 = arith.constant 0 : i32
    %c0_i32_2 = arith.constant 0 : i32
    return %arg0, %c0_i32, %c0_i32_0, %c0_i32_1 : i32, i32, i32, i32
  }
  func.func @transform_1(%arg0: i32) -> (i32, i32) {
    %c0_i32 = arith.constant 0 : i32
    %c0_i32_0 = arith.constant 0 : i32
    %c0_i32_1 = arith.constant 0 : i32
    return %c0_i32, %c0_i32_0 : i32, i32
  }
  func.func @transform_2(%arg0: i32) -> (i32, i32) {
    %c0_i32 = arith.constant 0 : i32
    %c0_i32_0 = arith.constant 0 : i32
    %c0_i32_1 = arith.constant 0 : i32
    return %c0_i32, %c0_i32_0 : i32, i32
  }
  func.func @transform_3(%arg0: i32) -> (i32, i32, i32, i32) {
    %c0_i32 = arith.constant 0 : i32
    %c0_i32_0 = arith.constant 0 : i32
    %c0_i32_1 = arith.constant 0 : i32
    %c0_i32_2 = arith.constant 0 : i32
    return %arg0, %c0_i32, %c0_i32_0, %c0_i32_1 : i32, i32, i32, i32
  }
  func.func @transform_4(%arg0: i32) -> (i32, i32) {
    %c0_i32 = arith.constant 0 : i32
    %c0_i32_0 = arith.constant 0 : i32
    %c0_i32_1 = arith.constant 0 : i32
    return %c0_i32, %c0_i32_0 : i32, i32
  }
  func.func @transform_5(%arg0: i32) -> (i32, i32) {
    %c0_i32 = arith.constant 0 : i32
    %c0_i32_0 = arith.constant 0 : i32
    %c0_i32_1 = arith.constant 0 : i32
    return %c0_i32, %c0_i32_0 : i32, i32
  }
  func.func @transform_6(%arg0: i32) -> (i32, i32, i32, i32) {
    %c0_i32 = arith.constant 0 : i32
    %c0_i32_0 = arith.constant 0 : i32
    %c0_i32_1 = arith.constant 0 : i32
    %c0_i32_2 = arith.constant 0 : i32
    return %arg0, %c0_i32, %c0_i32_0, %c0_i32_1 : i32, i32, i32, i32
  }
}

</mosaic_0001>

<llo_original>
// kernel: nse1_forward.4
$region0: #{nse1_forward.4}
  #allocation0 [shape = 'u32[]', space=smem, size = 0x4, offset = 0x4, fixed_abs, tag = 'smem constant byte address 0x4 - core index']
  #allocation1 [shape = 'u32[144,128]{1,0:T(1,128)}', space=vmem, size = 0x12000, scoped, tag = 'internal scratch']
  %s0 = inlined_call_operand.vmem [shape: f32[2,16,256], index: 0, kind: input, shape index: {}]
  %s1 = inlined_call_operand.vmem [shape: f32[16,16], index: 1, kind: input, shape index: {}]
  %s2 = inlined_call_operand.vmem [shape: f32[16,1], index: 2, kind: input, shape index: {}]
  %s3 = inlined_call_operand.vmem [shape: f32[16,16], index: 3, kind: input, shape index: {}]
  %s4 = inlined_call_operand.vmem [shape: f32[16,1], index: 4, kind: input, shape index: {}]
  %s5 = inlined_call_operand.vmem [shape: f32[4,16], index: 5, kind: input, shape index: {}]
  %s6 = inlined_call_operand.vmem [shape: f32[4,1], index: 6, kind: input, shape index: {}]
  %s7 = inlined_call_operand.vmem [shape: f32[2,4,256], index: 7, kind: output, shape index: {}]
  %s8 = sld [smem:[#allocation0]]
  $region61: #{nse1_forward.4} parent=0
    _
  %s10 = ssub.s32 1, %s8
  %s11 = scalar_select 0, %s10, %s8
  loop: start=0, step=1, limit=4
  $region2: #{nse1_forward.4} parent=0 // loop_pre_header
    _
  $region3: #{nse1_forward.4} parent=0 // loop_header
    %s13 = sphi 0, %s17
    %p14 = scmp.ge.s32.totalorder %s13, 4
    %s20 = sphi 0, %s32
    %s21 = sphi 0, %s28
    %s22 = sphi 0, %s20
    %s23 = sphi 0, %s21
    %s24 = sphi 0, %s22
    %s25 = sphi 0, %s23
    %s37 = sphi 0, %s39
    %s40 = sphi 0, %s37
    %s41 = sphi 0, %s40
    %s57 = sphi 0, %s41
    %s61 = sphi 0, %s61
    %s63 = sphi 0, %s61
    %s64 = sphi 0, %s63
    %s78 = sphi 0, %s64
    %s82 = sphi 0, %s82
    %s84 = sphi 0, %s82
    %s85 = sphi 0, %s84
    %s99 = sphi 0, %s85
    %s103 = sphi 0, %s103
    %s105 = sphi 0, %s103
    %s106 = sphi 0, %s105
    %s120 = sphi 0, %s106
    %s124 = sphi 0, %s124
    %s126 = sphi 0, %s124
    %s127 = sphi 0, %s126
    %s141 = sphi 0, %s127
    %s145 = sphi 0, %s145
    %s147 = sphi 0, %s145
    %s148 = sphi 0, %s147
    %s162 = sphi 0, %s148
    %s166 = sphi 0, %s166
    %s168 = sphi 0, %s166
    %s169 = sphi 0, %s168
    %s183 = sphi 0, %s169
    %s191 = sphi 0, %s193
    %s194 = sphi 0, %s191
    %s195 = sphi 0, %s194
    %s211 = sphi 0, %s195
  $region4: #{nse1_forward.4} parent=0 // loop_header_branch
    %16 = sbr.rel (%p14) target = $region8
  $region5: #{nse1_forward.4} parent=0 // loop_body
    %s18 = ssub.s32 %s13, 1
    %s19 = ssub.s32 %s13, 2
    %s26 = sadd.s32 1, %s21
    %p27 = scmp.ge.s32.totalorder %s26, 1
    %s28 = scalar_select %p27, 0, %s26
    %s29 = sadd.s32 1, %s20
    %s30 = scalar_select %p27, %s29, %s20
    %p31 = scmp.ge.s32.totalorder %s30, 2
    %s32 = scalar_select %p31, 0, %s30
    %s33 = ssub.s32 %s20, %s32
    %s34 = ssub.s32 %s21, %s28
    %s35 = sor.u32 %s33, %s34
    %p36 = scmp.eq.s32.totalorder %s35, 0
    %s38 = sadd.s32 %s37, 1
    %s39 = scalar_select %p36, %s37, %s38
    %p42 = pneg %p36
    %p43 = scmp.eq.s32.totalorder %s13, 1
    %p44 = por %p42, %p43
    %p45 = scmp.ne.s32.totalorder %s37, %s40
    %p46 = scmp.eq.s32.totalorder %s13, 0
    %p47 = por %p45, %p46
    %p48 = scmp.ne.s32.totalorder %s37, %s40
    %p49 = scmp.eq.s32.totalorder %s18, 1
    %p50 = por %p48, %p49
    %p51 = scmp.ne.s32.totalorder %s40, %s41
    %p52 = scmp.eq.s32.totalorder %s18, 0
    %p53 = por %p51, %p52
    %p54 = scmp.ne.s32.totalorder %s40, %s41
    %p55 = scmp.eq.s32.totalorder %s19, 1
    %p56 = por %p54, %p55
    %p58 = scmp.ne.s32.totalorder %s41, %s57
    %p59 = scmp.eq.s32.totalorder %s19, 0
    %p60 = por %p58, %p59
    %s62 = sadd.s32 %s61, 1
    %p65 = scmp.eq.s32.totalorder %s13, 1
    %p66 = scmp.ne.s32.totalorder %s61, %s63
    %p67 = scmp.eq.s32.totalorder %s13, 0
    %p68 = por %p66, %p67
    %p69 = scmp.ne.s32.totalorder %s61, %s63
    %p70 = scmp.eq.s32.totalorder %s18, 1
    %p71 = por %p69, %p70
    %p72 = scmp.ne.s32.totalorder %s63, %s64
    %p73 = scmp.eq.s32.totalorder %s18, 0
    %p74 = por %p72, %p73
    %p75 = scmp.ne.s32.totalorder %s63, %s64
    %p76 = scmp.eq.s32.totalorder %s19, 1
    %p77 = por %p75, %p76
    %p79 = scmp.ne.s32.totalorder %s64, %s78
    %p80 = scmp.eq.s32.totalorder %s19, 0
    %p81 = por %p79, %p80
    %s83 = sadd.s32 %s82, 1
    %p86 = scmp.eq.s32.totalorder %s13, 1
    %p87 = scmp.ne.s32.totalorder %s82, %s84
    %p88 = scmp.eq.s32.totalorder %s13, 0
    %p89 = por %p87, %p88
    %p90 = scmp.ne.s32.totalorder %s82, %s84
    %p91 = scmp.eq.s32.totalorder %s18, 1
    %p92 = por %p90, %p91
    %p93 = scmp.ne.s32.totalorder %s84, %s85
    %p94 = scmp.eq.s32.totalorder %s18, 0
    %p95 = por %p93, %p94
    %p96 = scmp.ne.s32.totalorder %s84, %s85
    %p97 = scmp.eq.s32.totalorder %s19, 1
    %p98 = por %p96, %p97
    %p100 = scmp.ne.s32.totalorder %s85, %s99
    %p101 = scmp.eq.s32.totalorder %s19, 0
    %p102 = por %p100, %p101
    %s104 = sadd.s32 %s103, 1
    %p107 = scmp.eq.s32.totalorder %s13, 1
    %p108 = scmp.ne.s32.totalorder %s103, %s105
    %p109 = scmp.eq.s32.totalorder %s13, 0
    %p110 = por %p108, %p109
    %p111 = scmp.ne.s32.totalorder %s103, %s105
    %p112 = scmp.eq.s32.totalorder %s18, 1
    %p113 = por %p111, %p112
    %p114 = scmp.ne.s32.totalorder %s105, %s106
    %p115 = scmp.eq.s32.totalorder %s18, 0
    %p116 = por %p114, %p115
    %p117 = scmp.ne.s32.totalorder %s105, %s106
    %p118 = scmp.eq.s32.totalorder %s19, 1
    %p119 = por %p117, %p118
    %p121 = scmp.ne.s32.totalorder %s106, %s120
    %p122 = scmp.eq.s32.totalorder %s19, 0
    %p123 = por %p121, %p122
    %s125 = sadd.s32 %s124, 1
    %p128 = scmp.eq.s32.totalorder %s13, 1
    %p129 = scmp.ne.s32.totalorder %s124, %s126
    %p130 = scmp.eq.s32.totalorder %s13, 0
    %p131 = por %p129, %p130
    %p132 = scmp.ne.s32.totalorder %s124, %s126
    %p133 = scmp.eq.s32.totalorder %s18, 1
    %p134 = por %p132, %p133
    %p135 = scmp.ne.s32.totalorder %s126, %s127
    %p136 = scmp.eq.s32.totalorder %s18, 0
    %p137 = por %p135, %p136
    %p138 = scmp.ne.s32.totalorder %s126, %s127
    %p139 = scmp.eq.s32.totalorder %s19, 1
    %p140 = por %p138, %p139
    %p142 = scmp.ne.s32.totalorder %s127, %s141
    %p143 = scmp.eq.s32.totalorder %s19, 0
    %p144 = por %p142, %p143
    %s146 = sadd.s32 %s145, 1
    %p149 = scmp.eq.s32.totalorder %s13, 1
    %p150 = scmp.ne.s32.totalorder %s145, %s147
    %p151 = scmp.eq.s32.totalorder %s13, 0
    %p152 = por %p150, %p151
    %p153 = scmp.ne.s32.totalorder %s145, %s147
    %p154 = scmp.eq.s32.totalorder %s18, 1
    %p155 = por %p153, %p154
    %p156 = scmp.ne.s32.totalorder %s147, %s148
    %p157 = scmp.eq.s32.totalorder %s18, 0
    %p158 = por %p156, %p157
    %p159 = scmp.ne.s32.totalorder %s147, %s148
    %p160 = scmp.eq.s32.totalorder %s19, 1
    %p161 = por %p159, %p160
    %p163 = scmp.ne.s32.totalorder %s148, %s162
    %p164 = scmp.eq.s32.totalorder %s19, 0
    %p165 = por %p163, %p164
    %s167 = sadd.s32 %s166, 1
    %p170 = scmp.eq.s32.totalorder %s13, 1
    %p171 = scmp.ne.s32.totalorder %s166, %s168
    %p172 = scmp.eq.s32.totalorder %s13, 0
    %p173 = por %p171, %p172
    %p174 = scmp.ne.s32.totalorder %s166, %s168
    %p175 = scmp.eq.s32.totalorder %s18, 1
    %p176 = por %p174, %p175
    %p177 = scmp.ne.s32.totalorder %s168, %s169
    %p178 = scmp.eq.s32.totalorder %s18, 0
    %p179 = por %p177, %p178
    %p180 = scmp.ne.s32.totalorder %s168, %s169
    %p181 = scmp.eq.s32.totalorder %s19, 1
    %p182 = por %p180, %p181
    %p184 = scmp.ne.s32.totalorder %s169, %s183
    %p185 = scmp.eq.s32.totalorder %s19, 0
    %p186 = por %p184, %p185
    %s187 = ssub.s32 %s20, %s32
    %s188 = ssub.s32 %s21, %s28
    %s189 = sor.u32 %s187, %s188
    %p190 = scmp.eq.s32.totalorder %s189, 0
    %s192 = sadd.s32 %s191, 1
    %s193 = scalar_select %p190, %s191, %s192
    %p196 = pneg %p190
    %p197 = scmp.eq.s32.totalorder %s13, 1
    %p198 = por %p196, %p197
    %p199 = scmp.ne.s32.totalorder %s191, %s194
    %p200 = scmp.eq.s32.totalorder %s13, 0
    %p201 = por %p199, %p200
    %p202 = scmp.ne.s32.totalorder %s191, %s194
    %p203 = scmp.eq.s32.totalorder %s18, 1
    %p204 = por %p202, %p203
    %p205 = scmp.ne.s32.totalorder %s194, %s195
    %p206 = scmp.eq.s32.totalorder %s18, 0
    %p207 = por %p205, %p206
    %p208 = scmp.ne.s32.totalorder %s194, %s195
    %p209 = scmp.eq.s32.totalorder %s19, 1
    %p210 = por %p208, %p209
    %p212 = scmp.ne.s32.totalorder %s195, %s211
    %p213 = scmp.eq.s32.totalorder %s19, 0
    %p214 = por %p212, %p213
    %p215 = scmp.le.s32.totalorder 1, %s13
    %p216 = scmp.lt.s32.totalorder %s13, 3
    %p217 = pnand %p215, %p216
    %p218 = pneg %p217
    // Predicated region
    $region9: #{nse1_forward.4} parent=5 // pred_check
      _
    $region10: #{nse1_forward.4} parent=5 // pred_check_branch
      %220 = sbr.rel (%p217) target = $region12
    $region11: #{nse1_forward.4} parent=5 // pred_region
      %s221 = ssub.s32 %s13, 1
      // Predicated region
      $region13: #{nse1_forward.4} parent=11 // pred_check
        %p222 = pneg %p74
      $region14: #{nse1_forward.4} parent=11 // pred_check_branch
        %224 = sbr.rel (%p222) target = $region16
      $region15: #{nse1_forward.4} parent=11 // pred_region
        _
      $region16: #{nse1_forward.4} parent=11 // pred_fallthru
        _
      // Predicated region
      $region17: #{nse1_forward.4} parent=11 // pred_check
        %p225 = pneg %p95
      $region18: #{nse1_forward.4} parent=11 // pred_check_branch
        %227 = sbr.rel (%p225) target = $region20
      $region19: #{nse1_forward.4} parent=11 // pred_region
        _
      $region20: #{nse1_forward.4} parent=11 // pred_fallthru
        _
      // Predicated region
      $region21: #{nse1_forward.4} parent=11 // pred_check
        %p228 = pneg %p116
      $region22: #{nse1_forward.4} parent=11 // pred_check_branch
        %230 = sbr.rel (%p228) target = $region24
      $region23: #{nse1_forward.4} parent=11 // pred_region
        _
      $region24: #{nse1_forward.4} parent=11 // pred_fallthru
        _
      // Predicated region
      $region25: #{nse1_forward.4} parent=11 // pred_check
        %p231 = pneg %p137
      $region26: #{nse1_forward.4} parent=11 // pred_check_branch
        %233 = sbr.rel (%p231) target = $region28
      $region27: #{nse1_forward.4} parent=11 // pred_region
        _
      $region28: #{nse1_forward.4} parent=11 // pred_fallthru
        _
      // Predicated region
      $region29: #{nse1_forward.4} parent=11 // pred_check
        %p234 = pneg %p158
      $region30: #{nse1_forward.4} parent=11 // pred_check_branch
        %236 = sbr.rel (%p234) target = $region32
      $region31: #{nse1_forward.4} parent=11 // pred_region
        _
      $region32: #{nse1_forward.4} parent=11 // pred_fallthru
        _
      // Predicated region
      $region33: #{nse1_forward.4} parent=11 // pred_check
        %p237 = pneg %p179
      $region34: #{nse1_forward.4} parent=11 // pred_check_branch
        %239 = sbr.rel (%p237) target = $region36
      $region35: #{nse1_forward.4} parent=11 // pred_region
        _
      $region36: #{nse1_forward.4} parent=11 // pred_fallthru
        _
    $region12: #{nse1_forward.4} parent=5 // pred_fallthru
      _
    %p240 = scmp.lt.s32.totalorder %s13, 2
    // Predicated region
    $region37: #{nse1_forward.4} parent=5 // pred_check
      %p241 = pneg %p240
    $region38: #{nse1_forward.4} parent=5 // pred_check_branch
      %243 = sbr.rel (%p241) target = $region40
    $region39: #{nse1_forward.4} parent=5 // pred_region
      // Predicated region
      $region41: #{nse1_forward.4} parent=39 // pred_check
        %p244 = pneg %p47
      $region42: #{nse1_forward.4} parent=39 // pred_check_branch
        %246 = sbr.rel (%p244) target = $region44
      $region43: #{nse1_forward.4} parent=39 // pred_region
        %s247 = smul.u32 2, %s21
        %p248 = scmp.lt.s32.totalorder %s20, 1
        %s249 = scalar_select %p248, %s20, 1
        %p250 = scmp.lt.s32.totalorder %s247, 1
        %s251 = scalar_select %p250, %s247, 1
        %s252 = smul.addr %s249, 4
        %s253 = sadd.s32 %s251, %s252
        %s254 = smul.addr %s253, 8
        %s255 = scalar_lea.vmem %s0, %s254
        %s256 = smul.u32 2, %s21
      $region44: #{nse1_forward.4} parent=39 // pred_fallthru
        _
    $region40: #{nse1_forward.4} parent=5 // pred_fallthru
      _
    %p257 = scmp.le.s32.totalorder 1, %s13
    %p258 = scmp.lt.s32.totalorder %s13, 3
    %p259 = pnand %p257, %p258
    %p260 = pneg %p259
    // Predicated region
    $region45: #{nse1_forward.4} parent=5 // pred_check
      _
    $region46: #{nse1_forward.4} parent=5 // pred_check_branch
      %262 = sbr.rel (%p259) target = $region48
    $region47: #{nse1_forward.4} parent=5 // pred_region
      %s263 = ssub.s32 %s13, 1
      %s264 = smul.u32 2, %s23
      %p265 = scmp.lt.s32.totalorder %s22, 1
      %s266 = scalar_select %p265, %s22, 1
      %p267 = scmp.lt.s32.totalorder %s264, 1
      %s268 = scalar_select %p267, %s264, 1
      %s269 = smul.addr %s266, 4
      %s270 = sadd.s32 %s268, %s269
      %s271 = smul.addr %s270, 8
      %s272 = scalar_lea.vmem %s0, %s271
      %p273 = pneg %p53
      %p274 = pneg %p50
      %p275 = pneg %p74
      %p276 = pneg %p71
      %p277 = pneg %p95
      %p278 = pneg %p92
      %p279 = pneg %p116
      %p280 = pneg %p113
      %p281 = pneg %p137
      %p282 = pneg %p134
      %p283 = pneg %p158
      %p284 = pneg %p155
      %p285 = pneg %p179
      %p286 = pneg %p176
      %p287 = pneg %p207
      %p288 = pneg %p204
      %s289 = smul.u32 2, %s23
      %p290 = scmp.lt.s32.totalorder %s22, 1
      %s291 = scalar_select %p290, %s22, 1
      %p292 = scmp.lt.s32.totalorder %s289, 1
      %s293 = scalar_select %p292, %s289, 1
      %s294 = smul.addr %s291, 2
      %s295 = sadd.s32 %s293, %s294
      %s296 = smul.addr %s295, 4
      %s297 = scalar_lea.vmem %s7, %s296
      %s298 = smul.u32 2, %s23
      %p299 = scmp.lt.s32.totalorder %s22, 1
      %s300 = scalar_select %p299, %s22, 1
      %p301 = scmp.lt.s32.totalorder %s298, 1
      %s302 = scalar_select %p301, %s298, 1
      %s303 = smul.addr %s300, 4
      %s304 = sadd.s32 %s302, %s303
      %s305 = smul.addr %s304, 8
      %s306 = scalar_lea.vmem %s0, %s305
      %s307 = smul.u32 2, %s23
      %s308 = smul.u32 2, %s23
      %p309 = scmp.lt.s32.totalorder %s22, 1
      %s310 = scalar_select %p309, %s22, 1
      %p311 = scmp.lt.s32.totalorder %s308, 1
      %s312 = scalar_select %p311, %s308, 1
      %s313 = smul.addr %s310, 2
      %s314 = sadd.s32 %s312, %s313
      %s315 = smul.addr %s314, 4
      %s316 = scalar_lea.vmem %s7, %s315
      %s317 = smul.u32 2, %s23
      %v318 = vld [vmem:[%s306] sm:$0xff]
      %v319 = vld [vmem:[%s306 + $0x8] sm:$0xff]
      %v320 = vld [vmem:[%s306 + $0x10] sm:$0xff]
      %v321 = vld [vmem:[%s306 + $0x18] sm:$0xff]
      %v322 = vld [vmem:[%s1] sm:$0xff]
      %v323 = vld [vmem:[%s1 + $0x8] sm:$0xff]
      %v324 = vld [vmem:[%s2] sm:$0xff]
      %v325 = vld [vmem:[%s2 + $0x8] sm:$0xff]
      %327 = vset.pattern.permute.xlu0 0
      %328 = vperm.xlu0 %327, %v324
      %v329 = vpop.permute.xlu0 %328
      %332 = vset.pattern.permute.xlu0 0
      %333 = vperm.xlu0 %332, %v325
      %v334 = vpop.permute.xlu0 %333
      %vm336 = vcmask 130048
      %v338 = vsel %vm336, %v322, 0
      %v341 = vsel %vm336, %v323, 0
      %343 = vmatprep.subr.mxu0 %v319
      %344 = vmatpush1.msra.mxu0 %v318
      %345 = vmatprep.subr.mxu0 %v321
      %346 = vmatpush1.msra.mxu0 %v320
      %347 = vmatprep.subr.mxu0 0.0
      %348 = vmatpush1.msra.mxu0 0.0
      %349 = vmatprep.subr.mxu0 0.0
      %350 = vmatpush1.msra.mxu0 0.0
      %351 = vmatprep.subr.mxu0 0.0
      %352 = vmatpush1.msra.mxu0 0.0
      %353 = vmatprep.subr.mxu0 0.0
      %354 = vmatpush1.msra.mxu0 0.0
      %355 = vmatprep.subr.mxu0 0.0
      %356 = vmatpush1.msra.mxu0 0.0
      %357 = vmatprep.subr.mxu0 0.0
      %358 = vmatpush1.msra.mxu0 0.0
      %359 = vmatprep.subr.mxu0 0.0
      %360 = vmatpush1.msra.mxu0 0.0
      %361 = vmatprep.subr.mxu0 0.0
      %362 = vmatpush1.msra.mxu0 0.0
      %363 = vmatprep.subr.mxu0 0.0
      %364 = vmatpush1.msra.mxu0 0.0
      %365 = vmatprep.subr.mxu0 0.0
      %366 = vmatpush1.msra.mxu0 0.0
      %367 = vmatprep.subr.mxu0 0.0
      %368 = vmatpush1.msra.mxu0 0.0
      %369 = vmatprep.subr.mxu0 0.0
      %370 = vmatpush1.msra.mxu0 0.0
      %371 = vmatprep.subr.mxu0 0.0
      %372 = vmatpush1.msra.mxu0 0.0
      %373 = vmatprep.subr.mxu0 0.0
      %374 = vmatpush1.msra.mxu0 0.0
      %375 = vmatprep.subr.mxu0 0.0
      %376 = vmatpush1.msra.mxu0 0.0
      %377 = vmatprep.subr.mxu0 0.0
      %378 = vmatpush1.msra.mxu0 0.0
      %379 = vmatprep.subr.mxu0 0.0
      %380 = vmatpush1.msra.mxu0 0.0
      %381 = vmatprep.subr.mxu0 0.0
      %382 = vmatpush1.msra.mxu0 0.0
      %383 = vmatprep.subr.mxu0 0.0
      %384 = vmatpush1.msra.mxu0 0.0
      %385 = vmatprep.subr.mxu0 0.0
      %386 = vmatpush1.msra.mxu0 0.0
      %387 = vmatprep.subr.mxu0 0.0
      %388 = vmatpush1.msra.mxu0 0.0
      %389 = vmatprep.subr.mxu0 0.0
      %390 = vmatpush1.msra.mxu0 0.0
      %391 = vmatprep.subr.mxu0 0.0
      %392 = vmatpush1.msra.mxu0 0.0
      %393 = vmatprep.subr.mxu0 0.0
      %394 = vmatpush1.msra.mxu0 0.0
      %395 = vmatprep.subr.mxu0 0.0
      %396 = vmatpush1.msra.mxu0 0.0
      %397 = vmatprep.subr.mxu0 0.0
      %398 = vmatpush1.msra.mxu0 0.0
      %399 = vmatprep.subr.mxu0 0.0
      %400 = vmatpush1.msra.mxu0 0.0
      %401 = vmatprep.subr.mxu0 0.0
      %402 = vmatpush1.msra.mxu0 0.0
      %403 = vmatprep.subr.mxu0 0.0
      %404 = vmatpush1.msra.mxu0 0.0
      %405 = vmatprep.subr.mxu0 0.0
      %406 = vmatpush1.msra.mxu0 0.0
      %407 = vmatprep.mubr.f32.mxu0 0.0
      %408 = vmatmul.mubr.f32.gmra.mrb[0].mxu0 %v338
      %v409 = vpop.f32.mrb[0].mxu0
      %v410 = vadd.f32 %v329, %v409
      %v411 = vpop.f32.mrb[0].mxu0
      %v412 = vadd.f32 %v329, %v411
      %413 = vmatprep.mubr.f32.mxu0 0.0
      %414 = vmatmul.mubr.f32.gmra.mrb[0].mxu0 %v341
      %v415 = vpop.f32.mrb[0].mxu0
      %v416 = vadd.f32 %v334, %v415
      %v417 = vpop.f32.mrb[0].mxu0
      %v418 = vadd.f32 %v334, %v417
      %419 = vdwg.mxu0
      %v420 = vmax.f32 %v410, 0.0
      %v421 = vmax.f32 %v412, 0.0
      %v422 = vmax.f32 %v416, 0.0
      %v423 = vmax.f32 %v418, 0.0
      %v424 = vld [vmem:[%s3] sm:$0xff]
      %v425 = vld [vmem:[%s3 + $0x8] sm:$0xff]
      %v426 = vld [vmem:[%s4] sm:$0xff]
      %v427 = vld [vmem:[%s4 + $0x8] sm:$0xff]
      %429 = vset.pattern.permute.xlu0 0
      %430 = vperm.xlu0 %429, %v426
      %v431 = vpop.permute.xlu0 %430
      %434 = vset.pattern.permute.xlu0 0
      %435 = vperm.xlu0 %434, %v427
      %v436 = vpop.permute.xlu0 %435
      %v439 = vsel %vm336, %v424, 0
      %v442 = vsel %vm336, %v425, 0
      %444 = vmatprep.subr.mxu0 %v421
      %445 = vmatpush1.msra.mxu0 %v420
      %446 = vmatprep.subr.mxu0 %v423
      %447 = vmatpush1.msra.mxu0 %v422
      %448 = vmatprep.subr.mxu0 0.0
      %449 = vmatpush1.msra.mxu0 0.0
      %450 = vmatprep.subr.mxu0 0.0
      %451 = vmatpush1.msra.mxu0 0.0
      %452 = vmatprep.subr.mxu0 0.0
      %453 = vmatpush1.msra.mxu0 0.0
      %454 = vmatprep.subr.mxu0 0.0
      %455 = vmatpush1.msra.mxu0 0.0
      %456 = vmatprep.subr.mxu0 0.0
      %457 = vmatpush1.msra.mxu0 0.0
      %458 = vmatprep.subr.mxu0 0.0
      %459 = vmatpush1.msra.mxu0 0.0
      %460 = vmatprep.subr.mxu0 0.0
      %461 = vmatpush1.msra.mxu0 0.0
      %462 = vmatprep.subr.mxu0 0.0
      %463 = vmatpush1.msra.mxu0 0.0
      %464 = vmatprep.subr.mxu0 0.0
      %465 = vmatpush1.msra.mxu0 0.0
      %466 = vmatprep.subr.mxu0 0.0
      %467 = vmatpush1.msra.mxu0 0.0
      %468 = vmatprep.subr.mxu0 0.0
      %469 = vmatpush1.msra.mxu0 0.0
      %470 = vmatprep.subr.mxu0 0.0
      %471 = vmatpush1.msra.mxu0 0.0
      %472 = vmatprep.subr.mxu0 0.0
      %473 = vmatpush1.msra.mxu0 0.0
      %474 = vmatprep.subr.mxu0 0.0
      %475 = vmatpush1.msra.mxu0 0.0
      %476 = vmatprep.subr.mxu0 0.0
      %477 = vmatpush1.msra.mxu0 0.0
      %478 = vmatprep.subr.mxu0 0.0
      %479 = vmatpush1.msra.mxu0 0.0
      %480 = vmatprep.subr.mxu0 0.0
      %481 = vmatpush1.msra.mxu0 0.0
      %482 = vmatprep.subr.mxu0 0.0
      %483 = vmatpush1.msra.mxu0 0.0
      %484 = vmatprep.subr.mxu0 0.0
      %485 = vmatpush1.msra.mxu0 0.0
      %486 = vmatprep.subr.mxu0 0.0
      %487 = vmatpush1.msra.mxu0 0.0
      %488 = vmatprep.subr.mxu0 0.0
      %489 = vmatpush1.msra.mxu0 0.0
      %490 = vmatprep.subr.mxu0 0.0
      %491 = vmatpush1.msra.mxu0 0.0
      %492 = vmatprep.subr.mxu0 0.0
      %493 = vmatpush1.msra.mxu0 0.0
      %494 = vmatprep.subr.mxu0 0.0
      %495 = vmatpush1.msra.mxu0 0.0
      %496 = vmatprep.subr.mxu0 0.0
      %497 = vmatpush1.msra.mxu0 0.0
      %498 = vmatprep.subr.mxu0 0.0
      %499 = vmatpush1.msra.mxu0 0.0
      %500 = vmatprep.subr.mxu0 0.0
      %501 = vmatpush1.msra.mxu0 0.0
      %502 = vmatprep.subr.mxu0 0.0
      %503 = vmatpush1.msra.mxu0 0.0
      %504 = vmatprep.subr.mxu0 0.0
      %505 = vmatpush1.msra.mxu0 0.0
      %506 = vmatprep.subr.mxu0 0.0
      %507 = vmatpush1.msra.mxu0 0.0
      %508 = vmatprep.mubr.f32.mxu0 0.0
      %509 = vmatmul.mubr.f32.gmra.mrb[0].mxu0 %v439
      %v510 = vpop.f32.mrb[0].mxu0
      %v511 = vadd.f32 %v431, %v510
      %v512 = vpop.f32.mrb[0].mxu0
      %v513 = vadd.f32 %v431, %v512
      %514 = vmatprep.mubr.f32.mxu0 0.0
      %515 = vmatmul.mubr.f32.gmra.mrb[0].mxu0 %v442
      %v516 = vpop.f32.mrb[0].mxu0
      %v517 = vadd.f32 %v436, %v516
      %v518 = vpop.f32.mrb[0].mxu0
      %v519 = vadd.f32 %v436, %v518
      %520 = vdwg.mxu0
      %v521 = vmax.f32 %v511, 0.0
      %v522 = vmax.f32 %v513, 0.0
      %v523 = vmax.f32 %v517, 0.0
      %v524 = vmax.f32 %v519, 0.0
      %v525 = vld [vmem:[%s5] sm:$0xf]
      %v526 = vld [vmem:[%s6] sm:$0xf]
      %528 = vset.pattern.permute.xlu0 0
      %529 = vperm.xlu0 %528, %v526
      %v530 = vpop.permute.xlu0 %529
      %v533 = vsel %vm336, %v525, 0
      %535 = vmatprep.subr.mxu0 %v522
      %536 = vmatpush1.msra.mxu0 %v521
      %537 = vmatprep.subr.mxu0 %v524
      %538 = vmatpush1.msra.mxu0 %v523
      %539 = vmatprep.subr.mxu0 0.0
      %540 = vmatpush1.msra.mxu0 0.0
      %541 = vmatprep.subr.mxu0 0.0
      %542 = vmatpush1.msra.mxu0 0.0
      %543 = vmatprep.subr.mxu0 0.0
      %544 = vmatpush1.msra.mxu0 0.0
      %545 = vmatprep.subr.mxu0 0.0
      %546 = vmatpush1.msra.mxu0 0.0
      %547 = vmatprep.subr.mxu0 0.0
      %548 = vmatpush1.msra.mxu0 0.0
      %549 = vmatprep.subr.mxu0 0.0
      %550 = vmatpush1.msra.mxu0 0.0
      %551 = vmatprep.subr.mxu0 0.0
      %552 = vmatpush1.msra.mxu0 0.0
      %553 = vmatprep.subr.mxu0 0.0
      %554 = vmatpush1.msra.mxu0 0.0
      %555 = vmatprep.subr.mxu0 0.0
      %556 = vmatpush1.msra.mxu0 0.0
      %557 = vmatprep.subr.mxu0 0.0
      %558 = vmatpush1.msra.mxu0 0.0
      %559 = vmatprep.subr.mxu0 0.0
      %560 = vmatpush1.msra.mxu0 0.0
      %561 = vmatprep.subr.mxu0 0.0
      %562 = vmatpush1.msra.mxu0 0.0
      %563 = vmatprep.subr.mxu0 0.0
      %564 = vmatpush1.msra.mxu0 0.0
      %565 = vmatprep.subr.mxu0 0.0
      %566 = vmatpush1.msra.mxu0 0.0
      %567 = vmatprep.subr.mxu0 0.0
      %568 = vmatpush1.msra.mxu0 0.0
      %569 = vmatprep.subr.mxu0 0.0
      %570 = vmatpush1.msra.mxu0 0.0
      %571 = vmatprep.subr.mxu0 0.0
      %572 = vmatpush1.msra.mxu0 0.0
      %573 = vmatprep.subr.mxu0 0.0
      %574 = vmatpush1.msra.mxu0 0.0
      %575 = vmatprep.subr.mxu0 0.0
      %576 = vmatpush1.msra.mxu0 0.0
      %577 = vmatprep.subr.mxu0 0.0
      %578 = vmatpush1.msra.mxu0 0.0
      %579 = vmatprep.subr.mxu0 0.0
      %580 = vmatpush1.msra.mxu0 0.0
      %581 = vmatprep.subr.mxu0 0.0
      %582 = vmatpush1.msra.mxu0 0.0
      %583 = vmatprep.subr.mxu0 0.0
      %584 = vmatpush1.msra.mxu0 0.0
      %585 = vmatprep.subr.mxu0 0.0
      %586 = vmatpush1.msra.mxu0 0.0
      %587 = vmatprep.subr.mxu0 0.0
      %588 = vmatpush1.msra.mxu0 0.0
      %589 = vmatprep.subr.mxu0 0.0
      %590 = vmatpush1.msra.mxu0 0.0
      %591 = vmatprep.subr.mxu0 0.0
      %592 = vmatpush1.msra.mxu0 0.0
      %593 = vmatprep.subr.mxu0 0.0
      %594 = vmatpush1.msra.mxu0 0.0
      %595 = vmatprep.subr.mxu0 0.0
      %596 = vmatpush1.msra.mxu0 0.0
      %597 = vmatprep.subr.mxu0 0.0
      %598 = vmatpush1.msra.mxu0 0.0
      %599 = vmatprep.mubr.f32.mxu0 0.0
      %600 = vmatmul.mubr.f32.gmra.mrb[0].mxu0 %v533
      %v601 = vpop.f32.mrb[0].mxu0
      %v602 = vadd.f32 %v530, %v601
      %v603 = vpop.f32.mrb[0].mxu0
      %v604 = vadd.f32 %v530, %v603
      %605 = vdwg.mxu0
      %v608 = vcombine.low %v602, %v604
      %610 = vst [vmem:[%s316] sm:$0xff] %v608
      %s611 = smul.u32 2, %s23
      %p612 = scmp.lt.s32.totalorder %s22, 1
      %s613 = scalar_select %p612, %s22, 1
      %p614 = scmp.lt.s32.totalorder %s611, 1
      %s615 = scalar_select %p614, %s611, 1
      %s616 = smul.addr %s613, 2
      %s617 = sadd.s32 %s615, %s616
      %s618 = smul.addr %s617, 4
      %s619 = scalar_lea.vmem %s7, %s618
      // Predicated region
      $region49: #{nse1_forward.4} parent=47 // pred_check
        %p620 = pneg %p204
      $region50: #{nse1_forward.4} parent=47 // pred_check_branch
        %622 = sbr.rel (%p620) target = $region52
      $region51: #{nse1_forward.4} parent=47 // pred_region
        %s623 = smul.u32 2, %s23
      $region52: #{nse1_forward.4} parent=47 // pred_fallthru
        _
    $region48: #{nse1_forward.4} parent=5 // pred_fallthru
      _
    %p624 = scmp.le.s32.totalorder 2, %s13
    // Predicated region
    $region53: #{nse1_forward.4} parent=5 // pred_check
      %p625 = pneg %p624
    $region54: #{nse1_forward.4} parent=5 // pred_check_branch
      %627 = sbr.rel (%p625) target = $region56
    $region55: #{nse1_forward.4} parent=5 // pred_region
      %s628 = ssub.s32 %s13, 2
      // Predicated region
      $region57: #{nse1_forward.4} parent=55 // pred_check
        %p629 = pneg %p210
      $region58: #{nse1_forward.4} parent=55 // pred_check_branch
        %631 = sbr.rel (%p629) target = $region60
      $region59: #{nse1_forward.4} parent=55 // pred_region
        %s632 = smul.u32 2, %s25
        %p633 = scmp.lt.s32.totalorder %s24, 1
        %s634 = scalar_select %p633, %s24, 1
        %p635 = scmp.lt.s32.totalorder %s632, 1
        %s636 = scalar_select %p635, %s632, 1
        %s637 = smul.addr %s634, 2
        %s638 = sadd.s32 %s636, %s637
        %s639 = smul.addr %s638, 4
        %s640 = scalar_lea.vmem %s7, %s639
      $region60: #{nse1_forward.4} parent=55 // pred_fallthru
        _
    $region56: #{nse1_forward.4} parent=5 // pred_fallthru
      _
  $region6: #{nse1_forward.4} parent=0 // loop_footer
    %s17 = sadd.s32 1, %s13
  $region7: #{nse1_forward.4} parent=0 // loop_footer_branch
    %12 = sbr.rel target = $region3
  $region8: #{nse1_forward.4} parent=0 // loop_exit
    _

// kernel: nse1_forward.3
$region0: #{nse1_forward.3}
  #allocation0 [shape = 'u32[]', space=smem, size = 0x4, offset = 0x4, fixed_abs, tag = 'smem constant byte address 0x4 - core index']
  #allocation1 [shape = 'u32[144,128]{1,0:T(1,128)}', space=vmem, size = 0x12000, scoped, tag = 'internal scratch']
  %s0 = inlined_call_operand.vmem [shape: f32[2,8,64], index: 0, kind: input, shape index: {}]
  %s1 = inlined_call_operand.vmem [shape: f32[8,8], index: 1, kind: input, shape index: {}]
  %s2 = inlined_call_operand.vmem [shape: f32[8,1], index: 2, kind: input, shape index: {}]
  %s3 = inlined_call_operand.vmem [shape: f32[8,8], index: 3, kind: input, shape index: {}]
  %s4 = inlined_call_operand.vmem [shape: f32[8,1], index: 4, kind: input, shape index: {}]
  %s5 = inlined_call_operand.vmem [shape: f32[4,8], index: 5, kind: input, shape index: {}]
  %s6 = inlined_call_operand.vmem [shape: f32[4,1], index: 6, kind: input, shape index: {}]
  %s7 = inlined_call_operand.vmem [shape: f32[2,4,64], index: 7, kind: output, shape index: {}]
  %s8 = sld [smem:[#allocation0]]
  $region61: #{nse1_forward.3} parent=0
    _
  %s10 = ssub.s32 1, %s8
  %s11 = scalar_select 0, %s10, %s8
  loop: start=0, step=1, limit=4
  $region2: #{nse1_forward.3} parent=0 // loop_pre_header
    _
  $region3: #{nse1_forward.3} parent=0 // loop_header
    %s13 = sphi 0, %s17
    %p14 = scmp.ge.s32.totalorder %s13, 4
    %s20 = sphi 0, %s32
    %s21 = sphi 0, %s28
    %s22 = sphi 0, %s20
    %s23 = sphi 0, %s21
    %s24 = sphi 0, %s22
    %s25 = sphi 0, %s23
    %s37 = sphi 0, %s39
    %s40 = sphi 0, %s37
    %s41 = sphi 0, %s40
    %s57 = sphi 0, %s41
    %s61 = sphi 0, %s61
    %s63 = sphi 0, %s61
    %s64 = sphi 0, %s63
    %s78 = sphi 0, %s64
    %s82 = sphi 0, %s82
    %s84 = sphi 0, %s82
    %s85 = sphi 0, %s84
    %s99 = sphi 0, %s85
    %s103 = sphi 0, %s103
    %s105 = sphi 0, %s103
    %s106 = sphi 0, %s105
    %s120 = sphi 0, %s106
    %s124 = sphi 0, %s124
    %s126 = sphi 0, %s124
    %s127 = sphi 0, %s126
    %s141 = sphi 0, %s127
    %s145 = sphi 0, %s145
    %s147 = sphi 0, %s145
    %s148 = sphi 0, %s147
    %s162 = sphi 0, %s148
    %s166 = sphi 0, %s166
    %s168 = sphi 0, %s166
    %s169 = sphi 0, %s168
    %s183 = sphi 0, %s169
    %s191 = sphi 0, %s193
    %s194 = sphi 0, %s191
    %s195 = sphi 0, %s194
    %s211 = sphi 0, %s195
  $region4: #{nse1_forward.3} parent=0 // loop_header_branch
    %16 = sbr.rel (%p14) target = $region8
  $region5: #{nse1_forward.3} parent=0 // loop_body
    %s18 = ssub.s32 %s13, 1
    %s19 = ssub.s32 %s13, 2
    %s26 = sadd.s32 1, %s21
    %p27 = scmp.ge.s32.totalorder %s26, 1
    %s28 = scalar_select %p27, 0, %s26
    %s29 = sadd.s32 1, %s20
    %s30 = scalar_select %p27, %s29, %s20
    %p31 = scmp.ge.s32.totalorder %s30, 2
    %s32 = scalar_select %p31, 0, %s30
    %s33 = ssub.s32 %s20, %s32
    %s34 = ssub.s32 %s21, %s28
    %s35 = sor.u32 %s33, %s34
    %p36 = scmp.eq.s32.totalorder %s35, 0
    %s38 = sadd.s32 %s37, 1
    %s39 = scalar_select %p36, %s37, %s38
    %p42 = pneg %p36
    %p43 = scmp.eq.s32.totalorder %s13, 1
    %p44 = por %p42, %p43
    %p45 = scmp.ne.s32.totalorder %s37, %s40
    %p46 = scmp.eq.s32.totalorder %s13, 0
    %p47 = por %p45, %p46
    %p48 = scmp.ne.s32.totalorder %s37, %s40
    %p49 = scmp.eq.s32.totalorder %s18, 1
    %p50 = por %p48, %p49
    %p51 = scmp.ne.s32.totalorder %s40, %s41
    %p52 = scmp.eq.s32.totalorder %s18, 0
    %p53 = por %p51, %p52
    %p54 = scmp.ne.s32.totalorder %s40, %s41
    %p55 = scmp.eq.s32.totalorder %s19, 1
    %p56 = por %p54, %p55
    %p58 = scmp.ne.s32.totalorder %s41, %s57
    %p59 = scmp.eq.s32.totalorder %s19, 0
    %p60 = por %p58, %p59
    %s62 = sadd.s32 %s61, 1
    %p65 = scmp.eq.s32.totalorder %s13, 1
    %p66 = scmp.ne.s32.totalorder %s61, %s63
    %p67 = scmp.eq.s32.totalorder %s13, 0
    %p68 = por %p66, %p67
    %p69 = scmp.ne.s32.totalorder %s61, %s63
    %p70 = scmp.eq.s32.totalorder %s18, 1
    %p71 = por %p69, %p70
    %p72 = scmp.ne.s32.totalorder %s63, %s64
    %p73 = scmp.eq.s32.totalorder %s18, 0
    %p74 = por %p72, %p73
    %p75 = scmp.ne.s32.totalorder %s63, %s64
    %p76 = scmp.eq.s32.totalorder %s19, 1
    %p77 = por %p75, %p76
    %p79 = scmp.ne.s32.totalorder %s64, %s78
    %p80 = scmp.eq.s32.totalorder %s19, 0
    %p81 = por %p79, %p80
    %s83 = sadd.s32 %s82, 1
    %p86 = scmp.eq.s32.totalorder %s13, 1
    %p87 = scmp.ne.s32.totalorder %s82, %s84
    %p88 = scmp.eq.s32.totalorder %s13, 0
    %p89 = por %p87, %p88
    %p90 = scmp.ne.s32.totalorder %s82, %s84
    %p91 = scmp.eq.s32.totalorder %s18, 1
    %p92 = por %p90, %p91
    %p93 = scmp.ne.s32.totalorder %s84, %s85
    %p94 = scmp.eq.s32.totalorder %s18, 0
    %p95 = por %p93, %p94
    %p96 = scmp.ne.s32.totalorder %s84, %s85
    %p97 = scmp.eq.s32.totalorder %s19, 1
    %p98 = por %p96, %p97
    %p100 = scmp.ne.s32.totalorder %s85, %s99
    %p101 = scmp.eq.s32.totalorder %s19, 0
    %p102 = por %p100, %p101
    %s104 = sadd.s32 %s103, 1
    %p107 = scmp.eq.s32.totalorder %s13, 1
    %p108 = scmp.ne.s32.totalorder %s103, %s105
    %p109 = scmp.eq.s32.totalorder %s13, 0
    %p110 = por %p108, %p109
    %p111 = scmp.ne.s32.totalorder %s103, %s105
    %p112 = scmp.eq.s32.totalorder %s18, 1
    %p113 = por %p111, %p112
    %p114 = scmp.ne.s32.totalorder %s105, %s106
    %p115 = scmp.eq.s32.totalorder %s18, 0
    %p116 = por %p114, %p115
    %p117 = scmp.ne.s32.totalorder %s105, %s106
    %p118 = scmp.eq.s32.totalorder %s19, 1
    %p119 = por %p117, %p118
    %p121 = scmp.ne.s32.totalorder %s106, %s120
    %p122 = scmp.eq.s32.totalorder %s19, 0
    %p123 = por %p121, %p122
    %s125 = sadd.s32 %s124, 1
    %p128 = scmp.eq.s32.totalorder %s13, 1
    %p129 = scmp.ne.s32.totalorder %s124, %s126
    %p130 = scmp.eq.s32.totalorder %s13, 0
    %p131 = por %p129, %p130
    %p132 = scmp.ne.s32.totalorder %s124, %s126
    %p133 = scmp.eq.s32.totalorder %s18, 1
    %p134 = por %p132, %p133
    %p135 = scmp.ne.s32.totalorder %s126, %s127
    %p136 = scmp.eq.s32.totalorder %s18, 0
    %p137 = por %p135, %p136
    %p138 = scmp.ne.s32.totalorder %s126, %s127
    %p139 = scmp.eq.s32.totalorder %s19, 1
    %p140 = por %p138, %p139
    %p142 = scmp.ne.s32.totalorder %s127, %s141
    %p143 = scmp.eq.s32.totalorder %s19, 0
    %p144 = por %p142, %p143
    %s146 = sadd.s32 %s145, 1
    %p149 = scmp.eq.s32.totalorder %s13, 1
    %p150 = scmp.ne.s32.totalorder %s145, %s147
    %p151 = scmp.eq.s32.totalorder %s13, 0
    %p152 = por %p150, %p151
    %p153 = scmp.ne.s32.totalorder %s145, %s147
    %p154 = scmp.eq.s32.totalorder %s18, 1
    %p155 = por %p153, %p154
    %p156 = scmp.ne.s32.totalorder %s147, %s148
    %p157 = scmp.eq.s32.totalorder %s18, 0
    %p158 = por %p156, %p157
    %p159 = scmp.ne.s32.totalorder %s147, %s148
    %p160 = scmp.eq.s32.totalorder %s19, 1
    %p161 = por %p159, %p160
    %p163 = scmp.ne.s32.totalorder %s148, %s162
    %p164 = scmp.eq.s32.totalorder %s19, 0
    %p165 = por %p163, %p164
    %s167 = sadd.s32 %s166, 1
    %p170 = scmp.eq.s32.totalorder %s13, 1
    %p171 = scmp.ne.s32.totalorder %s166, %s168
    %p172 = scmp.eq.s32.totalorder %s13, 0
    %p173 = por %p171, %p172
    %p174 = scmp.ne.s32.totalorder %s166, %s168
    %p175 = scmp.eq.s32.totalorder %s18, 1
    %p176 = por %p174, %p175
    %p177 = scmp.ne.s32.totalorder %s168, %s169
    %p178 = scmp.eq.s32.totalorder %s18, 0
    %p179 = por %p177, %p178
    %p180 = scmp.ne.s32.totalorder %s168, %s169
    %p181 = scmp.eq.s32.totalorder %s19, 1
    %p182 = por %p180, %p181
    %p184 = scmp.ne.s32.totalorder %s169, %s183
    %p185 = scmp.eq.s32.totalorder %s19, 0
    %p186 = por %p184, %p185
    %s187 = ssub.s32 %s20, %s32
    %s188 = ssub.s32 %s21, %s28
    %s189 = sor.u32 %s187, %s188
    %p190 = scmp.eq.s32.totalorder %s189, 0
    %s192 = sadd.s32 %s191, 1
    %s193 = scalar_select %p190, %s191, %s192
    %p196 = pneg %p190
    %p197 = scmp.eq.s32.totalorder %s13, 1
    %p198 = por %p196, %p197
    %p199 = scmp.ne.s32.totalorder %s191, %s194
    %p200 = scmp.eq.s32.totalorder %s13, 0
    %p201 = por %p199, %p200
    %p202 = scmp.ne.s32.totalorder %s191, %s194
    %p203 = scmp.eq.s32.totalorder %s18, 1
    %p204 = por %p202, %p203
    %p205 = scmp.ne.s32.totalorder %s194, %s195
    %p206 = scmp.eq.s32.totalorder %s18, 0
    %p207 = por %p205, %p206
    %p208 = scmp.ne.s32.totalorder %s194, %s195
    %p209 = scmp.eq.s32.totalorder %s19, 1
    %p210 = por %p208, %p209
    %p212 = scmp.ne.s32.totalorder %s195, %s211
    %p213 = scmp.eq.s32.totalorder %s19, 0
    %p214 = por %p212, %p213
    %p215 = scmp.le.s32.totalorder 1, %s13
    %p216 = scmp.lt.s32.totalorder %s13, 3
    %p217 = pnand %p215, %p216
    %p218 = pneg %p217
    // Predicated region
    $region9: #{nse1_forward.3} parent=5 // pred_check
      _
    $region10: #{nse1_forward.3} parent=5 // pred_check_branch
      %220 = sbr.rel (%p217) target = $region12
    $region11: #{nse1_forward.3} parent=5 // pred_region
      %s221 = ssub.s32 %s13, 1
      // Predicated region
      $region13: #{nse1_forward.3} parent=11 // pred_check
        %p222 = pneg %p74
      $region14: #{nse1_forward.3} parent=11 // pred_check_branch
        %224 = sbr.rel (%p222) target = $region16
      $region15: #{nse1_forward.3} parent=11 // pred_region
        _
      $region16: #{nse1_forward.3} parent=11 // pred_fallthru
        _
      // Predicated region
      $region17: #{nse1_forward.3} parent=11 // pred_check
        %p225 = pneg %p95
      $region18: #{nse1_forward.3} parent=11 // pred_check_branch
        %227 = sbr.rel (%p225) target = $region20
      $region19: #{nse1_forward.3} parent=11 // pred_region
        _
      $region20: #{nse1_forward.3} parent=11 // pred_fallthru
        _
      // Predicated region
      $region21: #{nse1_forward.3} parent=11 // pred_check
        %p228 = pneg %p116
      $region22: #{nse1_forward.3} parent=11 // pred_check_branch
        %230 = sbr.rel (%p228) target = $region24
      $region23: #{nse1_forward.3} parent=11 // pred_region
        _
      $region24: #{nse1_forward.3} parent=11 // pred_fallthru
        _
      // Predicated region
      $region25: #{nse1_forward.3} parent=11 // pred_check
        %p231 = pneg %p137
      $region26: #{nse1_forward.3} parent=11 // pred_check_branch
        %233 = sbr.rel (%p231) target = $region28
      $region27: #{nse1_forward.3} parent=11 // pred_region
        _
      $region28: #{nse1_forward.3} parent=11 // pred_fallthru
        _
      // Predicated region
      $region29: #{nse1_forward.3} parent=11 // pred_check
        %p234 = pneg %p158
      $region30: #{nse1_forward.3} parent=11 // pred_check_branch
        %236 = sbr.rel (%p234) target = $region32
      $region31: #{nse1_forward.3} parent=11 // pred_region
        _
      $region32: #{nse1_forward.3} parent=11 // pred_fallthru
        _
      // Predicated region
      $region33: #{nse1_forward.3} parent=11 // pred_check
        %p237 = pneg %p179
      $region34: #{nse1_forward.3} parent=11 // pred_check_branch
        %239 = sbr.rel (%p237) target = $region36
      $region35: #{nse1_forward.3} parent=11 // pred_region
        _
      $region36: #{nse1_forward.3} parent=11 // pred_fallthru
        _
    $region12: #{nse1_forward.3} parent=5 // pred_fallthru
      _
    %p240 = scmp.lt.s32.totalorder %s13, 2
    // Predicated region
    $region37: #{nse1_forward.3} parent=5 // pred_check
      %p241 = pneg %p240
    $region38: #{nse1_forward.3} parent=5 // pred_check_branch
      %243 = sbr.rel (%p241) target = $region40
    $region39: #{nse1_forward.3} parent=5 // pred_region
      // Predicated region
      $region41: #{nse1_forward.3} parent=39 // pred_check
        %p244 = pneg %p47
      $region42: #{nse1_forward.3} parent=39 // pred_check_branch
        %246 = sbr.rel (%p244) target = $region44
      $region43: #{nse1_forward.3} parent=39 // pred_region
        %p247 = scmp.lt.s32.totalorder %s20, 1
        %s248 = scalar_select %p247, %s20, 1
        %p249 = scmp.lt.s32.totalorder %s21, 0
        %s250 = scalar_select %p249, %s21, 0
        %s251 = sadd.s32 %s250, %s248
        %s252 = smul.addr %s251, 8
        %s253 = scalar_lea.vmem %s0, %s252
      $region44: #{nse1_forward.3} parent=39 // pred_fallthru
        _
    $region40: #{nse1_forward.3} parent=5 // pred_fallthru
      _
    %p254 = scmp.le.s32.totalorder 1, %s13
    %p255 = scmp.lt.s32.totalorder %s13, 3
    %p256 = pnand %p254, %p255
    %p257 = pneg %p256
    // Predicated region
    $region45: #{nse1_forward.3} parent=5 // pred_check
      _
    $region46: #{nse1_forward.3} parent=5 // pred_check_branch
      %259 = sbr.rel (%p256) target = $region48
    $region47: #{nse1_forward.3} parent=5 // pred_region
      %s260 = ssub.s32 %s13, 1
      %p261 = scmp.lt.s32.totalorder %s22, 1
      %s262 = scalar_select %p261, %s22, 1
      %p263 = scmp.lt.s32.totalorder %s23, 0
      %s264 = scalar_select %p263, %s23, 0
      %s265 = sadd.s32 %s264, %s262
      %s266 = smul.addr %s265, 8
      %s267 = scalar_lea.vmem %s0, %s266
      %p268 = pneg %p53
      %p269 = pneg %p50
      %p270 = pneg %p74
      %p271 = pneg %p71
      %p272 = pneg %p95
      %p273 = pneg %p92
      %p274 = pneg %p116
      %p275 = pneg %p113
      %p276 = pneg %p137
      %p277 = pneg %p134
      %p278 = pneg %p158
      %p279 = pneg %p155
      %p280 = pneg %p179
      %p281 = pneg %p176
      %p282 = pneg %p207
      %p283 = pneg %p204
      %p284 = scmp.lt.s32.totalorder %s22, 1
      %s285 = scalar_select %p284, %s22, 1
      %p286 = scmp.lt.s32.totalorder %s23, 0
      %s287 = scalar_select %p286, %s23, 0
      %s288 = sadd.s32 %s287, %s285
      %s289 = smul.addr %s288, 4
      %s290 = scalar_lea.vmem %s7, %s289
      %p291 = scmp.lt.s32.totalorder %s22, 1
      %s292 = scalar_select %p291, %s22, 1
      %p293 = scmp.lt.s32.totalorder %s23, 0
      %s294 = scalar_select %p293, %s23, 0
      %s295 = sadd.s32 %s294, %s292
      %s296 = smul.addr %s295, 8
      %s297 = scalar_lea.vmem %s0, %s296
      %p298 = scmp.lt.s32.totalorder %s22, 1
      %s299 = scalar_select %p298, %s22, 1
      %p300 = scmp.lt.s32.totalorder %s23, 0
      %s301 = scalar_select %p300, %s23, 0
      %s302 = sadd.s32 %s301, %s299
      %s303 = smul.addr %s302, 4
      %s304 = scalar_lea.vmem %s7, %s303
      %v305 = vld [vmem:[%s297] sm:$0xff]
      %v306 = vld [vmem:[%s1] sm:$0xff]
      %v307 = vld [vmem:[%s2] sm:$0xff]
      %309 = vset.pattern.permute.xlu0 0
      %310 = vperm.xlu0 %309, %v307
      %v311 = vpop.permute.xlu0 %310
      %vm313 = vcmask 64512
      %v315 = vsel %vm313, %v306, 0
      %317 = vmatprep.subr.mxu0 0.0
      %318 = vmatpush1.msra.mxu0 %v305
      %319 = vmatprep.subr.mxu0 0.0
      %320 = vmatpush1.msra.mxu0 0.0
      %321 = vmatprep.subr.mxu0 0.0
      %322 = vmatpush1.msra.mxu0 0.0
      %323 = vmatprep.subr.mxu0 0.0
      %324 = vmatpush1.msra.mxu0 0.0
      %325 = vmatprep.subr.mxu0 0.0
      %326 = vmatpush1.msra.mxu0 0.0
      %327 = vmatprep.subr.mxu0 0.0
      %328 = vmatpush1.msra.mxu0 0.0
      %329 = vmatprep.subr.mxu0 0.0
      %330 = vmatpush1.msra.mxu0 0.0
      %331 = vmatprep.subr.mxu0 0.0
      %332 = vmatpush1.msra.mxu0 0.0
      %333 = vmatprep.subr.mxu0 0.0
      %334 = vmatpush1.msra.mxu0 0.0
      %335 = vmatprep.subr.mxu0 0.0
      %336 = vmatpush1.msra.mxu0 0.0
      %337 = vmatprep.subr.mxu0 0.0
      %338 = vmatpush1.msra.mxu0 0.0
      %339 = vmatprep.subr.mxu0 0.0
      %340 = vmatpush1.msra.mxu0 0.0
      %341 = vmatprep.subr.mxu0 0.0
      %342 = vmatpush1.msra.mxu0 0.0
      %343 = vmatprep.subr.mxu0 0.0
      %344 = vmatpush1.msra.mxu0 0.0
      %345 = vmatprep.subr.mxu0 0.0
      %346 = vmatpush1.msra.mxu0 0.0
      %347 = vmatprep.subr.mxu0 0.0
      %348 = vmatpush1.msra.mxu0 0.0
      %349 = vmatprep.subr.mxu0 0.0
      %350 = vmatpush1.msra.mxu0 0.0
      %351 = vmatprep.subr.mxu0 0.0
      %352 = vmatpush1.msra.mxu0 0.0
      %353 = vmatprep.subr.mxu0 0.0
      %354 = vmatpush1.msra.mxu0 0.0
      %355 = vmatprep.subr.mxu0 0.0
      %356 = vmatpush1.msra.mxu0 0.0
      %357 = vmatprep.subr.mxu0 0.0
      %358 = vmatpush1.msra.mxu0 0.0
      %359 = vmatprep.subr.mxu0 0.0
      %360 = vmatpush1.msra.mxu0 0.0
      %361 = vmatprep.subr.mxu0 0.0
      %362 = vmatpush1.msra.mxu0 0.0
      %363 = vmatprep.subr.mxu0 0.0
      %364 = vmatpush1.msra.mxu0 0.0
      %365 = vmatprep.subr.mxu0 0.0
      %366 = vmatpush1.msra.mxu0 0.0
      %367 = vmatprep.subr.mxu0 0.0
      %368 = vmatpush1.msra.mxu0 0.0
      %369 = vmatprep.subr.mxu0 0.0
      %370 = vmatpush1.msra.mxu0 0.0
      %371 = vmatprep.subr.mxu0 0.0
      %372 = vmatpush1.msra.mxu0 0.0
      %373 = vmatprep.subr.mxu0 0.0
      %374 = vmatpush1.msra.mxu0 0.0
      %375 = vmatprep.subr.mxu0 0.0
      %376 = vmatpush1.msra.mxu0 0.0
      %377 = vmatprep.subr.mxu0 0.0
      %378 = vmatpush1.msra.mxu0 0.0
      %379 = vmatprep.subr.mxu0 0.0
      %380 = vmatpush1.msra.mxu0 0.0
      %381 = vmatprep.mubr.f32.mxu0 0.0
      %382 = vmatmul.mubr.f32.gmra.mrb[0].mxu0 %v315
      %v383 = vpop.f32.mrb[0].mxu0
      %v384 = vadd.f32 %v311, %v383
      %v385 = vpop.f32.mrb[0].mxu0
      %386 = vdwg.mxu0
      %v387 = vmax.f32 %v384, 0.0
      %v388 = vld [vmem:[%s3] sm:$0xff]
      %v389 = vld [vmem:[%s4] sm:$0xff]
      %391 = vset.pattern.permute.xlu0 0
      %392 = vperm.xlu0 %391, %v389
      %v393 = vpop.permute.xlu0 %392
      %v396 = vsel %vm313, %v388, 0
      %398 = vmatprep.subr.mxu0 0.0
      %399 = vmatpush1.msra.mxu0 %v387
      %400 = vmatprep.subr.mxu0 0.0
      %401 = vmatpush1.msra.mxu0 0.0
      %402 = vmatprep.subr.mxu0 0.0
      %403 = vmatpush1.msra.mxu0 0.0
      %404 = vmatprep.subr.mxu0 0.0
      %405 = vmatpush1.msra.mxu0 0.0
      %406 = vmatprep.subr.mxu0 0.0
      %407 = vmatpush1.msra.mxu0 0.0
      %408 = vmatprep.subr.mxu0 0.0
      %409 = vmatpush1.msra.mxu0 0.0
      %410 = vmatprep.subr.mxu0 0.0
      %411 = vmatpush1.msra.mxu0 0.0
      %412 = vmatprep.subr.mxu0 0.0
      %413 = vmatpush1.msra.mxu0 0.0
      %414 = vmatprep.subr.mxu0 0.0
      %415 = vmatpush1.msra.mxu0 0.0
      %416 = vmatprep.subr.mxu0 0.0
      %417 = vmatpush1.msra.mxu0 0.0
      %418 = vmatprep.subr.mxu0 0.0
      %419 = vmatpush1.msra.mxu0 0.0
      %420 = vmatprep.subr.mxu0 0.0
      %421 = vmatpush1.msra.mxu0 0.0
      %422 = vmatprep.subr.mxu0 0.0
      %423 = vmatpush1.msra.mxu0 0.0
      %424 = vmatprep.subr.mxu0 0.0
      %425 = vmatpush1.msra.mxu0 0.0
      %426 = vmatprep.subr.mxu0 0.0
      %427 = vmatpush1.msra.mxu0 0.0
      %428 = vmatprep.subr.mxu0 0.0
      %429 = vmatpush1.msra.mxu0 0.0
      %430 = vmatprep.subr.mxu0 0.0
      %431 = vmatpush1.msra.mxu0 0.0
      %432 = vmatprep.subr.mxu0 0.0
      %433 = vmatpush1.msra.mxu0 0.0
      %434 = vmatprep.subr.mxu0 0.0
      %435 = vmatpush1.msra.mxu0 0.0
      %436 = vmatprep.subr.mxu0 0.0
      %437 = vmatpush1.msra.mxu0 0.0
      %438 = vmatprep.subr.mxu0 0.0
      %439 = vmatpush1.msra.mxu0 0.0
      %440 = vmatprep.subr.mxu0 0.0
      %441 = vmatpush1.msra.mxu0 0.0
      %442 = vmatprep.subr.mxu0 0.0
      %443 = vmatpush1.msra.mxu0 0.0
      %444 = vmatprep.subr.mxu0 0.0
      %445 = vmatpush1.msra.mxu0 0.0
      %446 = vmatprep.subr.mxu0 0.0
      %447 = vmatpush1.msra.mxu0 0.0
      %448 = vmatprep.subr.mxu0 0.0
      %449 = vmatpush1.msra.mxu0 0.0
      %450 = vmatprep.subr.mxu0 0.0
      %451 = vmatpush1.msra.mxu0 0.0
      %452 = vmatprep.subr.mxu0 0.0
      %453 = vmatpush1.msra.mxu0 0.0
      %454 = vmatprep.subr.mxu0 0.0
      %455 = vmatpush1.msra.mxu0 0.0
      %456 = vmatprep.subr.mxu0 0.0
      %457 = vmatpush1.msra.mxu0 0.0
      %458 = vmatprep.subr.mxu0 0.0
      %459 = vmatpush1.msra.mxu0 0.0
      %460 = vmatprep.subr.mxu0 0.0
      %461 = vmatpush1.msra.mxu0 0.0
      %462 = vmatprep.mubr.f32.mxu0 0.0
      %463 = vmatmul.mubr.f32.gmra.mrb[0].mxu0 %v396
      %v464 = vpop.f32.mrb[0].mxu0
      %v465 = vadd.f32 %v393, %v464
      %v466 = vpop.f32.mrb[0].mxu0
      %467 = vdwg.mxu0
      %v468 = vmax.f32 %v465, 0.0
      %v469 = vld [vmem:[%s5] sm:$0xf]
      %v470 = vld [vmem:[%s6] sm:$0xf]
      %472 = vset.pattern.permute.xlu0 0
      %473 = vperm.xlu0 %472, %v470
      %v474 = vpop.permute.xlu0 %473
      %v477 = vsel %vm313, %v469, 0
      %479 = vmatprep.subr.mxu0 0.0
      %480 = vmatpush1.msra.mxu0 %v468
      %481 = vmatprep.subr.mxu0 0.0
      %482 = vmatpush1.msra.mxu0 0.0
      %483 = vmatprep.subr.mxu0 0.0
      %484 = vmatpush1.msra.mxu0 0.0
      %485 = vmatprep.subr.mxu0 0.0
      %486 = vmatpush1.msra.mxu0 0.0
      %487 = vmatprep.subr.mxu0 0.0
      %488 = vmatpush1.msra.mxu0 0.0
      %489 = vmatprep.subr.mxu0 0.0
      %490 = vmatpush1.msra.mxu0 0.0
      %491 = vmatprep.subr.mxu0 0.0
      %492 = vmatpush1.msra.mxu0 0.0
      %493 = vmatprep.subr.mxu0 0.0
      %494 = vmatpush1.msra.mxu0 0.0
      %495 = vmatprep.subr.mxu0 0.0
      %496 = vmatpush1.msra.mxu0 0.0
      %497 = vmatprep.subr.mxu0 0.0
      %498 = vmatpush1.msra.mxu0 0.0
      %499 = vmatprep.subr.mxu0 0.0
      %500 = vmatpush1.msra.mxu0 0.0
      %501 = vmatprep.subr.mxu0 0.0
      %502 = vmatpush1.msra.mxu0 0.0
      %503 = vmatprep.subr.mxu0 0.0
      %504 = vmatpush1.msra.mxu0 0.0
      %505 = vmatprep.subr.mxu0 0.0
      %506 = vmatpush1.msra.mxu0 0.0
      %507 = vmatprep.subr.mxu0 0.0
      %508 = vmatpush1.msra.mxu0 0.0
      %509 = vmatprep.subr.mxu0 0.0
      %510 = vmatpush1.msra.mxu0 0.0
      %511 = vmatprep.subr.mxu0 0.0
      %512 = vmatpush1.msra.mxu0 0.0
      %513 = vmatprep.subr.mxu0 0.0
      %514 = vmatpush1.msra.mxu0 0.0
      %515 = vmatprep.subr.mxu0 0.0
      %516 = vmatpush1.msra.mxu0 0.0
      %517 = vmatprep.subr.mxu0 0.0
      %518 = vmatpush1.msra.mxu0 0.0
      %519 = vmatprep.subr.mxu0 0.0
      %520 = vmatpush1.msra.mxu0 0.0
      %521 = vmatprep.subr.mxu0 0.0
      %522 = vmatpush1.msra.mxu0 0.0
      %523 = vmatprep.subr.mxu0 0.0
      %524 = vmatpush1.msra.mxu0 0.0
      %525 = vmatprep.subr.mxu0 0.0
      %526 = vmatpush1.msra.mxu0 0.0
      %527 = vmatprep.subr.mxu0 0.0
      %528 = vmatpush1.msra.mxu0 0.0
      %529 = vmatprep.subr.mxu0 0.0
      %530 = vmatpush1.msra.mxu0 0.0
      %531 = vmatprep.subr.mxu0 0.0
      %532 = vmatpush1.msra.mxu0 0.0
      %533 = vmatprep.subr.mxu0 0.0
      %534 = vmatpush1.msra.mxu0 0.0
      %535 = vmatprep.subr.mxu0 0.0
      %536 = vmatpush1.msra.mxu0 0.0
      %537 = vmatprep.subr.mxu0 0.0
      %538 = vmatpush1.msra.mxu0 0.0
      %539 = vmatprep.subr.mxu0 0.0
      %540 = vmatpush1.msra.mxu0 0.0
      %541 = vmatprep.subr.mxu0 0.0
      %542 = vmatpush1.msra.mxu0 0.0
      %543 = vmatprep.mubr.f32.mxu0 0.0
      %544 = vmatmul.mubr.f32.gmra.mrb[0].mxu0 %v477
      %v545 = vpop.f32.mrb[0].mxu0
      %v546 = vadd.f32 %v474, %v545
      %v547 = vpop.f32.mrb[0].mxu0
      %548 = vdwg.mxu0
      %vm549 = vcmask 519168
      %550 = vst.msk [vmem:[%s304] sm:$0xf] %vm549, %v546
      %p551 = scmp.lt.s32.totalorder %s22, 1
      %s552 = scalar_select %p551, %s22, 1
      %p553 = scmp.lt.s32.totalorder %s23, 0
      %s554 = scalar_select %p553, %s23, 0
      %s555 = sadd.s32 %s554, %s552
      %s556 = smul.addr %s555, 4
      %s557 = scalar_lea.vmem %s7, %s556
      // Predicated region
      $region49: #{nse1_forward.3} parent=47 // pred_check
        %p558 = pneg %p204
      $region50: #{nse1_forward.3} parent=47 // pred_check_branch
        %560 = sbr.rel (%p558) target = $region52
      $region51: #{nse1_forward.3} parent=47 // pred_region
        _
      $region52: #{nse1_forward.3} parent=47 // pred_fallthru
        _
    $region48: #{nse1_forward.3} parent=5 // pred_fallthru
      _
    %p561 = scmp.le.s32.totalorder 2, %s13
    // Predicated region
    $region53: #{nse1_forward.3} parent=5 // pred_check
      %p562 = pneg %p561
    $region54: #{nse1_forward.3} parent=5 // pred_check_branch
      %564 = sbr.rel (%p562) target = $region56
    $region55: #{nse1_forward.3} parent=5 // pred_region
      %s565 = ssub.s32 %s13, 2
      // Predicated region
      $region57: #{nse1_forward.3} parent=55 // pred_check
        %p566 = pneg %p210
      $region58: #{nse1_forward.3} parent=55 // pred_check_branch
        %568 = sbr.rel (%p566) target = $region60
      $region59: #{nse1_forward.3} parent=55 // pred_region
        %p569 = scmp.lt.s32.totalorder %s24, 1
        %s570 = scalar_select %p569, %s24, 1
        %p571 = scmp.lt.s32.totalorder %s25, 0
        %s572 = scalar_select %p571, %s25, 0
        %s573 = sadd.s32 %s572, %s570
        %s574 = smul.addr %s573, 4
        %s575 = scalar_lea.vmem %s7, %s574
      $region60: #{nse1_forward.3} parent=55 // pred_fallthru
        _
    $region56: #{nse1_forward.3} parent=5 // pred_fallthru
      _
  $region6: #{nse1_forward.3} parent=0 // loop_footer
    %s17 = sadd.s32 1, %s13
  $region7: #{nse1_forward.3} parent=0 // loop_footer_branch
    %12 = sbr.rel target = $region3
  $region8: #{nse1_forward.3} parent=0 // loop_exit
    _

// kernel: nse1_forward.5
$region0: #{nse1_forward.5}
  #allocation0 [shape = 'u32[]', space=smem, size = 0x4, offset = 0x4, fixed_abs, tag = 'smem constant byte address 0x4 - core index']
  #allocation1 [shape = 'u32[144,128]{1,0:T(1,128)}', space=vmem, size = 0x12000, scoped, tag = 'internal scratch']
  %s0 = inlined_call_operand.vmem [shape: f32[2,4,8,8], index: 0, kind: input, shape index: {}]
  %s1 = inlined_call_operand.vmem [shape: f32[16,8], index: 1, kind: input, shape index: {}]
  %s2 = inlined_call_operand.vmem [shape: f32[8,16], index: 2, kind: input, shape index: {}]
  %s3 = inlined_call_operand.vmem [shape: f32[2,4,16,16], index: 3, kind: input, shape index: {}]
  %s4 = inlined_call_operand.vmem [shape: f32[16,16], index: 4, kind: input, shape index: {}]
  %s5 = inlined_call_operand.vmem [shape: f32[16,16], index: 5, kind: input, shape index: {}]
  %s6 = inlined_call_operand.hbm [shape: f32[2,4,16,16], index: 6, kind: output, shape index: {}]
  %s7 = sld [smem:[#allocation0]]
  $region57: #{nse1_forward.5} parent=0
    _
  %s9 = ssub.s32 1, %s7
  %s10 = scalar_select 0, %s9, %s7
  $region1: #{nse1_forward.5} parent=0
    #allocation2 [shape = 'u8[65536]{0}', space=vmem, size = 0x10000, scoped, tag = 'output window, operand 0']
    #allocation3 [shape = 's32[2]{0}', space=sflag, size = 0x8, scoped, tag = 'scoped memory for nse1_forward.5']
    %11 = vsyncpa [#allocation3], 0
    %s12 = scalar_lea.sflag [#allocation3], 1
    %13 = vsyncpa %s12, 0
    loop: start=0, step=1, limit=4
    $region2: #{nse1_forward.5} parent=1 // loop_pre_header
      _
    $region3: #{nse1_forward.5} parent=1 // loop_header
      %s15 = sphi 0, %s19
      %p16 = scmp.ge.s32.totalorder %s15, 4
      %s25 = sphi 0, %s27
      %s28 = sphi 0, %s25
      %s29 = sphi 0, %s28
      %s45 = sphi 0, %s29
      %s49 = sphi 0, %s49
      %s51 = sphi 0, %s49
      %s52 = sphi 0, %s51
      %s66 = sphi 0, %s52
      %s70 = sphi 0, %s70
      %s72 = sphi 0, %s70
      %s73 = sphi 0, %s72
      %s87 = sphi 0, %s73
      %s93 = sphi 0, %s95
      %s96 = sphi 0, %s93
      %s97 = sphi 0, %s96
      %s113 = sphi 0, %s97
      %s117 = sphi 0, %s117
      %s119 = sphi 0, %s117
      %s120 = sphi 0, %s119
      %s134 = sphi 0, %s120
      %s138 = sphi 0, %s138
      %s140 = sphi 0, %s138
      %s141 = sphi 0, %s140
      %s155 = sphi 0, %s141
      %s161 = sphi 0, %s163
      %s164 = sphi 0, %s161
      %s165 = sphi 0, %s164
      %s181 = sphi 0, %s165
    $region4: #{nse1_forward.5} parent=1 // loop_header_branch
      %18 = sbr.rel (%p16) target = $region8
    $region5: #{nse1_forward.5} parent=1 // loop_body
      %s20 = ssub.s32 %s15, 1
      %s21 = ssub.s32 %s15, 2
      %s22 = sadd.s32 %s15, 1
      %s23 = ssub.s32 %s15, %s22
      %p24 = scmp.eq.s32.totalorder %s23, 0
      %s26 = sadd.s32 %s25, 1
      %s27 = scalar_select %p24, %s25, %s26
      %p30 = pneg %p24
      %p31 = scmp.eq.s32.totalorder %s15, 1
      %p32 = por %p30, %p31
      %p33 = scmp.ne.s32.totalorder %s25, %s28
      %p34 = scmp.eq.s32.totalorder %s15, 0
      %p35 = por %p33, %p34
      %p36 = scmp.ne.s32.totalorder %s25, %s28
      %p37 = scmp.eq.s32.totalorder %s20, 1
      %p38 = por %p36, %p37
      %p39 = scmp.ne.s32.totalorder %s28, %s29
      %p40 = scmp.eq.s32.totalorder %s20, 0
      %p41 = por %p39, %p40
      %p42 = scmp.ne.s32.totalorder %s28, %s29
      %p43 = scmp.eq.s32.totalorder %s21, 1
      %p44 = por %p42, %p43
      %p46 = scmp.ne.s32.totalorder %s29, %s45
      %p47 = scmp.eq.s32.totalorder %s21, 0
      %p48 = por %p46, %p47
      %s50 = sadd.s32 %s49, 1
      %p53 = scmp.eq.s32.totalorder %s15, 1
      %p54 = scmp.ne.s32.totalorder %s49, %s51
      %p55 = scmp.eq.s32.totalorder %s15, 0
      %p56 = por %p54, %p55
      %p57 = scmp.ne.s32.totalorder %s49, %s51
      %p58 = scmp.eq.s32.totalorder %s20, 1
      %p59 = por %p57, %p58
      %p60 = scmp.ne.s32.totalorder %s51, %s52
      %p61 = scmp.eq.s32.totalorder %s20, 0
      %p62 = por %p60, %p61
      %p63 = scmp.ne.s32.totalorder %s51, %s52
      %p64 = scmp.eq.s32.totalorder %s21, 1
      %p65 = por %p63, %p64
      %p67 = scmp.ne.s32.totalorder %s52, %s66
      %p68 = scmp.eq.s32.totalorder %s21, 0
      %p69 = por %p67, %p68
      %s71 = sadd.s32 %s70, 1
      %p74 = scmp.eq.s32.totalorder %s15, 1
      %p75 = scmp.ne.s32.totalorder %s70, %s72
      %p76 = scmp.eq.s32.totalorder %s15, 0
      %p77 = por %p75, %p76
      %p78 = scmp.ne.s32.totalorder %s70, %s72
      %p79 = scmp.eq.s32.totalorder %s20, 1
      %p80 = por %p78, %p79
      %p81 = scmp.ne.s32.totalorder %s72, %s73
      %p82 = scmp.eq.s32.totalorder %s20, 0
      %p83 = por %p81, %p82
      %p84 = scmp.ne.s32.totalorder %s72, %s73
      %p85 = scmp.eq.s32.totalorder %s21, 1
      %p86 = por %p84, %p85
      %p88 = scmp.ne.s32.totalorder %s73, %s87
      %p89 = scmp.eq.s32.totalorder %s21, 0
      %p90 = por %p88, %p89
      %s91 = ssub.s32 %s15, %s22
      %p92 = scmp.eq.s32.totalorder %s91, 0
      %s94 = sadd.s32 %s93, 1
      %s95 = scalar_select %p92, %s93, %s94
      %p98 = pneg %p92
      %p99 = scmp.eq.s32.totalorder %s15, 1
      %p100 = por %p98, %p99
      %p101 = scmp.ne.s32.totalorder %s93, %s96
      %p102 = scmp.eq.s32.totalorder %s15, 0
      %p103 = por %p101, %p102
      %p104 = scmp.ne.s32.totalorder %s93, %s96
      %p105 = scmp.eq.s32.totalorder %s20, 1
      %p106 = por %p104, %p105
      %p107 = scmp.ne.s32.totalorder %s96, %s97
      %p108 = scmp.eq.s32.totalorder %s20, 0
      %p109 = por %p107, %p108
      %p110 = scmp.ne.s32.totalorder %s96, %s97
      %p111 = scmp.eq.s32.totalorder %s21, 1
      %p112 = por %p110, %p111
      %p114 = scmp.ne.s32.totalorder %s97, %s113
      %p115 = scmp.eq.s32.totalorder %s21, 0
      %p116 = por %p114, %p115
      %s118 = sadd.s32 %s117, 1
      %p121 = scmp.eq.s32.totalorder %s15, 1
      %p122 = scmp.ne.s32.totalorder %s117, %s119
      %p123 = scmp.eq.s32.totalorder %s15, 0
      %p124 = por %p122, %p123
      %p125 = scmp.ne.s32.totalorder %s117, %s119
      %p126 = scmp.eq.s32.totalorder %s20, 1
      %p127 = por %p125, %p126
      %p128 = scmp.ne.s32.totalorder %s119, %s120
      %p129 = scmp.eq.s32.totalorder %s20, 0
      %p130 = por %p128, %p129
      %p131 = scmp.ne.s32.totalorder %s119, %s120
      %p132 = scmp.eq.s32.totalorder %s21, 1
      %p133 = por %p131, %p132
      %p135 = scmp.ne.s32.totalorder %s120, %s134
      %p136 = scmp.eq.s32.totalorder %s21, 0
      %p137 = por %p135, %p136
      %s139 = sadd.s32 %s138, 1
      %p142 = scmp.eq.s32.totalorder %s15, 1
      %p143 = scmp.ne.s32.totalorder %s138, %s140
      %p144 = scmp.eq.s32.totalorder %s15, 0
      %p145 = por %p143, %p144
      %p146 = scmp.ne.s32.totalorder %s138, %s140
      %p147 = scmp.eq.s32.totalorder %s20, 1
      %p148 = por %p146, %p147
      %p149 = scmp.ne.s32.totalorder %s140, %s141
      %p150 = scmp.eq.s32.totalorder %s20, 0
      %p151 = por %p149, %p150
      %p152 = scmp.ne.s32.totalorder %s140, %s141
      %p153 = scmp.eq.s32.totalorder %s21, 1
      %p154 = por %p152, %p153
      %p156 = scmp.ne.s32.totalorder %s141, %s155
      %p157 = scmp.eq.s32.totalorder %s21, 0
      %p158 = por %p156, %p157
      %s159 = ssub.s32 %s15, %s22
      %p160 = scmp.eq.s32.totalorder %s159, 0
      %s162 = sadd.s32 %s161, 1
      %s163 = scalar_select %p160, %s161, %s162
      %p166 = pneg %p160
      %p167 = scmp.eq.s32.totalorder %s15, 1
      %p168 = por %p166, %p167
      %p169 = scmp.ne.s32.totalorder %s161, %s164
      %p170 = scmp.eq.s32.totalorder %s15, 0
      %p171 = por %p169, %p170
      %p172 = scmp.ne.s32.totalorder %s161, %s164
      %p173 = scmp.eq.s32.totalorder %s20, 1
      %p174 = por %p172, %p173
      %p175 = scmp.ne.s32.totalorder %s164, %s165
      %p176 = scmp.eq.s32.totalorder %s20, 0
      %p177 = por %p175, %p176
      %p178 = scmp.ne.s32.totalorder %s164, %s165
      %p179 = scmp.eq.s32.totalorder %s21, 1
      %p180 = por %p178, %p179
      %p182 = scmp.ne.s32.totalorder %s165, %s181
      %p183 = scmp.eq.s32.totalorder %s21, 0
      %p184 = por %p182, %p183
      %p185 = scmp.le.s32.totalorder 1, %s15
      %p186 = scmp.lt.s32.totalorder %s15, 3
      %p187 = pnand %p185, %p186
      %p188 = pneg %p187
      // Predicated region
      $region9: #{nse1_forward.5} parent=5 // pred_check
        _
      $region10: #{nse1_forward.5} parent=5 // pred_check_branch
        %190 = sbr.rel (%p187) target = $region12
      $region11: #{nse1_forward.5} parent=5 // pred_region
        %s191 = ssub.s32 %s15, 1
        // Predicated region
        $region13: #{nse1_forward.5} parent=11 // pred_check
          %p192 = pneg %p62
        $region14: #{nse1_forward.5} parent=11 // pred_check_branch
          %194 = sbr.rel (%p192) target = $region16
        $region15: #{nse1_forward.5} parent=11 // pred_region
          _
        $region16: #{nse1_forward.5} parent=11 // pred_fallthru
          _
        // Predicated region
        $region17: #{nse1_forward.5} parent=11 // pred_check
          %p195 = pneg %p83
        $region18: #{nse1_forward.5} parent=11 // pred_check_branch
          %197 = sbr.rel (%p195) target = $region20
        $region19: #{nse1_forward.5} parent=11 // pred_region
          _
        $region20: #{nse1_forward.5} parent=11 // pred_fallthru
          _
        // Predicated region
        $region21: #{nse1_forward.5} parent=11 // pred_check
          %p198 = pneg %p130
        $region22: #{nse1_forward.5} parent=11 // pred_check_branch
          %200 = sbr.rel (%p198) target = $region24
        $region23: #{nse1_forward.5} parent=11 // pred_region
          _
        $region24: #{nse1_forward.5} parent=11 // pred_fallthru
          _
        // Predicated region
        $region25: #{nse1_forward.5} parent=11 // pred_check
          %p201 = pneg %p151
        $region26: #{nse1_forward.5} parent=11 // pred_check_branch
          %203 = sbr.rel (%p201) target = $region28
        $region27: #{nse1_forward.5} parent=11 // pred_region
          _
        $region28: #{nse1_forward.5} parent=11 // pred_fallthru
          _
      $region12: #{nse1_forward.5} parent=5 // pred_fallthru
        _
      %p204 = scmp.lt.s32.totalorder %s15, 2
      // Predicated region
      $region29: #{nse1_forward.5} parent=5 // pred_check
        %p205 = pneg %p204
      $region30: #{nse1_forward.5} parent=5 // pred_check_branch
        %207 = sbr.rel (%p205) target = $region32
      $region31: #{nse1_forward.5} parent=5 // pred_region
        // Predicated region
        $region33: #{nse1_forward.5} parent=31 // pred_check
          %p208 = pneg %p35
        $region34: #{nse1_forward.5} parent=31 // pred_check_branch
          %210 = sbr.rel (%p208) target = $region36
        $region35: #{nse1_forward.5} parent=31 // pred_region
          %p211 = scmp.lt.s32.totalorder %s15, 1
          %s212 = scalar_select %p211, %s15, 1
          %s213 = smul.addr %s212, 4
          %s214 = smul.addr %s213, 8
          %s215 = scalar_lea.vmem %s0, %s214
        $region36: #{nse1_forward.5} parent=31 // pred_fallthru
          _
        // Predicated region
        $region37: #{nse1_forward.5} parent=31 // pred_check
          %p216 = pneg %p103
        $region38: #{nse1_forward.5} parent=31 // pred_check_branch
          %218 = sbr.rel (%p216) target = $region40
        $region39: #{nse1_forward.5} parent=31 // pred_region
          %p219 = scmp.lt.s32.totalorder %s15, 1
          %s220 = scalar_select %p219, %s15, 1
          %s221 = smul.addr %s220, 8
          %s222 = smul.addr %s221, 8
          %s223 = scalar_lea.vmem %s3, %s222
        $region40: #{nse1_forward.5} parent=31 // pred_fallthru
          _
      $region32: #{nse1_forward.5} parent=5 // pred_fallthru
        _
      %p224 = scmp.le.s32.totalorder 1, %s15
      %p225 = scmp.lt.s32.totalorder %s15, 3
      %p226 = pnand %p224, %p225
      %p227 = pneg %p226
      // Predicated region
      $region41: #{nse1_forward.5} parent=5 // pred_check
        _
      $region42: #{nse1_forward.5} parent=5 // pred_check_branch
        %229 = sbr.rel (%p226) target = $region44
      $region43: #{nse1_forward.5} parent=5 // pred_region
        %s230 = ssub.s32 %s15, 1
        %p231 = scmp.lt.s32.totalorder %s20, 1
        %s232 = scalar_select %p231, %s20, 1
        %s233 = smul.addr %s232, 4
        %s234 = smul.addr %s233, 8
        %s235 = scalar_lea.vmem %s0, %s234
        %p236 = pneg %p41
        %p237 = pneg %p38
        %p238 = pneg %p62
        %p239 = pneg %p59
        %p240 = pneg %p83
        %p241 = pneg %p80
        %p242 = scmp.lt.s32.totalorder %s20, 1
        %s243 = scalar_select %p242, %s20, 1
        %s244 = smul.addr %s243, 8
        %s245 = smul.addr %s244, 8
        %s246 = scalar_lea.vmem %s3, %s245
        %p247 = pneg %p109
        %p248 = pneg %p106
        %p249 = pneg %p130
        %p250 = pneg %p127
        %p251 = pneg %p151
        %p252 = pneg %p148
        %p253 = pneg %p177
        %p254 = pneg %p174
        %s255 = sand.u32 %s164, 1
        %s256 = scalar_lea.sflag [#allocation3], %s255
        %s257 = sand.u32 %s164, 1
        %s258 = smul.addr %s257, 64
        %s259 = scalar_lea.vmem [#allocation2], %s258
        %p260 = scmp.lt.s32.totalorder %s20, 1
        %s261 = scalar_select %p260, %s20, 1
        %s262 = smul.addr %s261, 4
        %s263 = smul.addr %s262, 8
        %s264 = scalar_lea.vmem %s0, %s263
        %p265 = scmp.lt.s32.totalorder %s20, 1
        %s266 = scalar_select %p265, %s20, 1
        %s267 = smul.addr %s266, 8
        %s268 = smul.addr %s267, 8
        %s269 = scalar_lea.vmem %s3, %s268
        %v270 = vld [vmem:[%s264] sm:$0xff]
        %v271 = vld [vmem:[%s2] sm:$0xff]
        %vm272 = vcmask 64512
        %v274 = vsel %vm272, %v270, 0
        %276 = vmatprep.subr.mxu0 0.0
        %277 = vmatpush1.msra.mxu0 %v271
        %278 = vmatprep.subr.mxu0 0.0
        %279 = vmatpush1.msra.mxu0 0.0
        %280 = vmatprep.subr.mxu0 0.0
        %281 = vmatpush1.msra.mxu0 0.0
        %282 = vmatprep.subr.mxu0 0.0
        %283 = vmatpush1.msra.mxu0 0.0
        %284 = vmatprep.subr.mxu0 0.0
        %285 = vmatpush1.msra.mxu0 0.0
        %286 = vmatprep.subr.mxu0 0.0
        %287 = vmatpush1.msra.mxu0 0.0
        %288 = vmatprep.subr.mxu0 0.0
        %289 = vmatpush1.msra.mxu0 0.0
        %290 = vmatprep.subr.mxu0 0.0
        %291 = vmatpush1.msra.mxu0 0.0
        %292 = vmatprep.subr.mxu0 0.0
        %293 = vmatpush1.msra.mxu0 0.0
        %294 = vmatprep.subr.mxu0 0.0
        %295 = vmatpush1.msra.mxu0 0.0
        %296 = vmatprep.subr.mxu0 0.0
        %297 = vmatpush1.msra.mxu0 0.0
        %298 = vmatprep.subr.mxu0 0.0
        %299 = vmatpush1.msra.mxu0 0.0
        %300 = vmatprep.subr.mxu0 0.0
        %301 = vmatpush1.msra.mxu0 0.0
        %302 = vmatprep.subr.mxu0 0.0
        %303 = vmatpush1.msra.mxu0 0.0
        %304 = vmatprep.subr.mxu0 0.0
        %305 = vmatpush1.msra.mxu0 0.0
        %306 = vmatprep.subr.mxu0 0.0
        %307 = vmatpush1.msra.mxu0 0.0
        %308 = vmatprep.subr.mxu0 0.0
        %309 = vmatpush1.msra.mxu0 0.0
        %310 = vmatprep.subr.mxu0 0.0
        %311 = vmatpush1.msra.mxu0 0.0
        %312 = vmatprep.subr.mxu0 0.0
        %313 = vmatpush1.msra.mxu0 0.0
        %314 = vmatprep.subr.mxu0 0.0
        %315 = vmatpush1.msra.mxu0 0.0
        %316 = vmatprep.subr.mxu0 0.0
        %317 = vmatpush1.msra.mxu0 0.0
        %318 = vmatprep.subr.mxu0 0.0
        %319 = vmatpush1.msra.mxu0 0.0
        %320 = vmatprep.subr.mxu0 0.0
        %321 = vmatpush1.msra.mxu0 0.0
        %322 = vmatprep.subr.mxu0 0.0
        %323 = vmatpush1.msra.mxu0 0.0
        %324 = vmatprep.subr.mxu0 0.0
        %325 = vmatpush1.msra.mxu0 0.0
        %326 = vmatprep.subr.mxu0 0.0
        %327 = vmatpush1.msra.mxu0 0.0
        %328 = vmatprep.subr.mxu0 0.0
        %329 = vmatpush1.msra.mxu0 0.0
        %330 = vmatprep.subr.mxu0 0.0
        %331 = vmatpush1.msra.mxu0 0.0
        %332 = vmatprep.subr.mxu0 0.0
        %333 = vmatpush1.msra.mxu0 0.0
        %334 = vmatprep.subr.mxu0 0.0
        %335 = vmatpush1.msra.mxu0 0.0
        %336 = vmatprep.subr.mxu0 0.0
        %337 = vmatpush1.msra.mxu0 0.0
        %338 = vmatprep.subr.mxu0 0.0
        %339 = vmatpush1.msra.mxu0 0.0
        %340 = vmatprep.mubr.f32.mxu0 0.0
        %341 = vmatmul.mubr.f32.gmra.mrb[0].mxu0 %v274
        %v342 = vpop.f32.mrb[0].mxu0
        %v343 = vadd.f32 0.0, %v342
        %v344 = vpop.f32.mrb[0].mxu0
        %345 = vdwg.mxu0
        %v346 = vld [vmem:[%s1] sm:$0xff]
        %v347 = vld [vmem:[%s1 + $0x8] sm:$0xff]
        %v348 = vld [vmem:[%s269] sm:$0xff]
        %v349 = vld [vmem:[%s269 + $0x8] sm:$0xff]
        %v350 = vld [vmem:[%s5] sm:$0xff]
        %v351 = vld [vmem:[%s5 + $0x8] sm:$0xff]
        %vm352 = vcmask 130048
        %v354 = vsel %vm352, %v348, 0
        %v357 = vsel %vm352, %v349, 0
        %359 = vmatprep.subr.mxu0 0.0
        %360 = vmatpush1.msra.mxu0 %v350
        %361 = vmatprep.subr.mxu0 0.0
        %362 = vmatpush1.msra.mxu0 %v351
        %363 = vmatprep.subr.mxu0 0.0
        %364 = vmatpush1.msra.mxu0 0.0
        %365 = vmatprep.subr.mxu0 0.0
        %366 = vmatpush1.msra.mxu0 0.0
        %367 = vmatprep.subr.mxu0 0.0
        %368 = vmatpush1.msra.mxu0 0.0
        %369 = vmatprep.subr.mxu0 0.0
        %370 = vmatpush1.msra.mxu0 0.0
        %371 = vmatprep.subr.mxu0 0.0
        %372 = vmatpush1.msra.mxu0 0.0
        %373 = vmatprep.subr.mxu0 0.0
        %374 = vmatpush1.msra.mxu0 0.0
        %375 = vmatprep.subr.mxu0 0.0
        %376 = vmatpush1.msra.mxu0 0.0
        %377 = vmatprep.subr.mxu0 0.0
        %378 = vmatpush1.msra.mxu0 0.0
        %379 = vmatprep.subr.mxu0 0.0
        %380 = vmatpush1.msra.mxu0 0.0
        %381 = vmatprep.subr.mxu0 0.0
        %382 = vmatpush1.msra.mxu0 0.0
        %383 = vmatprep.subr.mxu0 0.0
        %384 = vmatpush1.msra.mxu0 0.0
        %385 = vmatprep.subr.mxu0 0.0
        %386 = vmatpush1.msra.mxu0 0.0
        %387 = vmatprep.subr.mxu0 0.0
        %388 = vmatpush1.msra.mxu0 0.0
        %389 = vmatprep.subr.mxu0 0.0
        %390 = vmatpush1.msra.mxu0 0.0
        %391 = vmatprep.subr.mxu0 0.0
        %392 = vmatpush1.msra.mxu0 0.0
        %393 = vmatprep.subr.mxu0 0.0
        %394 = vmatpush1.msra.mxu0 0.0
        %395 = vmatprep.subr.mxu0 0.0
        %396 = vmatpush1.msra.mxu0 0.0
        %397 = vmatprep.subr.mxu0 0.0
        %398 = vmatpush1.msra.mxu0 0.0
        %399 = vmatprep.subr.mxu0 0.0
        %400 = vmatpush1.msra.mxu0 0.0
        %401 = vmatprep.subr.mxu0 0.0
        %402 = vmatpush1.msra.mxu0 0.0
        %403 = vmatprep.subr.mxu0 0.0
        %404 = vmatpush1.msra.mxu0 0.0
        %405 = vmatprep.subr.mxu0 0.0
        %406 = vmatpush1.msra.mxu0 0.0
        %407 = vmatprep.subr.mxu0 0.0
        %408 = vmatpush1.msra.mxu0 0.0
        %409 = vmatprep.subr.mxu0 0.0
        %410 = vmatpush1.msra.mxu0 0.0
        %411 = vmatprep.subr.mxu0 0.0
        %412 = vmatpush1.msra.mxu0 0.0
        %413 = vmatprep.subr.mxu0 0.0
        %414 = vmatpush1.msra.mxu0 0.0
        %415 = vmatprep.subr.mxu0 0.0
        %416 = vmatpush1.msra.mxu0 0.0
        %417 = vmatprep.subr.mxu0 0.0
        %418 = vmatpush1.msra.mxu0 0.0
        %419 = vmatprep.subr.mxu0 0.0
        %420 = vmatpush1.msra.mxu0 0.0
        %421 = vmatprep.subr.mxu0 0.0
        %422 = vmatpush1.msra.mxu0 0.0
        %423 = vmatprep.mubr.f32.mxu0 0.0
        %424 = vmatmul.mubr.f32.gmra.mrb[0].mxu0 %v354
        %v425 = vpop.f32.mrb[0].mxu0
        %v426 = vadd.f32 0.0, %v425
        %v427 = vpop.f32.mrb[0].mxu0
        %428 = vmatprep.mubr.f32.mxu0 0.0
        %429 = vmatmul.mubr.f32.gmra.mrb[0].mxu0 %v357
        %v430 = vpop.f32.mrb[0].mxu0
        %v431 = vadd.f32 0.0, %v430
        %v432 = vpop.f32.mrb[0].mxu0
        %433 = vdwg.mxu0
        %v434 = vld [vmem:[%s4] sm:$0xff]
        %v435 = vld [vmem:[%s4 + $0x8] sm:$0xff]
        %v437 = vsel %vm352, %v434, 0
        %v440 = vsel %vm352, %v435, 0
        %442 = vmatprep.subr.mxu0 0.0
        %443 = vmatpush1.msra.mxu0 %v426
        %444 = vmatprep.subr.mxu0 0.0
        %445 = vmatpush1.msra.mxu0 %v431
        %446 = vmatprep.subr.mxu0 0.0
        %447 = vmatpush1.msra.mxu0 0.0
        %448 = vmatprep.subr.mxu0 0.0
        %449 = vmatpush1.msra.mxu0 0.0
        %450 = vmatprep.subr.mxu0 0.0
        %451 = vmatpush1.msra.mxu0 0.0
        %452 = vmatprep.subr.mxu0 0.0
        %453 = vmatpush1.msra.mxu0 0.0
        %454 = vmatprep.subr.mxu0 0.0
        %455 = vmatpush1.msra.mxu0 0.0
        %456 = vmatprep.subr.mxu0 0.0
        %457 = vmatpush1.msra.mxu0 0.0
        %458 = vmatprep.subr.mxu0 0.0
        %459 = vmatpush1.msra.mxu0 0.0
        %460 = vmatprep.subr.mxu0 0.0
        %461 = vmatpush1.msra.mxu0 0.0
        %462 = vmatprep.subr.mxu0 0.0
        %463 = vmatpush1.msra.mxu0 0.0
        %464 = vmatprep.subr.mxu0 0.0
        %465 = vmatpush1.msra.mxu0 0.0
        %466 = vmatprep.subr.mxu0 0.0
        %467 = vmatpush1.msra.mxu0 0.0
        %468 = vmatprep.subr.mxu0 0.0
        %469 = vmatpush1.msra.mxu0 0.0
        %470 = vmatprep.subr.mxu0 0.0
        %471 = vmatpush1.msra.mxu0 0.0
        %472 = vmatprep.subr.mxu0 0.0
        %473 = vmatpush1.msra.mxu0 0.0
        %474 = vmatprep.subr.mxu0 0.0
        %475 = vmatpush1.msra.mxu0 0.0
        %476 = vmatprep.subr.mxu0 0.0
        %477 = vmatpush1.msra.mxu0 0.0
        %478 = vmatprep.subr.mxu0 0.0
        %479 = vmatpush1.msra.mxu0 0.0
        %480 = vmatprep.subr.mxu0 0.0
        %481 = vmatpush1.msra.mxu0 0.0
        %482 = vmatprep.subr.mxu0 0.0
        %483 = vmatpush1.msra.mxu0 0.0
        %484 = vmatprep.subr.mxu0 0.0
        %485 = vmatpush1.msra.mxu0 0.0
        %486 = vmatprep.subr.mxu0 0.0
        %487 = vmatpush1.msra.mxu0 0.0
        %488 = vmatprep.subr.mxu0 0.0
        %489 = vmatpush1.msra.mxu0 0.0
        %490 = vmatprep.subr.mxu0 0.0
        %491 = vmatpush1.msra.mxu0 0.0
        %492 = vmatprep.subr.mxu0 0.0
        %493 = vmatpush1.msra.mxu0 0.0
        %494 = vmatprep.subr.mxu0 0.0
        %495 = vmatpush1.msra.mxu0 0.0
        %496 = vmatprep.subr.mxu0 0.0
        %497 = vmatpush1.msra.mxu0 0.0
        %498 = vmatprep.subr.mxu0 0.0
        %499 = vmatpush1.msra.mxu0 0.0
        %500 = vmatprep.subr.mxu0 0.0
        %501 = vmatpush1.msra.mxu0 0.0
        %502 = vmatprep.subr.mxu0 0.0
        %503 = vmatpush1.msra.mxu0 0.0
        %504 = vmatprep.subr.mxu0 0.0
        %505 = vmatpush1.msra.mxu0 0.0
        %506 = vmatprep.mubr.f32.mxu0 0.0
        %507 = vmatmul.mubr.f32.gmra.mrb[0].mxu0 %v437
        %v508 = vpop.f32.mrb[0].mxu0
        %v509 = vadd.f32 0.0, %v508
        %v510 = vpop.f32.mrb[0].mxu0
        %511 = vmatprep.mubr.f32.mxu0 0.0
        %512 = vmatmul.mubr.f32.gmra.mrb[0].mxu0 %v440
        %v513 = vpop.f32.mrb[0].mxu0
        %v514 = vadd.f32 0.0, %v513
        %v515 = vpop.f32.mrb[0].mxu0
        %516 = vdwg.mxu0
        %v518 = vsel %vm272, %v346, 0
        %v521 = vsel %vm272, %v347, 0
        %523 = vmatprep.subr.mxu0 0.0
        %524 = vmatpush1.msra.mxu0 %v343
        %525 = vmatprep.subr.mxu0 0.0
        %526 = vmatpush1.msra.mxu0 0.0
        %527 = vmatprep.subr.mxu0 0.0
        %528 = vmatpush1.msra.mxu0 0.0
        %529 = vmatprep.subr.mxu0 0.0
        %530 = vmatpush1.msra.mxu0 0.0
        %531 = vmatprep.subr.mxu0 0.0
        %532 = vmatpush1.msra.mxu0 0.0
        %533 = vmatprep.subr.mxu0 0.0
        %534 = vmatpush1.msra.mxu0 0.0
        %535 = vmatprep.subr.mxu0 0.0
        %536 = vmatpush1.msra.mxu0 0.0
        %537 = vmatprep.subr.mxu0 0.0
        %538 = vmatpush1.msra.mxu0 0.0
        %539 = vmatprep.subr.mxu0 0.0
        %540 = vmatpush1.msra.mxu0 0.0
        %541 = vmatprep.subr.mxu0 0.0
        %542 = vmatpush1.msra.mxu0 0.0
        %543 = vmatprep.subr.mxu0 0.0
        %544 = vmatpush1.msra.mxu0 0.0
        %545 = vmatprep.subr.mxu0 0.0
        %546 = vmatpush1.msra.mxu0 0.0
        %547 = vmatprep.subr.mxu0 0.0
        %548 = vmatpush1.msra.mxu0 0.0
        %549 = vmatprep.subr.mxu0 0.0
        %550 = vmatpush1.msra.mxu0 0.0
        %551 = vmatprep.subr.mxu0 0.0
        %552 = vmatpush1.msra.mxu0 0.0
        %553 = vmatprep.subr.mxu0 0.0
        %554 = vmatpush1.msra.mxu0 0.0
        %555 = vmatprep.subr.mxu0 0.0
        %556 = vmatpush1.msra.mxu0 0.0
        %557 = vmatprep.subr.mxu0 0.0
        %558 = vmatpush1.msra.mxu0 0.0
        %559 = vmatprep.subr.mxu0 0.0
        %560 = vmatpush1.msra.mxu0 0.0
        %561 = vmatprep.subr.mxu0 0.0
        %562 = vmatpush1.msra.mxu0 0.0
        %563 = vmatprep.subr.mxu0 0.0
        %564 = vmatpush1.msra.mxu0 0.0
        %565 = vmatprep.subr.mxu0 0.0
        %566 = vmatpush1.msra.mxu0 0.0
        %567 = vmatprep.subr.mxu0 0.0
        %568 = vmatpush1.msra.mxu0 0.0
        %569 = vmatprep.subr.mxu0 0.0
        %570 = vmatpush1.msra.mxu0 0.0
        %571 = vmatprep.subr.mxu0 0.0
        %572 = vmatpush1.msra.mxu0 0.0
        %573 = vmatprep.subr.mxu0 0.0
        %574 = vmatpush1.msra.mxu0 0.0
        %575 = vmatprep.subr.mxu0 0.0
        %576 = vmatpush1.msra.mxu0 0.0
        %577 = vmatprep.subr.mxu0 0.0
        %578 = vmatpush1.msra.mxu0 0.0
        %579 = vmatprep.subr.mxu0 0.0
        %580 = vmatpush1.msra.mxu0 0.0
        %581 = vmatprep.subr.mxu0 0.0
        %582 = vmatpush1.msra.mxu0 0.0
        %583 = vmatprep.subr.mxu0 0.0
        %584 = vmatpush1.msra.mxu0 0.0
        %585 = vmatprep.subr.mxu0 0.0
        %586 = vmatpush1.msra.mxu0 0.0
        %587 = vmatprep.mubr.f32.mxu0 0.0
        %588 = vmatmul.mubr.f32.gmra.mrb[0].mxu0 %v518
        %v589 = vpop.f32.mrb[0].mxu0
        %v590 = vadd.f32 %v509, %v589
        %v591 = vpop.f32.mrb[0].mxu0
        %592 = vmatprep.mubr.f32.mxu0 0.0
        %593 = vmatmul.mubr.f32.gmra.mrb[0].mxu0 %v521
        %v594 = vpop.f32.mrb[0].mxu0
        %v595 = vadd.f32 %v514, %v594
        %v596 = vpop.f32.mrb[0].mxu0
        %597 = vdwg.mxu0
        %598 = vst.msk [vmem:[%s259] sm:$0xff] %vm352, %v590
        %599 = vst.msk [vmem:[%s259 + $0x8] sm:$0xff] %vm352, %v595
        %s600 = scalar_lea.vmem %s264, 8
        %v601 = vld [vmem:[%s600] sm:$0xff]
        %v602 = vld [vmem:[%s2] sm:$0xff]
        %v604 = vsel %vm272, %v601, 0
        %606 = vmatprep.subr.mxu0 0.0
        %607 = vmatpush1.msra.mxu0 %v602
        %608 = vmatprep.subr.mxu0 0.0
        %609 = vmatpush1.msra.mxu0 0.0
        %610 = vmatprep.subr.mxu0 0.0
        %611 = vmatpush1.msra.mxu0 0.0
        %612 = vmatprep.subr.mxu0 0.0
        %613 = vmatpush1.msra.mxu0 0.0
        %614 = vmatprep.subr.mxu0 0.0
        %615 = vmatpush1.msra.mxu0 0.0
        %616 = vmatprep.subr.mxu0 0.0
        %617 = vmatpush1.msra.mxu0 0.0
        %618 = vmatprep.subr.mxu0 0.0
        %619 = vmatpush1.msra.mxu0 0.0
        %620 = vmatprep.subr.mxu0 0.0
        %621 = vmatpush1.msra.mxu0 0.0
        %622 = vmatprep.subr.mxu0 0.0
        %623 = vmatpush1.msra.mxu0 0.0
        %624 = vmatprep.subr.mxu0 0.0
        %625 = vmatpush1.msra.mxu0 0.0
        %626 = vmatprep.subr.mxu0 0.0
        %627 = vmatpush1.msra.mxu0 0.0
        %628 = vmatprep.subr.mxu0 0.0
        %629 = vmatpush1.msra.mxu0 0.0
        %630 = vmatprep.subr.mxu0 0.0
        %631 = vmatpush1.msra.mxu0 0.0
        %632 = vmatprep.subr.mxu0 0.0
        %633 = vmatpush1.msra.mxu0 0.0
        %634 = vmatprep.subr.mxu0 0.0
        %635 = vmatpush1.msra.mxu0 0.0
        %636 = vmatprep.subr.mxu0 0.0
        %637 = vmatpush1.msra.mxu0 0.0
        %638 = vmatprep.subr.mxu0 0.0
        %639 = vmatpush1.msra.mxu0 0.0
        %640 = vmatprep.subr.mxu0 0.0
        %641 = vmatpush1.msra.mxu0 0.0
        %642 = vmatprep.subr.mxu0 0.0
        %643 = vmatpush1.msra.mxu0 0.0
        %644 = vmatprep.subr.mxu0 0.0
        %645 = vmatpush1.msra.mxu0 0.0
        %646 = vmatprep.subr.mxu0 0.0
        %647 = vmatpush1.msra.mxu0 0.0
        %648 = vmatprep.subr.mxu0 0.0
        %649 = vmatpush1.msra.mxu0 0.0
        %650 = vmatprep.subr.mxu0 0.0
        %651 = vmatpush1.msra.mxu0 0.0
        %652 = vmatprep.subr.mxu0 0.0
        %653 = vmatpush1.msra.mxu0 0.0
        %654 = vmatprep.subr.mxu0 0.0
        %655 = vmatpush1.msra.mxu0 0.0
        %656 = vmatprep.subr.mxu0 0.0
        %657 = vmatpush1.msra.mxu0 0.0
        %658 = vmatprep.subr.mxu0 0.0
        %659 = vmatpush1.msra.mxu0 0.0
        %660 = vmatprep.subr.mxu0 0.0
        %661 = vmatpush1.msra.mxu0 0.0
        %662 = vmatprep.subr.mxu0 0.0
        %663 = vmatpush1.msra.mxu0 0.0
        %664 = vmatprep.subr.mxu0 0.0
        %665 = vmatpush1.msra.mxu0 0.0
        %666 = vmatprep.subr.mxu0 0.0
        %667 = vmatpush1.msra.mxu0 0.0
        %668 = vmatprep.subr.mxu0 0.0
        %669 = vmatpush1.msra.mxu0 0.0
        %670 = vmatprep.mubr.f32.mxu0 0.0
        %671 = vmatmul.mubr.f32.gmra.mrb[0].mxu0 %v604
        %v672 = vpop.f32.mrb[0].mxu0
        %v673 = vadd.f32 0.0, %v672
        %v674 = vpop.f32.mrb[0].mxu0
        %675 = vdwg.mxu0
        %v676 = vld [vmem:[%s1] sm:$0xff]
        %v677 = vld [vmem:[%s1 + $0x8] sm:$0xff]
        %s678 = scalar_lea.vmem %s269, 16
        %v679 = vld [vmem:[%s678] sm:$0xff]
        %v680 = vld [vmem:[%s678 + $0x8] sm:$0xff]
        %v681 = vld [vmem:[%s5] sm:$0xff]
        %v682 = vld [vmem:[%s5 + $0x8] sm:$0xff]
        %v684 = vsel %vm352, %v679, 0
        %v687 = vsel %vm352, %v680, 0
        %689 = vmatprep.subr.mxu0 0.0
        %690 = vmatpush1.msra.mxu0 %v681
        %691 = vmatprep.subr.mxu0 0.0
        %692 = vmatpush1.msra.mxu0 %v682
        %693 = vmatprep.subr.mxu0 0.0
        %694 = vmatpush1.msra.mxu0 0.0
        %695 = vmatprep.subr.mxu0 0.0
        %696 = vmatpush1.msra.mxu0 0.0
        %697 = vmatprep.subr.mxu0 0.0
        %698 = vmatpush1.msra.mxu0 0.0
        %699 = vmatprep.subr.mxu0 0.0
        %700 = vmatpush1.msra.mxu0 0.0
        %701 = vmatprep.subr.mxu0 0.0
        %702 = vmatpush1.msra.mxu0 0.0
        %703 = vmatprep.subr.mxu0 0.0
        %704 = vmatpush1.msra.mxu0 0.0
        %705 = vmatprep.subr.mxu0 0.0
        %706 = vmatpush1.msra.mxu0 0.0
        %707 = vmatprep.subr.mxu0 0.0
        %708 = vmatpush1.msra.mxu0 0.0
        %709 = vmatprep.subr.mxu0 0.0
        %710 = vmatpush1.msra.mxu0 0.0
        %711 = vmatprep.subr.mxu0 0.0
        %712 = vmatpush1.msra.mxu0 0.0
        %713 = vmatprep.subr.mxu0 0.0
        %714 = vmatpush1.msra.mxu0 0.0
        %715 = vmatprep.subr.mxu0 0.0
        %716 = vmatpush1.msra.mxu0 0.0
        %717 = vmatprep.subr.mxu0 0.0
        %718 = vmatpush1.msra.mxu0 0.0
        %719 = vmatprep.subr.mxu0 0.0
        %720 = vmatpush1.msra.mxu0 0.0
        %721 = vmatprep.subr.mxu0 0.0
        %722 = vmatpush1.msra.mxu0 0.0
        %723 = vmatprep.subr.mxu0 0.0
        %724 = vmatpush1.msra.mxu0 0.0
        %725 = vmatprep.subr.mxu0 0.0
        %726 = vmatpush1.msra.mxu0 0.0
        %727 = vmatprep.subr.mxu0 0.0
        %728 = vmatpush1.msra.mxu0 0.0
        %729 = vmatprep.subr.mxu0 0.0
        %730 = vmatpush1.msra.mxu0 0.0
        %731 = vmatprep.subr.mxu0 0.0
        %732 = vmatpush1.msra.mxu0 0.0
        %733 = vmatprep.subr.mxu0 0.0
        %734 = vmatpush1.msra.mxu0 0.0
        %735 = vmatprep.subr.mxu0 0.0
        %736 = vmatpush1.msra.mxu0 0.0
        %737 = vmatprep.subr.mxu0 0.0
        %738 = vmatpush1.msra.mxu0 0.0
        %739 = vmatprep.subr.mxu0 0.0
        %740 = vmatpush1.msra.mxu0 0.0
        %741 = vmatprep.subr.mxu0 0.0
        %742 = vmatpush1.msra.mxu0 0.0
        %743 = vmatprep.subr.mxu0 0.0
        %744 = vmatpush1.msra.mxu0 0.0
        %745 = vmatprep.subr.mxu0 0.0
        %746 = vmatpush1.msra.mxu0 0.0
        %747 = vmatprep.subr.mxu0 0.0
        %748 = vmatpush1.msra.mxu0 0.0
        %749 = vmatprep.subr.mxu0 0.0
        %750 = vmatpush1.msra.mxu0 0.0
        %751 = vmatprep.subr.mxu0 0.0
        %752 = vmatpush1.msra.mxu0 0.0
        %753 = vmatprep.mubr.f32.mxu0 0.0
        %754 = vmatmul.mubr.f32.gmra.mrb[0].mxu0 %v684
        %v755 = vpop.f32.mrb[0].mxu0
        %v756 = vadd.f32 0.0, %v755
        %v757 = vpop.f32.mrb[0].mxu0
        %758 = vmatprep.mubr.f32.mxu0 0.0
        %759 = vmatmul.mubr.f32.gmra.mrb[0].mxu0 %v687
        %v760 = vpop.f32.mrb[0].mxu0
        %v761 = vadd.f32 0.0, %v760
        %v762 = vpop.f32.mrb[0].mxu0
        %763 = vdwg.mxu0
        %v764 = vld [vmem:[%s4] sm:$0xff]
        %v765 = vld [vmem:[%s4 + $0x8] sm:$0xff]
        %v767 = vsel %vm352, %v764, 0
        %v770 = vsel %vm352, %v765, 0
        %772 = vmatprep.subr.mxu0 0.0
        %773 = vmatpush1.msra.mxu0 %v756
        %774 = vmatprep.subr.mxu0 0.0
        %775 = vmatpush1.msra.mxu0 %v761
        %776 = vmatprep.subr.mxu0 0.0
        %777 = vmatpush1.msra.mxu0 0.0
        %778 = vmatprep.subr.mxu0 0.0
        %779 = vmatpush1.msra.mxu0 0.0
        %780 = vmatprep.subr.mxu0 0.0
        %781 = vmatpush1.msra.mxu0 0.0
        %782 = vmatprep.subr.mxu0 0.0
        %783 = vmatpush1.msra.mxu0 0.0
        %784 = vmatprep.subr.mxu0 0.0
        %785 = vmatpush1.msra.mxu0 0.0
        %786 = vmatprep.subr.mxu0 0.0
        %787 = vmatpush1.msra.mxu0 0.0
        %788 = vmatprep.subr.mxu0 0.0
        %789 = vmatpush1.msra.mxu0 0.0
        %790 = vmatprep.subr.mxu0 0.0
        %791 = vmatpush1.msra.mxu0 0.0
        %792 = vmatprep.subr.mxu0 0.0
        %793 = vmatpush1.msra.mxu0 0.0
        %794 = vmatprep.subr.mxu0 0.0
        %795 = vmatpush1.msra.mxu0 0.0
        %796 = vmatprep.subr.mxu0 0.0
        %797 = vmatpush1.msra.mxu0 0.0
        %798 = vmatprep.subr.mxu0 0.0
        %799 = vmatpush1.msra.mxu0 0.0
        %800 = vmatprep.subr.mxu0 0.0
        %801 = vmatpush1.msra.mxu0 0.0
        %802 = vmatprep.subr.mxu0 0.0
        %803 = vmatpush1.msra.mxu0 0.0
        %804 = vmatprep.subr.mxu0 0.0
        %805 = vmatpush1.msra.mxu0 0.0
        %806 = vmatprep.subr.mxu0 0.0
        %807 = vmatpush1.msra.mxu0 0.0
        %808 = vmatprep.subr.mxu0 0.0
        %809 = vmatpush1.msra.mxu0 0.0
        %810 = vmatprep.subr.mxu0 0.0
        %811 = vmatpush1.msra.mxu0 0.0
        %812 = vmatprep.subr.mxu0 0.0
        %813 = vmatpush1.msra.mxu0 0.0
        %814 = vmatprep.subr.mxu0 0.0
        %815 = vmatpush1.msra.mxu0 0.0
        %816 = vmatprep.subr.mxu0 0.0
        %817 = vmatpush1.msra.mxu0 0.0
        %818 = vmatprep.subr.mxu0 0.0
        %819 = vmatpush1.msra.mxu0 0.0
        %820 = vmatprep.subr.mxu0 0.0
        %821 = vmatpush1.msra.mxu0 0.0
        %822 = vmatprep.subr.mxu0 0.0
        %823 = vmatpush1.msra.mxu0 0.0
        %824 = vmatprep.subr.mxu0 0.0
        %825 = vmatpush1.msra.mxu0 0.0
        %826 = vmatprep.subr.mxu0 0.0
        %827 = vmatpush1.msra.mxu0 0.0
        %828 = vmatprep.subr.mxu0 0.0
        %829 = vmatpush1.msra.mxu0 0.0
        %830 = vmatprep.subr.mxu0 0.0
        %831 = vmatpush1.msra.mxu0 0.0
        %832 = vmatprep.subr.mxu0 0.0
        %833 = vmatpush1.msra.mxu0 0.0
        %834 = vmatprep.subr.mxu0 0.0
        %835 = vmatpush1.msra.mxu0 0.0
        %836 = vmatprep.mubr.f32.mxu0 0.0
        %837 = vmatmul.mubr.f32.gmra.mrb[0].mxu0 %v767
        %v838 = vpop.f32.mrb[0].mxu0
        %v839 = vadd.f32 0.0, %v838
        %v840 = vpop.f32.mrb[0].mxu0
        %841 = vmatprep.mubr.f32.mxu0 0.0
        %842 = vmatmul.mubr.f32.gmra.mrb[0].mxu0 %v770
        %v843 = vpop.f32.mrb[0].mxu0
        %v844 = vadd.f32 0.0, %v843
        %v845 = vpop.f32.mrb[0].mxu0
        %846 = vdwg.mxu0
        %v848 = vsel %vm272, %v676, 0
        %v851 = vsel %vm272, %v677, 0
        %853 = vmatprep.subr.mxu0 0.0
        %854 = vmatpush1.msra.mxu0 %v673
        %855 = vmatprep.subr.mxu0 0.0
        %856 = vmatpush1.msra.mxu0 0.0
        %857 = vmatprep.subr.mxu0 0.0
        %858 = vmatpush1.msra.mxu0 0.0
        %859 = vmatprep.subr.mxu0 0.0
        %860 = vmatpush1.msra.mxu0 0.0
        %861 = vmatprep.subr.mxu0 0.0
        %862 = vmatpush1.msra.mxu0 0.0
        %863 = vmatprep.subr.mxu0 0.0
        %864 = vmatpush1.msra.mxu0 0.0
        %865 = vmatprep.subr.mxu0 0.0
        %866 = vmatpush1.msra.mxu0 0.0
        %867 = vmatprep.subr.mxu0 0.0
        %868 = vmatpush1.msra.mxu0 0.0
        %869 = vmatprep.subr.mxu0 0.0
        %870 = vmatpush1.msra.mxu0 0.0
        %871 = vmatprep.subr.mxu0 0.0
        %872 = vmatpush1.msra.mxu0 0.0
        %873 = vmatprep.subr.mxu0 0.0
        %874 = vmatpush1.msra.mxu0 0.0
        %875 = vmatprep.subr.mxu0 0.0
        %876 = vmatpush1.msra.mxu0 0.0
        %877 = vmatprep.subr.mxu0 0.0
        %878 = vmatpush1.msra.mxu0 0.0
        %879 = vmatprep.subr.mxu0 0.0
        %880 = vmatpush1.msra.mxu0 0.0
        %881 = vmatprep.subr.mxu0 0.0
        %882 = vmatpush1.msra.mxu0 0.0
        %883 = vmatprep.subr.mxu0 0.0
        %884 = vmatpush1.msra.mxu0 0.0
        %885 = vmatprep.subr.mxu0 0.0
        %886 = vmatpush1.msra.mxu0 0.0
        %887 = vmatprep.subr.mxu0 0.0
        %888 = vmatpush1.msra.mxu0 0.0
        %889 = vmatprep.subr.mxu0 0.0
        %890 = vmatpush1.msra.mxu0 0.0
        %891 = vmatprep.subr.mxu0 0.0
        %892 = vmatpush1.msra.mxu0 0.0
        %893 = vmatprep.subr.mxu0 0.0
        %894 = vmatpush1.msra.mxu0 0.0
        %895 = vmatprep.subr.mxu0 0.0
        %896 = vmatpush1.msra.mxu0 0.0
        %897 = vmatprep.subr.mxu0 0.0
        %898 = vmatpush1.msra.mxu0 0.0
        %899 = vmatprep.subr.mxu0 0.0
        %900 = vmatpush1.msra.mxu0 0.0
        %901 = vmatprep.subr.mxu0 0.0
        %902 = vmatpush1.msra.mxu0 0.0
        %903 = vmatprep.subr.mxu0 0.0
        %904 = vmatpush1.msra.mxu0 0.0
        %905 = vmatprep.subr.mxu0 0.0
        %906 = vmatpush1.msra.mxu0 0.0
        %907 = vmatprep.subr.mxu0 0.0
        %908 = vmatpush1.msra.mxu0 0.0
        %909 = vmatprep.subr.mxu0 0.0
        %910 = vmatpush1.msra.mxu0 0.0
        %911 = vmatprep.subr.mxu0 0.0
        %912 = vmatpush1.msra.mxu0 0.0
        %913 = vmatprep.subr.mxu0 0.0
        %914 = vmatpush1.msra.mxu0 0.0
        %915 = vmatprep.subr.mxu0 0.0
        %916 = vmatpush1.msra.mxu0 0.0
        %917 = vmatprep.mubr.f32.mxu0 0.0
        %918 = vmatmul.mubr.f32.gmra.mrb[0].mxu0 %v848
        %v919 = vpop.f32.mrb[0].mxu0
        %v920 = vadd.f32 %v839, %v919
        %v921 = vpop.f32.mrb[0].mxu0
        %922 = vmatprep.mubr.f32.mxu0 0.0
        %923 = vmatmul.mubr.f32.gmra.mrb[0].mxu0 %v851
        %v924 = vpop.f32.mrb[0].mxu0
        %v925 = vadd.f32 %v844, %v924
        %v926 = vpop.f32.mrb[0].mxu0
        %927 = vdwg.mxu0
        %s928 = scalar_lea.vmem %s259, 16 [#allocation2]
        %929 = vst.msk [vmem:[%s928] sm:$0xff] %vm352, %v920
        %930 = vst.msk [vmem:[%s928 + $0x8] sm:$0xff] %vm352, %v925
        %s931 = scalar_lea.vmem %s264, 16
        %v932 = vld [vmem:[%s931] sm:$0xff]
        %v933 = vld [vmem:[%s2] sm:$0xff]
        %v935 = vsel %vm272, %v932, 0
        %937 = vmatprep.subr.mxu0 0.0
        %938 = vmatpush1.msra.mxu0 %v933
        %939 = vmatprep.subr.mxu0 0.0
        %940 = vmatpush1.msra.mxu0 0.0
        %941 = vmatprep.subr.mxu0 0.0
        %942 = vmatpush1.msra.mxu0 0.0
        %943 = vmatprep.subr.mxu0 0.0
        %944 = vmatpush1.msra.mxu0 0.0
        %945 = vmatprep.subr.mxu0 0.0
        %946 = vmatpush1.msra.mxu0 0.0
        %947 = vmatprep.subr.mxu0 0.0
        %948 = vmatpush1.msra.mxu0 0.0
        %949 = vmatprep.subr.mxu0 0.0
        %950 = vmatpush1.msra.mxu0 0.0
        %951 = vmatprep.subr.mxu0 0.0
        %952 = vmatpush1.msra.mxu0 0.0
        %953 = vmatprep.subr.mxu0 0.0
        %954 = vmatpush1.msra.mxu0 0.0
        %955 = vmatprep.subr.mxu0 0.0
        %956 = vmatpush1.msra.mxu0 0.0
        %957 = vmatprep.subr.mxu0 0.0
        %958 = vmatpush1.msra.mxu0 0.0
        %959 = vmatprep.subr.mxu0 0.0
        %960 = vmatpush1.msra.mxu0 0.0
        %961 = vmatprep.subr.mxu0 0.0
        %962 = vmatpush1.msra.mxu0 0.0
        %963 = vmatprep.subr.mxu0 0.0
        %964 = vmatpush1.msra.mxu0 0.0
        %965 = vmatprep.subr.mxu0 0.0
        %966 = vmatpush1.msra.mxu0 0.0
        %967 = vmatprep.subr.mxu0 0.0
        %968 = vmatpush1.msra.mxu0 0.0
        %969 = vmatprep.subr.mxu0 0.0
        %970 = vmatpush1.msra.mxu0 0.0
        %971 = vmatprep.subr.mxu0 0.0
        %972 = vmatpush1.msra.mxu0 0.0
        %973 = vmatprep.subr.mxu0 0.0
        %974 = vmatpush1.msra.mxu0 0.0
        %975 = vmatprep.subr.mxu0 0.0
        %976 = vmatpush1.msra.mxu0 0.0
        %977 = vmatprep.subr.mxu0 0.0
        %978 = vmatpush1.msra.mxu0 0.0
        %979 = vmatprep.subr.mxu0 0.0
        %980 = vmatpush1.msra.mxu0 0.0
        %981 = vmatprep.subr.mxu0 0.0
        %982 = vmatpush1.msra.mxu0 0.0
        %983 = vmatprep.subr.mxu0 0.0
        %984 = vmatpush1.msra.mxu0 0.0
        %985 = vmatprep.subr.mxu0 0.0
        %986 = vmatpush1.msra.mxu0 0.0
        %987 = vmatprep.subr.mxu0 0.0
        %988 = vmatpush1.msra.mxu0 0.0
        %989 = vmatprep.subr.mxu0 0.0
        %990 = vmatpush1.msra.mxu0 0.0
        %991 = vmatprep.subr.mxu0 0.0
        %992 = vmatpush1.msra.mxu0 0.0
        %993 = vmatprep.subr.mxu0 0.0
        %994 = vmatpush1.msra.mxu0 0.0
        %995 = vmatprep.subr.mxu0 0.0
        %996 = vmatpush1.msra.mxu0 0.0
        %997 = vmatprep.subr.mxu0 0.0
        %998 = vmatpush1.msra.mxu0 0.0
        %999 = vmatprep.subr.mxu0 0.0
        %1000 = vmatpush1.msra.mxu0 0.0
        %1001 = vmatprep.mubr.f32.mxu0 0.0
        %1002 = vmatmul.mubr.f32.gmra.mrb[0].mxu0 %v935
        %v1003 = vpop.f32.mrb[0].mxu0
        %v1004 = vadd.f32 0.0, %v1003
        %v1005 = vpop.f32.mrb[0].mxu0
        %1006 = vdwg.mxu0
        %v1007 = vld [vmem:[%s1] sm:$0xff]
        %v1008 = vld [vmem:[%s1 + $0x8] sm:$0xff]
        %s1009 = scalar_lea.vmem %s269, 32
        %v1010 = vld [vmem:[%s1009] sm:$0xff]
        %v1011 = vld [vmem:[%s1009 + $0x8] sm:$0xff]
        %v1012 = vld [vmem:[%s5] sm:$0xff]
        %v1013 = vld [vmem:[%s5 + $0x8] sm:$0xff]
        %v1015 = vsel %vm352, %v1010, 0
        %v1018 = vsel %vm352, %v1011, 0
        %1020 = vmatprep.subr.mxu0 0.0
        %1021 = vmatpush1.msra.mxu0 %v1012
        %1022 = vmatprep.subr.mxu0 0.0
        %1023 = vmatpush1.msra.mxu0 %v1013
        %1024 = vmatprep.subr.mxu0 0.0
        %1025 = vmatpush1.msra.mxu0 0.0
        %1026 = vmatprep.subr.mxu0 0.0
        %1027 = vmatpush1.msra.mxu0 0.0
        %1028 = vmatprep.subr.mxu0 0.0
        %1029 = vmatpush1.msra.mxu0 0.0
        %1030 = vmatprep.subr.mxu0 0.0
        %1031 = vmatpush1.msra.mxu0 0.0
        %1032 = vmatprep.subr.mxu0 0.0
        %1033 = vmatpush1.msra.mxu0 0.0
        %1034 = vmatprep.subr.mxu0 0.0
        %1035 = vmatpush1.msra.mxu0 0.0
        %1036 = vmatprep.subr.mxu0 0.0
        %1037 = vmatpush1.msra.mxu0 0.0
        %1038 = vmatprep.subr.mxu0 0.0
        %1039 = vmatpush1.msra.mxu0 0.0
        %1040 = vmatprep.subr.mxu0 0.0
        %1041 = vmatpush1.msra.mxu0 0.0
        %1042 = vmatprep.subr.mxu0 0.0
        %1043 = vmatpush1.msra.mxu0 0.0
        %1044 = vmatprep.subr.mxu0 0.0
        %1045 = vmatpush1.msra.mxu0 0.0
        %1046 = vmatprep.subr.mxu0 0.0
        %1047 = vmatpush1.msra.mxu0 0.0
        %1048 = vmatprep.subr.mxu0 0.0
        %1049 = vmatpush1.msra.mxu0 0.0
        %1050 = vmatprep.subr.mxu0 0.0
        %1051 = vmatpush1.msra.mxu0 0.0
        %1052 = vmatprep.subr.mxu0 0.0
        %1053 = vmatpush1.msra.mxu0 0.0
        %1054 = vmatprep.subr.mxu0 0.0
        %1055 = vmatpush1.msra.mxu0 0.0
        %1056 = vmatprep.subr.mxu0 0.0
        %1057 = vmatpush1.msra.mxu0 0.0
        %1058 = vmatprep.subr.mxu0 0.0
        %1059 = vmatpush1.msra.mxu0 0.0
        %1060 = vmatprep.subr.mxu0 0.0
        %1061 = vmatpush1.msra.mxu0 0.0
        %1062 = vmatprep.subr.mxu0 0.0
        %1063 = vmatpush1.msra.mxu0 0.0
        %1064 = vmatprep.subr.mxu0 0.0
        %1065 = vmatpush1.msra.mxu0 0.0
        %1066 = vmatprep.subr.mxu0 0.0
        %1067 = vmatpush1.msra.mxu0 0.0
        %1068 = vmatprep.subr.mxu0 0.0
        %1069 = vmatpush1.msra.mxu0 0.0
        %1070 = vmatprep.subr.mxu0 0.0
        %1071 = vmatpush1.msra.mxu0 0.0
        %1072 = vmatprep.subr.mxu0 0.0
        %1073 = vmatpush1.msra.mxu0 0.0
        %1074 = vmatprep.subr.mxu0 0.0
        %1075 = vmatpush1.msra.mxu0 0.0
        %1076 = vmatprep.subr.mxu0 0.0
        %1077 = vmatpush1.msra.mxu0 0.0
        %1078 = vmatprep.subr.mxu0 0.0
        %1079 = vmatpush1.msra.mxu0 0.0
        %1080 = vmatprep.subr.mxu0 0.0
        %1081 = vmatpush1.msra.mxu0 0.0
        %1082 = vmatprep.subr.mxu0 0.0
        %1083 = vmatpush1.msra.mxu0 0.0
        %1084 = vmatprep.mubr.f32.mxu0 0.0
        %1085 = vmatmul.mubr.f32.gmra.mrb[0].mxu0 %v1015
        %v1086 = vpop.f32.mrb[0].mxu0
        %v1087 = vadd.f32 0.0, %v1086
        %v1088 = vpop.f32.mrb[0].mxu0
        %1089 = vmatprep.mubr.f32.mxu0 0.0
        %1090 = vmatmul.mubr.f32.gmra.mrb[0].mxu0 %v1018
        %v1091 = vpop.f32.mrb[0].mxu0
        %v1092 = vadd.f32 0.0, %v1091
        %v1093 = vpop.f32.mrb[0].mxu0
        %1094 = vdwg.mxu0
        %v1095 = vld [vmem:[%s4] sm:$0xff]
        %v1096 = vld [vmem:[%s4 + $0x8] sm:$0xff]
        %v1098 = vsel %vm352, %v1095, 0
        %v1101 = vsel %vm352, %v1096, 0
        %1103 = vmatprep.subr.mxu0 0.0
        %1104 = vmatpush1.msra.mxu0 %v1087
        %1105 = vmatprep.subr.mxu0 0.0
        %1106 = vmatpush1.msra.mxu0 %v1092
        %1107 = vmatprep.subr.mxu0 0.0
        %1108 = vmatpush1.msra.mxu0 0.0
        %1109 = vmatprep.subr.mxu0 0.0
        %1110 = vmatpush1.msra.mxu0 0.0
        %1111 = vmatprep.subr.mxu0 0.0
        %1112 = vmatpush1.msra.mxu0 0.0
        %1113 = vmatprep.subr.mxu0 0.0
        %1114 = vmatpush1.msra.mxu0 0.0
        %1115 = vmatprep.subr.mxu0 0.0
        %1116 = vmatpush1.msra.mxu0 0.0
        %1117 = vmatprep.subr.mxu0 0.0
        %1118 = vmatpush1.msra.mxu0 0.0
        %1119 = vmatprep.subr.mxu0 0.0
        %1120 = vmatpush1.msra.mxu0 0.0
        %1121 = vmatprep.subr.mxu0 0.0
        %1122 = vmatpush1.msra.mxu0 0.0
        %1123 = vmatprep.subr.mxu0 0.0
        %1124 = vmatpush1.msra.mxu0 0.0
        %1125 = vmatprep.subr.mxu0 0.0
        %1126 = vmatpush1.msra.mxu0 0.0
        %1127 = vmatprep.subr.mxu0 0.0
        %1128 = vmatpush1.msra.mxu0 0.0
        %1129 = vmatprep.subr.mxu0 0.0
        %1130 = vmatpush1.msra.mxu0 0.0
        %1131 = vmatprep.subr.mxu0 0.0
        %1132 = vmatpush1.msra.mxu0 0.0
        %1133 = vmatprep.subr.mxu0 0.0
        %1134 = vmatpush1.msra.mxu0 0.0
        %1135 = vmatprep.subr.mxu0 0.0
        %1136 = vmatpush1.msra.mxu0 0.0
        %1137 = vmatprep.subr.mxu0 0.0
        %1138 = vmatpush1.msra.mxu0 0.0
        %1139 = vmatprep.subr.mxu0 0.0
        %1140 = vmatpush1.msra.mxu0 0.0
        %1141 = vmatprep.subr.mxu0 0.0
        %1142 = vmatpush1.msra.mxu0 0.0
        %1143 = vmatprep.subr.mxu0 0.0
        %1144 = vmatpush1.msra.mxu0 0.0
        %1145 = vmatprep.subr.mxu0 0.0
        %1146 = vmatpush1.msra.mxu0 0.0
        %1147 = vmatprep.subr.mxu0 0.0
        %1148 = vmatpush1.msra.mxu0 0.0
        %1149 = vmatprep.subr.mxu0 0.0
        %1150 = vmatpush1.msra.mxu0 0.0
        %1151 = vmatprep.subr.mxu0 0.0
        %1152 = vmatpush1.msra.mxu0 0.0
        %1153 = vmatprep.subr.mxu0 0.0
        %1154 = vmatpush1.msra.mxu0 0.0
        %1155 = vmatprep.subr.mxu0 0.0
        %1156 = vmatpush1.msra.mxu0 0.0
        %1157 = vmatprep.subr.mxu0 0.0
        %1158 = vmatpush1.msra.mxu0 0.0
        %1159 = vmatprep.subr.mxu0 0.0
        %1160 = vmatpush1.msra.mxu0 0.0
        %1161 = vmatprep.subr.mxu0 0.0
        %1162 = vmatpush1.msra.mxu0 0.0
        %1163 = vmatprep.subr.mxu0 0.0
        %1164 = vmatpush1.msra.mxu0 0.0
        %1165 = vmatprep.subr.mxu0 0.0
        %1166 = vmatpush1.msra.mxu0 0.0
        %1167 = vmatprep.mubr.f32.mxu0 0.0
        %1168 = vmatmul.mubr.f32.gmra.mrb[0].mxu0 %v1098
        %v1169 = vpop.f32.mrb[0].mxu0
        %v1170 = vadd.f32 0.0, %v1169
        %v1171 = vpop.f32.mrb[0].mxu0
        %1172 = vmatprep.mubr.f32.mxu0 0.0
        %1173 = vmatmul.mubr.f32.gmra.mrb[0].mxu0 %v1101
        %v1174 = vpop.f32.mrb[0].mxu0
        %v1175 = vadd.f32 0.0, %v1174
        %v1176 = vpop.f32.mrb[0].mxu0
        %1177 = vdwg.mxu0
        %v1179 = vsel %vm272, %v1007, 0
        %v1182 = vsel %vm272, %v1008, 0
        %1184 = vmatprep.subr.mxu0 0.0
        %1185 = vmatpush1.msra.mxu0 %v1004
        %1186 = vmatprep.subr.mxu0 0.0
        %1187 = vmatpush1.msra.mxu0 0.0
        %1188 = vmatprep.subr.mxu0 0.0
        %1189 = vmatpush1.msra.mxu0 0.0
        %1190 = vmatprep.subr.mxu0 0.0
        %1191 = vmatpush1.msra.mxu0 0.0
        %1192 = vmatprep.subr.mxu0 0.0
        %1193 = vmatpush1.msra.mxu0 0.0
        %1194 = vmatprep.subr.mxu0 0.0
        %1195 = vmatpush1.msra.mxu0 0.0
        %1196 = vmatprep.subr.mxu0 0.0
        %1197 = vmatpush1.msra.mxu0 0.0
        %1198 = vmatprep.subr.mxu0 0.0
        %1199 = vmatpush1.msra.mxu0 0.0
        %1200 = vmatprep.subr.mxu0 0.0
        %1201 = vmatpush1.msra.mxu0 0.0
        %1202 = vmatprep.subr.mxu0 0.0
        %1203 = vmatpush1.msra.mxu0 0.0
        %1204 = vmatprep.subr.mxu0 0.0
        %1205 = vmatpush1.msra.mxu0 0.0
        %1206 = vmatprep.subr.mxu0 0.0
        %1207 = vmatpush1.msra.mxu0 0.0
        %1208 = vmatprep.subr.mxu0 0.0
        %1209 = vmatpush1.msra.mxu0 0.0
        %1210 = vmatprep.subr.mxu0 0.0
        %1211 = vmatpush1.msra.mxu0 0.0
        %1212 = vmatprep.subr.mxu0 0.0
        %1213 = vmatpush1.msra.mxu0 0.0
        %1214 = vmatprep.subr.mxu0 0.0
        %1215 = vmatpush1.msra.mxu0 0.0
        %1216 = vmatprep.subr.mxu0 0.0
        %1217 = vmatpush1.msra.mxu0 0.0
        %1218 = vmatprep.subr.mxu0 0.0
        %1219 = vmatpush1.msra.mxu0 0.0
        %1220 = vmatprep.subr.mxu0 0.0
        %1221 = vmatpush1.msra.mxu0 0.0
        %1222 = vmatprep.subr.mxu0 0.0
        %1223 = vmatpush1.msra.mxu0 0.0
        %1224 = vmatprep.subr.mxu0 0.0
        %1225 = vmatpush1.msra.mxu0 0.0
        %1226 = vmatprep.subr.mxu0 0.0
        %1227 = vmatpush1.msra.mxu0 0.0
        %1228 = vmatprep.subr.mxu0 0.0
        %1229 = vmatpush1.msra.mxu0 0.0
        %1230 = vmatprep.subr.mxu0 0.0
        %1231 = vmatpush1.msra.mxu0 0.0
        %1232 = vmatprep.subr.mxu0 0.0
        %1233 = vmatpush1.msra.mxu0 0.0
        %1234 = vmatprep.subr.mxu0 0.0
        %1235 = vmatpush1.msra.mxu0 0.0
        %1236 = vmatprep.subr.mxu0 0.0
        %1237 = vmatpush1.msra.mxu0 0.0
        %1238 = vmatprep.subr.mxu0 0.0
        %1239 = vmatpush1.msra.mxu0 0.0
        %1240 = vmatprep.subr.mxu0 0.0
        %1241 = vmatpush1.msra.mxu0 0.0
        %1242 = vmatprep.subr.mxu0 0.0
        %1243 = vmatpush1.msra.mxu0 0.0
        %1244 = vmatprep.subr.mxu0 0.0
        %1245 = vmatpush1.msra.mxu0 0.0
        %1246 = vmatprep.subr.mxu0 0.0
        %1247 = vmatpush1.msra.mxu0 0.0
        %1248 = vmatprep.mubr.f32.mxu0 0.0
        %1249 = vmatmul.mubr.f32.gmra.mrb[0].mxu0 %v1179
        %v1250 = vpop.f32.mrb[0].mxu0
        %v1251 = vadd.f32 %v1170, %v1250
        %v1252 = vpop.f32.mrb[0].mxu0
        %1253 = vmatprep.mubr.f32.mxu0 0.0
        %1254 = vmatmul.mubr.f32.gmra.mrb[0].mxu0 %v1182
        %v1255 = vpop.f32.mrb[0].mxu0
        %v1256 = vadd.f32 %v1175, %v1255
        %v1257 = vpop.f32.mrb[0].mxu0
        %1258 = vdwg.mxu0
        %s1259 = scalar_lea.vmem %s259, 32 [#allocation2]
        %1260 = vst.msk [vmem:[%s1259] sm:$0xff] %vm352, %v1251
        %1261 = vst.msk [vmem:[%s1259 + $0x8] sm:$0xff] %vm352, %v1256
        %s1262 = scalar_lea.vmem %s264, 24
        %v1263 = vld [vmem:[%s1262] sm:$0xff]
        %v1264 = vld [vmem:[%s2] sm:$0xff]
        %v1266 = vsel %vm272, %v1263, 0
        %1268 = vmatprep.subr.mxu0 0.0
        %1269 = vmatpush1.msra.mxu0 %v1264
        %1270 = vmatprep.subr.mxu0 0.0
        %1271 = vmatpush1.msra.mxu0 0.0
        %1272 = vmatprep.subr.mxu0 0.0
        %1273 = vmatpush1.msra.mxu0 0.0
        %1274 = vmatprep.subr.mxu0 0.0
        %1275 = vmatpush1.msra.mxu0 0.0
        %1276 = vmatprep.subr.mxu0 0.0
        %1277 = vmatpush1.msra.mxu0 0.0
        %1278 = vmatprep.subr.mxu0 0.0
        %1279 = vmatpush1.msra.mxu0 0.0
        %1280 = vmatprep.subr.mxu0 0.0
        %1281 = vmatpush1.msra.mxu0 0.0
        %1282 = vmatprep.subr.mxu0 0.0
        %1283 = vmatpush1.msra.mxu0 0.0
        %1284 = vmatprep.subr.mxu0 0.0
        %1285 = vmatpush1.msra.mxu0 0.0
        %1286 = vmatprep.subr.mxu0 0.0
        %1287 = vmatpush1.msra.mxu0 0.0
        %1288 = vmatprep.subr.mxu0 0.0
        %1289 = vmatpush1.msra.mxu0 0.0
        %1290 = vmatprep.subr.mxu0 0.0
        %1291 = vmatpush1.msra.mxu0 0.0
        %1292 = vmatprep.subr.mxu0 0.0
        %1293 = vmatpush1.msra.mxu0 0.0
        %1294 = vmatprep.subr.mxu0 0.0
        %1295 = vmatpush1.msra.mxu0 0.0
        %1296 = vmatprep.subr.mxu0 0.0
        %1297 = vmatpush1.msra.mxu0 0.0
        %1298 = vmatprep.subr.mxu0 0.0
        %1299 = vmatpush1.msra.mxu0 0.0
        %1300 = vmatprep.subr.mxu0 0.0
        %1301 = vmatpush1.msra.mxu0 0.0
        %1302 = vmatprep.subr.mxu0 0.0
        %1303 = vmatpush1.msra.mxu0 0.0
        %1304 = vmatprep.subr.mxu0 0.0
        %1305 = vmatpush1.msra.mxu0 0.0
        %1306 = vmatprep.subr.mxu0 0.0
        %1307 = vmatpush1.msra.mxu0 0.0
        %1308 = vmatprep.subr.mxu0 0.0
        %1309 = vmatpush1.msra.mxu0 0.0
        %1310 = vmatprep.subr.mxu0 0.0
        %1311 = vmatpush1.msra.mxu0 0.0
        %1312 = vmatprep.subr.mxu0 0.0
        %1313 = vmatpush1.msra.mxu0 0.0
        %1314 = vmatprep.subr.mxu0 0.0
        %1315 = vmatpush1.msra.mxu0 0.0
        %1316 = vmatprep.subr.mxu0 0.0
        %1317 = vmatpush1.msra.mxu0 0.0
        %1318 = vmatprep.subr.mxu0 0.0
        %1319 = vmatpush1.msra.mxu0 0.0
        %1320 = vmatprep.subr.mxu0 0.0
        %1321 = vmatpush1.msra.mxu0 0.0
        %1322 = vmatprep.subr.mxu0 0.0
        %1323 = vmatpush1.msra.mxu0 0.0
        %1324 = vmatprep.subr.mxu0 0.0
        %1325 = vmatpush1.msra.mxu0 0.0
        %1326 = vmatprep.subr.mxu0 0.0
        %1327 = vmatpush1.msra.mxu0 0.0
        %1328 = vmatprep.subr.mxu0 0.0
        %1329 = vmatpush1.msra.mxu0 0.0
        %1330 = vmatprep.subr.mxu0 0.0
        %1331 = vmatpush1.msra.mxu0 0.0
        %1332 = vmatprep.mubr.f32.mxu0 0.0
        %1333 = vmatmul.mubr.f32.gmra.mrb[0].mxu0 %v1266
        %v1334 = vpop.f32.mrb[0].mxu0
        %v1335 = vadd.f32 0.0, %v1334
        %v1336 = vpop.f32.mrb[0].mxu0
        %1337 = vdwg.mxu0
        %v1338 = vld [vmem:[%s1] sm:$0xff]
        %v1339 = vld [vmem:[%s1 + $0x8] sm:$0xff]
        %s1340 = scalar_lea.vmem %s269, 48
        %v1341 = vld [vmem:[%s1340] sm:$0xff]
        %v1342 = vld [vmem:[%s1340 + $0x8] sm:$0xff]
        %v1343 = vld [vmem:[%s5] sm:$0xff]
        %v1344 = vld [vmem:[%s5 + $0x8] sm:$0xff]
        %v1346 = vsel %vm352, %v1341, 0
        %v1349 = vsel %vm352, %v1342, 0
        %1351 = vmatprep.subr.mxu0 0.0
        %1352 = vmatpush1.msra.mxu0 %v1343
        %1353 = vmatprep.subr.mxu0 0.0
        %1354 = vmatpush1.msra.mxu0 %v1344
        %1355 = vmatprep.subr.mxu0 0.0
        %1356 = vmatpush1.msra.mxu0 0.0
        %1357 = vmatprep.subr.mxu0 0.0
        %1358 = vmatpush1.msra.mxu0 0.0
        %1359 = vmatprep.subr.mxu0 0.0
        %1360 = vmatpush1.msra.mxu0 0.0
        %1361 = vmatprep.subr.mxu0 0.0
        %1362 = vmatpush1.msra.mxu0 0.0
        %1363 = vmatprep.subr.mxu0 0.0
        %1364 = vmatpush1.msra.mxu0 0.0
        %1365 = vmatprep.subr.mxu0 0.0
        %1366 = vmatpush1.msra.mxu0 0.0
        %1367 = vmatprep.subr.mxu0 0.0
        %1368 = vmatpush1.msra.mxu0 0.0
        %1369 = vmatprep.subr.mxu0 0.0
        %1370 = vmatpush1.msra.mxu0 0.0
        %1371 = vmatprep.subr.mxu0 0.0
        %1372 = vmatpush1.msra.mxu0 0.0
        %1373 = vmatprep.subr.mxu0 0.0
        %1374 = vmatpush1.msra.mxu0 0.0
        %1375 = vmatprep.subr.mxu0 0.0
        %1376 = vmatpush1.msra.mxu0 0.0
        %1377 = vmatprep.subr.mxu0 0.0
        %1378 = vmatpush1.msra.mxu0 0.0
        %1379 = vmatprep.subr.mxu0 0.0
        %1380 = vmatpush1.msra.mxu0 0.0
        %1381 = vmatprep.subr.mxu0 0.0
        %1382 = vmatpush1.msra.mxu0 0.0
        %1383 = vmatprep.subr.mxu0 0.0
        %1384 = vmatpush1.msra.mxu0 0.0
        %1385 = vmatprep.subr.mxu0 0.0
        %1386 = vmatpush1.msra.mxu0 0.0
        %1387 = vmatprep.subr.mxu0 0.0
        %1388 = vmatpush1.msra.mxu0 0.0
        %1389 = vmatprep.subr.mxu0 0.0
        %1390 = vmatpush1.msra.mxu0 0.0
        %1391 = vmatprep.subr.mxu0 0.0
        %1392 = vmatpush1.msra.mxu0 0.0
        %1393 = vmatprep.subr.mxu0 0.0
        %1394 = vmatpush1.msra.mxu0 0.0
        %1395 = vmatprep.subr.mxu0 0.0
        %1396 = vmatpush1.msra.mxu0 0.0
        %1397 = vmatprep.subr.mxu0 0.0
        %1398 = vmatpush1.msra.mxu0 0.0
        %1399 = vmatprep.subr.mxu0 0.0
        %1400 = vmatpush1.msra.mxu0 0.0
        %1401 = vmatprep.subr.mxu0 0.0
        %1402 = vmatpush1.msra.mxu0 0.0
        %1403 = vmatprep.subr.mxu0 0.0
        %1404 = vmatpush1.msra.mxu0 0.0
        %1405 = vmatprep.subr.mxu0 0.0
        %1406 = vmatpush1.msra.mxu0 0.0
        %1407 = vmatprep.subr.mxu0 0.0
        %1408 = vmatpush1.msra.mxu0 0.0
        %1409 = vmatprep.subr.mxu0 0.0
        %1410 = vmatpush1.msra.mxu0 0.0
        %1411 = vmatprep.subr.mxu0 0.0
        %1412 = vmatpush1.msra.mxu0 0.0
        %1413 = vmatprep.subr.mxu0 0.0
        %1414 = vmatpush1.msra.mxu0 0.0
        %1415 = vmatprep.mubr.f32.mxu0 0.0
        %1416 = vmatmul.mubr.f32.gmra.mrb[0].mxu0 %v1346
        %v1417 = vpop.f32.mrb[0].mxu0
        %v1418 = vadd.f32 0.0, %v1417
        %v1419 = vpop.f32.mrb[0].mxu0
        %1420 = vmatprep.mubr.f32.mxu0 0.0
        %1421 = vmatmul.mubr.f32.gmra.mrb[0].mxu0 %v1349
        %v1422 = vpop.f32.mrb[0].mxu0
        %v1423 = vadd.f32 0.0, %v1422
        %v1424 = vpop.f32.mrb[0].mxu0
        %1425 = vdwg.mxu0
        %v1426 = vld [vmem:[%s4] sm:$0xff]
        %v1427 = vld [vmem:[%s4 + $0x8] sm:$0xff]
        %v1429 = vsel %vm352, %v1426, 0
        %v1432 = vsel %vm352, %v1427, 0
        %1434 = vmatprep.subr.mxu0 0.0
        %1435 = vmatpush1.msra.mxu0 %v1418
        %1436 = vmatprep.subr.mxu0 0.0
        %1437 = vmatpush1.msra.mxu0 %v1423
        %1438 = vmatprep.subr.mxu0 0.0
        %1439 = vmatpush1.msra.mxu0 0.0
        %1440 = vmatprep.subr.mxu0 0.0
        %1441 = vmatpush1.msra.mxu0 0.0
        %1442 = vmatprep.subr.mxu0 0.0
        %1443 = vmatpush1.msra.mxu0 0.0
        %1444 = vmatprep.subr.mxu0 0.0
        %1445 = vmatpush1.msra.mxu0 0.0
        %1446 = vmatprep.subr.mxu0 0.0
        %1447 = vmatpush1.msra.mxu0 0.0
        %1448 = vmatprep.subr.mxu0 0.0
        %1449 = vmatpush1.msra.mxu0 0.0
        %1450 = vmatprep.subr.mxu0 0.0
        %1451 = vmatpush1.msra.mxu0 0.0
        %1452 = vmatprep.subr.mxu0 0.0
        %1453 = vmatpush1.msra.mxu0 0.0
        %1454 = vmatprep.subr.mxu0 0.0
        %1455 = vmatpush1.msra.mxu0 0.0
        %1456 = vmatprep.subr.mxu0 0.0
        %1457 = vmatpush1.msra.mxu0 0.0
        %1458 = vmatprep.subr.mxu0 0.0
        %1459 = vmatpush1.msra.mxu0 0.0
        %1460 = vmatprep.subr.mxu0 0.0
        %1461 = vmatpush1.msra.mxu0 0.0
        %1462 = vmatprep.subr.mxu0 0.0
        %1463 = vmatpush1.msra.mxu0 0.0
        %1464 = vmatprep.subr.mxu0 0.0
        %1465 = vmatpush1.msra.mxu0 0.0
        %1466 = vmatprep.subr.mxu0 0.0
        %1467 = vmatpush1.msra.mxu0 0.0
        %1468 = vmatprep.subr.mxu0 0.0
        %1469 = vmatpush1.msra.mxu0 0.0
        %1470 = vmatprep.subr.mxu0 0.0
        %1471 = vmatpush1.msra.mxu0 0.0
        %1472 = vmatprep.subr.mxu0 0.0
        %1473 = vmatpush1.msra.mxu0 0.0
        %1474 = vmatprep.subr.mxu0 0.0
        %1475 = vmatpush1.msra.mxu0 0.0
        %1476 = vmatprep.subr.mxu0 0.0
        %1477 = vmatpush1.msra.mxu0 0.0
        %1478 = vmatprep.subr.mxu0 0.0
        %1479 = vmatpush1.msra.mxu0 0.0
        %1480 = vmatprep.subr.mxu0 0.0
        %1481 = vmatpush1.msra.mxu0 0.0
        %1482 = vmatprep.subr.mxu0 0.0
        %1483 = vmatpush1.msra.mxu0 0.0
        %1484 = vmatprep.subr.mxu0 0.0
        %1485 = vmatpush1.msra.mxu0 0.0
        %1486 = vmatprep.subr.mxu0 0.0
        %1487 = vmatpush1.msra.mxu0 0.0
        %1488 = vmatprep.subr.mxu0 0.0
        %1489 = vmatpush1.msra.mxu0 0.0
        %1490 = vmatprep.subr.mxu0 0.0
        %1491 = vmatpush1.msra.mxu0 0.0
        %1492 = vmatprep.subr.mxu0 0.0
        %1493 = vmatpush1.msra.mxu0 0.0
        %1494 = vmatprep.subr.mxu0 0.0
        %1495 = vmatpush1.msra.mxu0 0.0
        %1496 = vmatprep.subr.mxu0 0.0
        %1497 = vmatpush1.msra.mxu0 0.0
        %1498 = vmatprep.mubr.f32.mxu0 0.0
        %1499 = vmatmul.mubr.f32.gmra.mrb[0].mxu0 %v1429
        %v1500 = vpop.f32.mrb[0].mxu0
        %v1501 = vadd.f32 0.0, %v1500
        %v1502 = vpop.f32.mrb[0].mxu0
        %1503 = vmatprep.mubr.f32.mxu0 0.0
        %1504 = vmatmul.mubr.f32.gmra.mrb[0].mxu0 %v1432
        %v1505 = vpop.f32.mrb[0].mxu0
        %v1506 = vadd.f32 0.0, %v1505
        %v1507 = vpop.f32.mrb[0].mxu0
        %1508 = vdwg.mxu0
        %v1510 = vsel %vm272, %v1338, 0
        %v1513 = vsel %vm272, %v1339, 0
        %1515 = vmatprep.subr.mxu0 0.0
        %1516 = vmatpush1.msra.mxu0 %v1335
        %1517 = vmatprep.subr.mxu0 0.0
        %1518 = vmatpush1.msra.mxu0 0.0
        %1519 = vmatprep.subr.mxu0 0.0
        %1520 = vmatpush1.msra.mxu0 0.0
        %1521 = vmatprep.subr.mxu0 0.0
        %1522 = vmatpush1.msra.mxu0 0.0
        %1523 = vmatprep.subr.mxu0 0.0
        %1524 = vmatpush1.msra.mxu0 0.0
        %1525 = vmatprep.subr.mxu0 0.0
        %1526 = vmatpush1.msra.mxu0 0.0
        %1527 = vmatprep.subr.mxu0 0.0
        %1528 = vmatpush1.msra.mxu0 0.0
        %1529 = vmatprep.subr.mxu0 0.0
        %1530 = vmatpush1.msra.mxu0 0.0
        %1531 = vmatprep.subr.mxu0 0.0
        %1532 = vmatpush1.msra.mxu0 0.0
        %1533 = vmatprep.subr.mxu0 0.0
        %1534 = vmatpush1.msra.mxu0 0.0
        %1535 = vmatprep.subr.mxu0 0.0
        %1536 = vmatpush1.msra.mxu0 0.0
        %1537 = vmatprep.subr.mxu0 0.0
        %1538 = vmatpush1.msra.mxu0 0.0
        %1539 = vmatprep.subr.mxu0 0.0
        %1540 = vmatpush1.msra.mxu0 0.0
        %1541 = vmatprep.subr.mxu0 0.0
        %1542 = vmatpush1.msra.mxu0 0.0
        %1543 = vmatprep.subr.mxu0 0.0
        %1544 = vmatpush1.msra.mxu0 0.0
        %1545 = vmatprep.subr.mxu0 0.0
        %1546 = vmatpush1.msra.mxu0 0.0
        %1547 = vmatprep.subr.mxu0 0.0
        %1548 = vmatpush1.msra.mxu0 0.0
        %1549 = vmatprep.subr.mxu0 0.0
        %1550 = vmatpush1.msra.mxu0 0.0
        %1551 = vmatprep.subr.mxu0 0.0
        %1552 = vmatpush1.msra.mxu0 0.0
        %1553 = vmatprep.subr.mxu0 0.0
        %1554 = vmatpush1.msra.mxu0 0.0
        %1555 = vmatprep.subr.mxu0 0.0
        %1556 = vmatpush1.msra.mxu0 0.0
        %1557 = vmatprep.subr.mxu0 0.0
        %1558 = vmatpush1.msra.mxu0 0.0
        %1559 = vmatprep.subr.mxu0 0.0
        %1560 = vmatpush1.msra.mxu0 0.0
        %1561 = vmatprep.subr.mxu0 0.0
        %1562 = vmatpush1.msra.mxu0 0.0
        %1563 = vmatprep.subr.mxu0 0.0
        %1564 = vmatpush1.msra.mxu0 0.0
        %1565 = vmatprep.subr.mxu0 0.0
        %1566 = vmatpush1.msra.mxu0 0.0
        %1567 = vmatprep.subr.mxu0 0.0
        %1568 = vmatpush1.msra.mxu0 0.0
        %1569 = vmatprep.subr.mxu0 0.0
        %1570 = vmatpush1.msra.mxu0 0.0
        %1571 = vmatprep.subr.mxu0 0.0
        %1572 = vmatpush1.msra.mxu0 0.0
        %1573 = vmatprep.subr.mxu0 0.0
        %1574 = vmatpush1.msra.mxu0 0.0
        %1575 = vmatprep.subr.mxu0 0.0
        %1576 = vmatpush1.msra.mxu0 0.0
        %1577 = vmatprep.subr.mxu0 0.0
        %1578 = vmatpush1.msra.mxu0 0.0
        %1579 = vmatprep.mubr.f32.mxu0 0.0
        %1580 = vmatmul.mubr.f32.gmra.mrb[0].mxu0 %v1510
        %v1581 = vpop.f32.mrb[0].mxu0
        %v1582 = vadd.f32 %v1501, %v1581
        %v1583 = vpop.f32.mrb[0].mxu0
        %1584 = vmatprep.mubr.f32.mxu0 0.0
        %1585 = vmatmul.mubr.f32.gmra.mrb[0].mxu0 %v1513
        %v1586 = vpop.f32.mrb[0].mxu0
        %v1587 = vadd.f32 %v1506, %v1586
        %v1588 = vpop.f32.mrb[0].mxu0
        %1589 = vdwg.mxu0
        %s1590 = scalar_lea.vmem %s259, 48 [#allocation2]
        %1591 = vst.msk [vmem:[%s1590] sm:$0xff] %vm352, %v1582
        %1592 = vst.msk [vmem:[%s1590 + $0x8] sm:$0xff] %vm352, %v1587
        %s1593 = sand.u32 %s164, 1
        %s1594 = scalar_lea.sflag [#allocation3], %s1593
        %s1595 = sand.u32 %s164, 1
        %s1596 = smul.addr %s1595, 64
        %s1597 = scalar_lea.vmem [#allocation2], %s1596
        // Predicated region
        $region45: #{nse1_forward.5} parent=43 // pred_check
          %p1598 = pneg %p174
        $region46: #{nse1_forward.5} parent=43 // pred_check_branch
          %1600 = sbr.rel (%p1598) target = $region48
        $region47: #{nse1_forward.5} parent=43 // pred_region
          %s1602 = ssub.s32 1024, 1024
          %1603 = vsyncadd %s1594, %s1602
          %s1604 = smul.addr %s20, 8
          %s1605 = smul.addr %s1604, 128
          %s1606 = scalar_lea.hbm %s6, %s1605
          %s1607 = sshll.u32 %s1597, 4
          %s1608 = int_to_ptr.vmem [resolvable:$true] %s1607
          %1613 = dma.vmem_to_hbm [thread:$0]  %s1608, 1024, %s1606, %s1594, 128, 128, 8
        $region48: #{nse1_forward.5} parent=43 // pred_fallthru
          _
      $region44: #{nse1_forward.5} parent=5 // pred_fallthru
        _
      %p1614 = scmp.le.s32.totalorder 2, %s15
      // Predicated region
      $region49: #{nse1_forward.5} parent=5 // pred_check
        %p1615 = pneg %p1614
      $region50: #{nse1_forward.5} parent=5 // pred_check_branch
        %1617 = sbr.rel (%p1615) target = $region52
      $region51: #{nse1_forward.5} parent=5 // pred_region
        %s1618 = ssub.s32 %s15, 2
        // Predicated region
        $region53: #{nse1_forward.5} parent=51 // pred_check
          %p1619 = pneg %p180
        $region54: #{nse1_forward.5} parent=51 // pred_check_branch
          %1621 = sbr.rel (%p1619) target = $region56
        $region55: #{nse1_forward.5} parent=51 // pred_region
          %s1622 = sand.u32 %s165, 1
          %s1623 = scalar_lea.sflag [#allocation3], %s1622
          %s1624 = sand.u32 %s165, 1
          %s1625 = smul.addr %s1624, 64
          %s1626 = scalar_lea.vmem [#allocation2], %s1625
          %1627 = dma.done %s1623, 1024
        $region56: #{nse1_forward.5} parent=51 // pred_fallthru
          _
      $region52: #{nse1_forward.5} parent=5 // pred_fallthru
        _
    $region6: #{nse1_forward.5} parent=1 // loop_footer
      %s19 = sadd.s32 1, %s15
    $region7: #{nse1_forward.5} parent=1 // loop_footer_branch
      %14 = sbr.rel target = $region3
    $region8: #{nse1_forward.5} parent=1 // loop_exit
      _
    %1628 = vsyncpa [#allocation3], 1
    %s1629 = scalar_lea.sflag [#allocation3], 1
    %1630 = vsyncpa %s1629, 1

</llo_original>
